<compile_context>
chip_gen: v7x
topology: tpu7x:2x2x1
jax: 0.10.0
libtpu: 0.0.40
codegen_flags: <defaults>
</compile_context>

<pallas_src>
import numpy as np
import jax
import jax.numpy as jnp
from jax.experimental import pallas as pl
from jax.experimental.pallas import tpu as pltpu


def _conv_out_hw(H, W, k, stride, pad):
    return (H + 2 * pad - k) // stride + 1, (W + 2 * pad - k) // stride + 1


# ---------------------------------------------------------------------------
# One-time packing (hoisted out of the jitted forward).
# ---------------------------------------------------------------------------
def _wcat(w_oihw):
    """(O, I, KH, KW) -> (I, KH*KW*O) bf16 wide channel-mix matrix.
    Column block k = ki*KW + kj holds that tap's (I, O) channel mix."""
    O, I, KH, KW = w_oihw.shape
    return jnp.transpose(w_oihw, (1, 2, 3, 0)).reshape(I, KH * KW * O).astype(jnp.bfloat16)


def pack_encoder(params, input_shape):
    """Repack PyTorch-layout params + shape-dependent masks into kernel-ready
    operands.  Runs once, outside the jitted forward."""
    N, _, H, W = input_shape
    f32 = jnp.float32
    H1, W1 = _conv_out_hw(H, W, 4, 2, 1)       # conv1 output map (8x8)
    H2, W2 = _conv_out_hw(H1, W1, 4, 2, 1)     # conv2 output map (4x4)
    R1, M2 = N * H1 * W1, N * H2 * W2

    # conv1 weight rows ordered (ki*4 + kj)*I + i to match the wrapper im2col.
    c1 = params["conv1_w"]
    w1 = jnp.transpose(c1, (2, 3, 1, 0)).reshape(-1, c1.shape[0]).astype(jnp.bfloat16)

    # conv2: per-tap boundary masks over the conv2-input row space (standard
    # (n,h,w) order) + a tiny 0/1 row-compaction matrix that also emits the
    # conv2 output rows directly in the final ow-major order.
    masks2 = np.zeros((R1, 16), np.float32)
    pcomp = np.zeros((M2, R1), np.float32)
    for n in range(N):
        for oh in range(H2):
            for ow in range(W2):
                p = n * H1 * W1 + (2 * oh) * W1 + 2 * ow
                m = ow * (N * H2) + n * H2 + oh            # final-order row
                pcomp[m, p] = 1.0
                for ki in range(4):
                    for kj in range(4):
                        if 0 <= 2 * oh + ki - 1 < H1 and 0 <= 2 * ow + kj - 1 < W1:
                            masks2[p, 4 * ki + kj] = 1.0

    # 3x3 / stride-1 boundary masks over the final-order row space
    # (shared by conv3 and every residual 3x3 conv).
    masks3 = np.zeros((M2, 9), np.float32)
    for m in range(M2):
        ow, rest = divmod(m, N * H2)
        n, oh = divmod(rest, H2)
        for ki in range(3):
            for kj in range(3):
                if 0 <= oh + ki - 1 < H2 and 0 <= ow + kj - 1 < W2:
                    masks3[m, 3 * ki + kj] = 1.0

    return {
        "w1": w1,
        "b1": params["conv1_b"].reshape(1, -1).astype(f32),
        "wcat2": _wcat(params["conv2_w"]),
        "b2": params["conv2_b"].reshape(1, -1).astype(f32),
        "masks2": jnp.asarray(masks2),
        "pcomp": jnp.asarray(pcomp),
        "wcat3": _wcat(params["conv3_w"]),
        "b3": params["conv3_b"].reshape(1, -1).astype(f32),
        "masks3": jnp.asarray(masks3),
        "res": [(_wcat(w3r),
                 jnp.transpose(w1r, (2, 3, 1, 0)).reshape(
                     w1r.shape[1], w1r.shape[0]).astype(jnp.bfloat16))
                for (w3r, w1r) in params["res"]],
    }


# ---------------------------------------------------------------------------
# JAX wrapper: tiny raw-input im2col + ONE pallas_call + NCHW layout undo.
# ---------------------------------------------------------------------------
def _im2col(x_nhwc, kh, kw, stride, pad):
    N, H, W, C = x_nhwc.shape
    xp = jnp.pad(x_nhwc, ((0, 0), (pad, pad), (pad, pad), (0, 0)))
    Ho = (H + 2 * pad - kh) // stride + 1
    Wo = (W + 2 * pad - kw) // stride + 1
    cols = []
    for i in range(kh):
        for j in range(kw):
            cols.append(xp[:, i:i + stride * (Ho - 1) + 1:stride,
                              j:j + stride * (Wo - 1) + 1:stride, :])
    cols = jnp.concatenate(cols, axis=-1)
    return cols.reshape(N * Ho * Wo, kh * kw * C)


@jax.jit
def encoder_forward(packed, x_nchw):
    N, _, H, W = x_nchw.shape
    H1, W1 = _conv_out_hw(H, W, 4, 2, 1)
    H2, W2 = _conv_out_hw(H1, W1, 4, 2, 1)
    R1, M2 = N * H1 * W1, N * H2 * W2
    C1 = packed["w1"].shape[1]
    C2 = packed["wcat3"].shape[0]
    n_res = len(packed["res"])
    nrow, lane = N * H2, W2 * C2                       # (8, 128) output slab

    # Per-tap row offsets (static Python ints) in the two row spaces.
    d2 = tuple(W1 * (ki - 1) + (kj - 1) for ki in range(4) for kj in range(4))
    d3 = tuple((ki - 1) + (N * H2) * (kj - 1) for ki in range(3) for kj in range(3))
    pad_top = ((max(0, -min(d2 + d3)) + 7) // 8) * 8
    scr_rows = ((pad_top + R1 + max(0, max(d2 + d3)) + 7) // 8) * 8
    scr_cols = len(d2) * C2                            # widest per-tap result (conv2)

    x_nhwc = jnp.transpose(x_nchw, (0, 2, 3, 1))              # NCHW -> NHWC
    cols1 = _im2col(x_nhwc, 4, 4, 2, 1).astype(jnp.bfloat16)  # (R1, 16), raw input only

    def mxu(a, b):
        # bf16 MXU operands, f32 accumulation.
        return jnp.dot(a.astype(jnp.bfloat16), b.astype(jnp.bfloat16),
                       preferred_element_type=jnp.float32)

    def kernel(*refs):
        (cols1_ref, w1_ref, b1_ref, wcat2_ref, m2_ref, pcomp_ref, b2_ref,
         wcat3_ref, m3_ref, b3_ref) = refs[:10]
        res_refs = refs[10:10 + 2 * n_res]
        o_ref = refs[10 + 2 * n_res]
        scr = refs[10 + 2 * n_res + 1]

        # Zero the scratch once so padded (never-written) window reads are 0.
        scr[...] = jnp.zeros(scr.shape, scr.dtype)

        def conv_taps(y, masks_ref, deltas, cout, nrows):
            """Tap reduction: stage the wide matmul result in the padded VMEM
            scratch, then accumulate every tap with a statically-offset window
            load * 0/1 boundary mask (pure f32 VPU work, no tiny MXU dots)."""
            width = len(deltas) * cout
            scr[pad_top:pad_top + nrows, 0:width] = y
            acc = None
            for k, d in enumerate(deltas):
                blk = scr[pad_top + d:pad_top + d + nrows, k * cout:(k + 1) * cout]
                term = masks_ref[:, k:k + 1] * blk
                acc = term if acc is None else acc + term
            return acc

        # conv1 (4x4 / s2 / p1) + ReLU: one matmul on the pre-formed im2col.
        a1 = jnp.maximum(mxu(cols1_ref[...], w1_ref[...]) + b1_ref[...], 0.0)

        # conv2 (4x4 / s2 / p1) + ReLU: one wide matmul (512 lanes), tap
        # reduction, then a tiny f32 row-compaction matmul that also reorders
        # the rows into the final ow-major output order.
        y2 = mxu(a1, wcat2_ref[...])                               # (R1, 16*C2)
        z2 = conv_taps(y2, m2_ref, d2, C2, R1)                     # (R1, C2), f32
        a2 = jnp.maximum(
            jnp.dot(pcomp_ref[...], z2, preferred_element_type=jnp.float32)
            + b2_ref[...], 0.0)                                    # (M2, C2)

        # conv3 (3x3 / s1 / p1), no activation.
        y3 = mxu(a2, wcat3_ref[...])                               # (M2, 9*C2)
        xcur = conv_taps(y3, m3_ref, d3, C2, M2) + b3_ref[...]

        # Residual stack: x += Conv1x1(ReLU(Conv3x3(ReLU(x)))); trailing ReLU.
        for li in range(n_res):
            w3r_ref, w1r_ref = res_refs[2 * li], res_refs[2 * li + 1]
            cr = w1r_ref.shape[0]
            h = jnp.maximum(xcur, 0.0)
            yr = mxu(h, w3r_ref[...])                              # (M2, 9*cr)
            hr = jnp.maximum(conv_taps(yr, m3_ref, d3, cr, M2), 0.0)
            xcur = xcur + mxu(hr, w1r_ref[...])
        xcur = jnp.maximum(xcur, 0.0)

        # Lane-dense (N*H2, W2*C2) output slab; rows are already in the final
        # ow-major order, so each ow block is one static sub-window store.
        for j in range(W2):
            o_ref[:, j * C2:(j + 1) * C2] = xcur[j * nrow:(j + 1) * nrow, :]

    ops = [cols1, packed["w1"], packed["b1"],
           packed["wcat2"], packed["masks2"], packed["pcomp"], packed["b2"],
           packed["wcat3"], packed["masks3"], packed["b3"]]
    for w3r, w1r in packed["res"]:
        ops += [w3r, w1r]

    def full_spec(a):
        nd = a.ndim
        return pl.BlockSpec(a.shape, lambda i, _nd=nd: (0,) * _nd)

    # Advisory cost estimate (helps XLA schedule the surrounding glue ops).
    def mm(m, k, n):
        return 2 * m * k * n
    flops = mm(R1, cols1.shape[1], C1)
    flops += mm(R1, C1, 16 * C2) + 3 * 16 * R1 * C2 + mm(M2, R1, C2)
    flops += mm(M2, C2, 9 * C2) + 3 * 9 * M2 * C2
    for w3r, w1r in packed["res"]:
        cr = w1r.shape[0]
        flops += mm(M2, C2, 9 * cr) + 3 * 9 * M2 * cr + mm(M2, cr, C2)
    bytes_accessed = sum(int(np.prod(a.shape)) * a.dtype.itemsize for a in ops)
    bytes_accessed += nrow * lane * 4

    # NOTE: single grid point is optimal at this size (single TensorCore on
    # v5e/v6e, ~85 KB of constants).  For realistic VQ-VAE inputs, tile the
    # row (M) dimension with a "parallel" grid axis (v7x dual TC), re-derive
    # tiles for 64 MiB VMEM and set vmem_limit_bytes explicitly.
    out8 = pl.pallas_call(
        kernel,
        out_shape=jax.ShapeDtypeStruct((nrow, lane), jnp.float32),
        grid=(1,),
        in_specs=[full_spec(a) for a in ops],
        out_specs=pl.BlockSpec((nrow, lane), lambda i: (0, 0)),
        scratch_shapes=[pltpu.VMEM((scr_rows, scr_cols), jnp.float32)],
        compiler_params=pltpu.CompilerParams(dimension_semantics=("arbitrary",)),
        cost_estimate=pl.CostEstimate(flops=int(flops), transcendentals=0,
                                      bytes_accessed=int(bytes_accessed)),
    )(*ops)

    out_nhwc = out8.reshape(N, H2, W2, C2)             # pure row-major reshape
    return jnp.transpose(out_nhwc, (0, 3, 1, 2))       # NHWC -> NCHW (module semantics)


# ---------------------------------------------------------------------------
# Parameter init (PyTorch layouts) + pure-JAX reference for correctness check
# ---------------------------------------------------------------------------
def init_encoder_params(key, num_hiddens, num_residual_layers, num_residual_hiddens):
    def nrm(k, shape):
        return 0.05 * jax.random.normal(k, shape, dtype=jnp.float32)

    ks = jax.random.split(key, 6 + 2 * num_residual_layers)
    h2 = num_hiddens // 2
    params = {
        "conv1_w": nrm(ks[0], (h2, 1, 4, 4)),
        "conv1_b": nrm(ks[1], (h2,)),
        "conv2_w": nrm(ks[2], (num_hiddens, h2, 4, 4)),
        "conv2_b": nrm(ks[3], (num_hiddens,)),
        "conv3_w": nrm(ks[4], (num_hiddens, num_hiddens, 3, 3)),
        "conv3_b": nrm(ks[5], (num_hiddens,)),
        "res": [],
    }
    for li in range(num_residual_layers):
        w3 = nrm(ks[6 + 2 * li], (num_residual_hiddens, num_hiddens, 3, 3))
        w1 = nrm(ks[7 + 2 * li], (num_hiddens, num_residual_hiddens, 1, 1))
        params["res"].append((w3, w1))  # VQ-VAE residual convs use bias=False
    return params


def _ref_conv(x, w, b, stride, pad):
    out = jax.lax.conv_general_dilated(
        x, w, (stride, stride), [(pad, pad), (pad, pad)],
        dimension_numbers=("NCHW", "OIHW", "NCHW"),
        precision=jax.lax.Precision.HIGHEST)
    return out + b.reshape(1, -1, 1, 1)


def encoder_reference(params, x):
    num_hiddens = params["conv2_w"].shape[0]
    num_res_hid = params["res"][0][0].shape[0]
    zero_h = jnp.zeros((num_hiddens,), jnp.float32)
    zero_r = jnp.zeros((num_res_hid,), jnp.float32)

    x = jax.nn.relu(_ref_conv(x, params["conv1_w"], params["conv1_b"], 2, 1))
    x = jax.nn.relu(_ref_conv(x, params["conv2_w"], params["conv2_b"], 2, 1))
    x = _ref_conv(x, params["conv3_w"], params["conv3_b"], 1, 1)
    for w3, w1 in params["res"]:
        h = jax.nn.relu(x)
        h = jax.nn.relu(_ref_conv(h, w3, zero_r, 1, 1))
        h = _ref_conv(h, w1, zero_h, 1, 0)
        x = x + h
    return jax.nn.relu(x)


# ---------------------------------------------------------------------------
if __name__ == "__main__":
    num_hiddens, num_residual_layers, num_residual_hiddens = 32, 2, 16

    key = jax.random.PRNGKey(0)
    k_param, k_x = jax.random.split(key)
    params = init_encoder_params(k_param, num_hiddens, num_residual_layers,
                                 num_residual_hiddens)

    x = jax.random.normal(k_x, (2, 1, 16, 16), dtype=jnp.float32)  # NCHW input

    packed = pack_encoder(params, x.shape)          # one-time, hoisted repack
    out = jax.block_until_ready(encoder_forward(packed, x))

    ref = jax.block_until_ready(encoder_reference(params, x))
    assert out.shape == (2, num_hiddens, 4, 4), out.shape
    max_err = float(jnp.abs(out - ref).max())
    assert jnp.allclose(out, ref, rtol=1e-2, atol=1e-2), max_err

    print("KERNEL_OK")
</pallas_src>

<mosaic_0001>
module attributes {stable_mosaic.version = 11 : i64} {
  func.func @kernel(%arg0: i32, %arg1: memref<128x16xbf16, #tpu.memory_space<vmem>>, %arg2: memref<16x16xbf16, #tpu.memory_space<vmem>>, %arg3: memref<1x16xf32, #tpu.memory_space<vmem>>, %arg4: memref<16x512xbf16, #tpu.memory_space<vmem>>, %arg5: memref<128x16xf32, #tpu.memory_space<vmem>>, %arg6: memref<32x128xf32, #tpu.memory_space<vmem>>, %arg7: memref<1x32xf32, #tpu.memory_space<vmem>>, %arg8: memref<32x288xbf16, #tpu.memory_space<vmem>>, %arg9: memref<32x9xf32, #tpu.memory_space<vmem>>, %arg10: memref<1x32xf32, #tpu.memory_space<vmem>>, %arg11: memref<32x144xbf16, #tpu.memory_space<vmem>>, %arg12: memref<16x32xbf16, #tpu.memory_space<vmem>>, %arg13: memref<32x144xbf16, #tpu.memory_space<vmem>>, %arg14: memref<16x32xbf16, #tpu.memory_space<vmem>>, %arg15: memref<8x128xf32, #tpu.memory_space<vmem>>, %arg16: memref<168x512xf32, #tpu.memory_space<vmem>>) attributes {dimension_semantics = [#tpu.dimension_semantics<arbitrary>], iteration_bounds = array<i64: 1>, scalar_prefetch = 0 : i64, scratch_operands = 1 : i64, tpu.core_type = #tpu.core_type<tc>, window_params = [{pipeline_mode = #tpu.pipeline_mode<synchronous>, transform_indices = @transform_0, window_bounds = array<i64: 128, 16>}, {pipeline_mode = #tpu.pipeline_mode<synchronous>, transform_indices = @transform_1, window_bounds = array<i64: 16, 16>}, {pipeline_mode = #tpu.pipeline_mode<synchronous>, transform_indices = @transform_2, window_bounds = array<i64: 1, 16>}, {pipeline_mode = #tpu.pipeline_mode<synchronous>, transform_indices = @transform_3, window_bounds = array<i64: 16, 512>}, {pipeline_mode = #tpu.pipeline_mode<synchronous>, transform_indices = @transform_4, window_bounds = array<i64: 128, 16>}, {pipeline_mode = #tpu.pipeline_mode<synchronous>, transform_indices = @transform_5, window_bounds = array<i64: 32, 128>}, {pipeline_mode = #tpu.pipeline_mode<synchronous>, transform_indices = @transform_6, window_bounds = array<i64: 1, 32>}, {pipeline_mode = #tpu.pipeline_mode<synchronous>, transform_indices = @transform_7, window_bounds = array<i64: 32, 288>}, {pipeline_mode = #tpu.pipeline_mode<synchronous>, transform_indices = @transform_8, window_bounds = array<i64: 32, 9>}, {pipeline_mode = #tpu.pipeline_mode<synchronous>, transform_indices = @transform_9, window_bounds = array<i64: 1, 32>}, {pipeline_mode = #tpu.pipeline_mode<synchronous>, transform_indices = @transform_10, window_bounds = array<i64: 32, 144>}, {pipeline_mode = #tpu.pipeline_mode<synchronous>, transform_indices = @transform_11, window_bounds = array<i64: 16, 32>}, {pipeline_mode = #tpu.pipeline_mode<synchronous>, transform_indices = @transform_12, window_bounds = array<i64: 32, 144>}, {pipeline_mode = #tpu.pipeline_mode<synchronous>, transform_indices = @transform_13, window_bounds = array<i64: 16, 32>}, {pipeline_mode = #tpu.pipeline_mode<synchronous>, transform_indices = @transform_14, window_bounds = array<i64: 8, 128>}]} {
    %cst = arith.constant 0.000000e+00 : f32
    %0 = vector.broadcast %cst : f32 to vector<168x512xf32>
    %c0 = arith.constant 0 : index
    %c0_0 = arith.constant 0 : index
    %1 = vector.load %arg16[%c0, %c0_0] : memref<168x512xf32, #tpu.memory_space<vmem>>, vector<168x512xf32>
    tpu.vector_store %arg16[%c0, %c0_0], %0 {strides = array<i32>} : memref<168x512xf32, #tpu.memory_space<vmem>>, vector<168x512xf32>,
    %c0_1 = arith.constant 0 : index
    %c0_2 = arith.constant 0 : index
    %2 = vector.load %arg1[%c0_1, %c0_2] : memref<128x16xbf16, #tpu.memory_space<vmem>>, vector<128x16xbf16>
    %c0_3 = arith.constant 0 : index
    %c0_4 = arith.constant 0 : index
    %3 = vector.load %arg2[%c0_3, %c0_4] : memref<16x16xbf16, #tpu.memory_space<vmem>>, vector<16x16xbf16>
    %cst_5 = arith.constant dense<0.000000e+00> : vector<128x16xf32>
    %4 = tpu.matmul %2, %3, %cst_5 {dimension_numbers = #tpu.dot_dimension_numbers<[1], [0], [0], [1], [0, 0, 1, 1], [], []>} : vector<128x16xbf16>, vector<16x16xbf16>, vector<128x16xf32> -> vector<128x16xf32>
    %c0_6 = arith.constant 0 : index
    %c0_7 = arith.constant 0 : index
    %5 = vector.load %arg3[%c0_6, %c0_7] : memref<1x16xf32, #tpu.memory_space<vmem>>, vector<1x16xf32>
    %6 = vector.broadcast %5 : vector<1x16xf32> to vector<128x16xf32>
    %7 = arith.addf %4, %6 : vector<128x16xf32>
    %cst_8 = arith.constant 0.000000e+00 : f32
    %8 = vector.broadcast %cst_8 : f32 to vector<128x16xf32>
    %9 = arith.maximumf %7, %8 : vector<128x16xf32>
    %c0_9 = arith.constant 0 : index
    %c0_10 = arith.constant 0 : index
    %10 = vector.load %arg4[%c0_9, %c0_10] : memref<16x512xbf16, #tpu.memory_space<vmem>>, vector<16x512xbf16>
    %11 = arith.truncf %9 : vector<128x16xf32> to vector<128x16xbf16>
    %cst_11 = arith.constant dense<0.000000e+00> : vector<128x512xf32>
    %12 = tpu.matmul %11, %10, %cst_11 {dimension_numbers = #tpu.dot_dimension_numbers<[1], [0], [0], [1], [0, 0, 1, 1], [], []>} : vector<128x16xbf16>, vector<16x512xbf16>, vector<128x512xf32> -> vector<128x512xf32>
    %c16 = arith.constant 16 : index
    %c0_12 = arith.constant 0 : index
    %13 = vector.load %arg16[%c16, %c0_12] : memref<168x512xf32, #tpu.memory_space<vmem>>, vector<128x512xf32>
    tpu.vector_store %arg16[%c16, %c0_12], %12 {strides = array<i32>} : memref<168x512xf32, #tpu.memory_space<vmem>>, vector<128x512xf32>,
    %c7 = arith.constant 7 : index
    %c0_13 = arith.constant 0 : index
    %14 = vector.load %arg16[%c7, %c0_13] : memref<168x512xf32, #tpu.memory_space<vmem>>, vector<128x32xf32>
    %c0_14 = arith.constant 0 : index
    %c0_15 = arith.constant 0 : index
    %15 = vector.load %arg5[%c0_14, %c0_15] : memref<128x16xf32, #tpu.memory_space<vmem>>, vector<128x1xf32>
    %16 = vector.broadcast %15 : vector<128x1xf32> to vector<128x32xf32>
    %17 = arith.mulf %16, %14 : vector<128x32xf32>
    %c8 = arith.constant 8 : index
    %c32 = arith.constant 32 : index
    %18 = vector.load %arg16[%c8, %c32] : memref<168x512xf32, #tpu.memory_space<vmem>>, vector<128x32xf32>
    %c0_16 = arith.constant 0 : index
    %c1 = arith.constant 1 : index
    %19 = vector.load %arg5[%c0_16, %c1] : memref<128x16xf32, #tpu.memory_space<vmem>>, vector<128x1xf32>
    %20 = vector.broadcast %19 : vector<128x1xf32> to vector<128x32xf32>
    %21 = arith.mulf %20, %18 : vector<128x32xf32>
    %22 = arith.addf %17, %21 : vector<128x32xf32>
    %c9 = arith.constant 9 : index
    %c64 = arith.constant 64 : index
    %23 = vector.load %arg16[%c9, %c64] : memref<168x512xf32, #tpu.memory_space<vmem>>, vector<128x32xf32>
    %c0_17 = arith.constant 0 : index
    %c2 = arith.constant 2 : index
    %24 = vector.load %arg5[%c0_17, %c2] : memref<128x16xf32, #tpu.memory_space<vmem>>, vector<128x1xf32>
    %25 = vector.broadcast %24 : vector<128x1xf32> to vector<128x32xf32>
    %26 = arith.mulf %25, %23 : vector<128x32xf32>
    %27 = arith.addf %22, %26 : vector<128x32xf32>
    %c10 = arith.constant 10 : index
    %c96 = arith.constant 96 : index
    %28 = vector.load %arg16[%c10, %c96] : memref<168x512xf32, #tpu.memory_space<vmem>>, vector<128x32xf32>
    %c0_18 = arith.constant 0 : index
    %c3 = arith.constant 3 : index
    %29 = vector.load %arg5[%c0_18, %c3] : memref<128x16xf32, #tpu.memory_space<vmem>>, vector<128x1xf32>
    %30 = vector.broadcast %29 : vector<128x1xf32> to vector<128x32xf32>
    %31 = arith.mulf %30, %28 : vector<128x32xf32>
    %32 = arith.addf %27, %31 : vector<128x32xf32>
    %c15 = arith.constant 15 : index
    %c128 = arith.constant 128 : index
    %33 = vector.load %arg16[%c15, %c128] : memref<168x512xf32, #tpu.memory_space<vmem>>, vector<128x32xf32>
    %c0_19 = arith.constant 0 : index
    %c4 = arith.constant 4 : index
    %34 = vector.load %arg5[%c0_19, %c4] : memref<128x16xf32, #tpu.memory_space<vmem>>, vector<128x1xf32>
    %35 = vector.broadcast %34 : vector<128x1xf32> to vector<128x32xf32>
    %36 = arith.mulf %35, %33 : vector<128x32xf32>
    %37 = arith.addf %32, %36 : vector<128x32xf32>
    %c16_20 = arith.constant 16 : index
    %c160 = arith.constant 160 : index
    %38 = vector.load %arg16[%c16_20, %c160] : memref<168x512xf32, #tpu.memory_space<vmem>>, vector<128x32xf32>
    %c0_21 = arith.constant 0 : index
    %c5 = arith.constant 5 : index
    %39 = vector.load %arg5[%c0_21, %c5] : memref<128x16xf32, #tpu.memory_space<vmem>>, vector<128x1xf32>
    %40 = vector.broadcast %39 : vector<128x1xf32> to vector<128x32xf32>
    %41 = arith.mulf %40, %38 : vector<128x32xf32>
    %42 = arith.addf %37, %41 : vector<128x32xf32>
    %c17 = arith.constant 17 : index
    %c192 = arith.constant 192 : index
    %43 = vector.load %arg16[%c17, %c192] : memref<168x512xf32, #tpu.memory_space<vmem>>, vector<128x32xf32>
    %c0_22 = arith.constant 0 : index
    %c6 = arith.constant 6 : index
    %44 = vector.load %arg5[%c0_22, %c6] : memref<128x16xf32, #tpu.memory_space<vmem>>, vector<128x1xf32>
    %45 = vector.broadcast %44 : vector<128x1xf32> to vector<128x32xf32>
    %46 = arith.mulf %45, %43 : vector<128x32xf32>
    %47 = arith.addf %42, %46 : vector<128x32xf32>
    %c18 = arith.constant 18 : index
    %c224 = arith.constant 224 : index
    %48 = vector.load %arg16[%c18, %c224] : memref<168x512xf32, #tpu.memory_space<vmem>>, vector<128x32xf32>
    %c0_23 = arith.constant 0 : index
    %c7_24 = arith.constant 7 : index
    %49 = vector.load %arg5[%c0_23, %c7_24] : memref<128x16xf32, #tpu.memory_space<vmem>>, vector<128x1xf32>
    %50 = vector.broadcast %49 : vector<128x1xf32> to vector<128x32xf32>
    %51 = arith.mulf %50, %48 : vector<128x32xf32>
    %52 = arith.addf %47, %51 : vector<128x32xf32>
    %c23 = arith.constant 23 : index
    %c256 = arith.constant 256 : index
    %53 = vector.load %arg16[%c23, %c256] : memref<168x512xf32, #tpu.memory_space<vmem>>, vector<128x32xf32>
    %c0_25 = arith.constant 0 : index
    %c8_26 = arith.constant 8 : index
    %54 = vector.load %arg5[%c0_25, %c8_26] : memref<128x16xf32, #tpu.memory_space<vmem>>, vector<128x1xf32>
    %55 = vector.broadcast %54 : vector<128x1xf32> to vector<128x32xf32>
    %56 = arith.mulf %55, %53 : vector<128x32xf32>
    %57 = arith.addf %52, %56 : vector<128x32xf32>
    %c24 = arith.constant 24 : index
    %c288 = arith.constant 288 : index
    %58 = vector.load %arg16[%c24, %c288] : memref<168x512xf32, #tpu.memory_space<vmem>>, vector<128x32xf32>
    %c0_27 = arith.constant 0 : index
    %c9_28 = arith.constant 9 : index
    %59 = vector.load %arg5[%c0_27, %c9_28] : memref<128x16xf32, #tpu.memory_space<vmem>>, vector<128x1xf32>
    %60 = vector.broadcast %59 : vector<128x1xf32> to vector<128x32xf32>
    %61 = arith.mulf %60, %58 : vector<128x32xf32>
    %62 = arith.addf %57, %61 : vector<128x32xf32>
    %c25 = arith.constant 25 : index
    %c320 = arith.constant 320 : index
    %63 = vector.load %arg16[%c25, %c320] : memref<168x512xf32, #tpu.memory_space<vmem>>, vector<128x32xf32>
    %c0_29 = arith.constant 0 : index
    %c10_30 = arith.constant 10 : index
    %64 = vector.load %arg5[%c0_29, %c10_30] : memref<128x16xf32, #tpu.memory_space<vmem>>, vector<128x1xf32>
    %65 = vector.broadcast %64 : vector<128x1xf32> to vector<128x32xf32>
    %66 = arith.mulf %65, %63 : vector<128x32xf32>
    %67 = arith.addf %62, %66 : vector<128x32xf32>
    %c26 = arith.constant 26 : index
    %c352 = arith.constant 352 : index
    %68 = vector.load %arg16[%c26, %c352] : memref<168x512xf32, #tpu.memory_space<vmem>>, vector<128x32xf32>
    %c0_31 = arith.constant 0 : index
    %c11 = arith.constant 11 : index
    %69 = vector.load %arg5[%c0_31, %c11] : memref<128x16xf32, #tpu.memory_space<vmem>>, vector<128x1xf32>
    %70 = vector.broadcast %69 : vector<128x1xf32> to vector<128x32xf32>
    %71 = arith.mulf %70, %68 : vector<128x32xf32>
    %72 = arith.addf %67, %71 : vector<128x32xf32>
    %c31 = arith.constant 31 : index
    %c384 = arith.constant 384 : index
    %73 = vector.load %arg16[%c31, %c384] : memref<168x512xf32, #tpu.memory_space<vmem>>, vector<128x32xf32>
    %c0_32 = arith.constant 0 : index
    %c12 = arith.constant 12 : index
    %74 = vector.load %arg5[%c0_32, %c12] : memref<128x16xf32, #tpu.memory_space<vmem>>, vector<128x1xf32>
    %75 = vector.broadcast %74 : vector<128x1xf32> to vector<128x32xf32>
    %76 = arith.mulf %75, %73 : vector<128x32xf32>
    %77 = arith.addf %72, %76 : vector<128x32xf32>
    %c32_33 = arith.constant 32 : index
    %c416 = arith.constant 416 : index
    %78 = vector.load %arg16[%c32_33, %c416] : memref<168x512xf32, #tpu.memory_space<vmem>>, vector<128x32xf32>
    %c0_34 = arith.constant 0 : index
    %c13 = arith.constant 13 : index
    %79 = vector.load %arg5[%c0_34, %c13] : memref<128x16xf32, #tpu.memory_space<vmem>>, vector<128x1xf32>
    %80 = vector.broadcast %79 : vector<128x1xf32> to vector<128x32xf32>
    %81 = arith.mulf %80, %78 : vector<128x32xf32>
    %82 = arith.addf %77, %81 : vector<128x32xf32>
    %c33 = arith.constant 33 : index
    %c448 = arith.constant 448 : index
    %83 = vector.load %arg16[%c33, %c448] : memref<168x512xf32, #tpu.memory_space<vmem>>, vector<128x32xf32>
    %c0_35 = arith.constant 0 : index
    %c14 = arith.constant 14 : index
    %84 = vector.load %arg5[%c0_35, %c14] : memref<128x16xf32, #tpu.memory_space<vmem>>, vector<128x1xf32>
    %85 = vector.broadcast %84 : vector<128x1xf32> to vector<128x32xf32>
    %86 = arith.mulf %85, %83 : vector<128x32xf32>
    %87 = arith.addf %82, %86 : vector<128x32xf32>
    %c34 = arith.constant 34 : index
    %c480 = arith.constant 480 : index
    %88 = vector.load %arg16[%c34, %c480] : memref<168x512xf32, #tpu.memory_space<vmem>>, vector<128x32xf32>
    %c0_36 = arith.constant 0 : index
    %c15_37 = arith.constant 15 : index
    %89 = vector.load %arg5[%c0_36, %c15_37] : memref<128x16xf32, #tpu.memory_space<vmem>>, vector<128x1xf32>
    %90 = vector.broadcast %89 : vector<128x1xf32> to vector<128x32xf32>
    %91 = arith.mulf %90, %88 : vector<128x32xf32>
    %92 = arith.addf %87, %91 : vector<128x32xf32>
    %c0_38 = arith.constant 0 : index
    %c0_39 = arith.constant 0 : index
    %93 = vector.load %arg6[%c0_38, %c0_39] : memref<32x128xf32, #tpu.memory_space<vmem>>, vector<32x128xf32>
    %cst_40 = arith.constant dense<0.000000e+00> : vector<32x32xf32>
    %94 = tpu.matmul %93, %92, %cst_40 {dimension_numbers = #tpu.dot_dimension_numbers<[1], [0], [0], [1], [0, 0, 1, 1], [], []>} : vector<32x128xf32>, vector<128x32xf32>, vector<32x32xf32> -> vector<32x32xf32>
    %c0_41 = arith.constant 0 : index
    %c0_42 = arith.constant 0 : index
    %95 = vector.load %arg7[%c0_41, %c0_42] : memref<1x32xf32, #tpu.memory_space<vmem>>, vector<1x32xf32>
    %96 = vector.broadcast %95 : vector<1x32xf32> to vector<32x32xf32>
    %97 = arith.addf %94, %96 : vector<32x32xf32>
    %cst_43 = arith.constant 0.000000e+00 : f32
    %98 = vector.broadcast %cst_43 : f32 to vector<32x32xf32>
    %99 = arith.maximumf %97, %98 : vector<32x32xf32>
    %c0_44 = arith.constant 0 : index
    %c0_45 = arith.constant 0 : index
    %100 = vector.load %arg8[%c0_44, %c0_45] : memref<32x288xbf16, #tpu.memory_space<vmem>>, vector<32x288xbf16>
    %101 = arith.truncf %99 : vector<32x32xf32> to vector<32x32xbf16>
    %cst_46 = arith.constant dense<0.000000e+00> : vector<32x288xf32>
    %102 = tpu.matmul %101, %100, %cst_46 {dimension_numbers = #tpu.dot_dimension_numbers<[1], [0], [0], [1], [0, 0, 1, 1], [], []>} : vector<32x32xbf16>, vector<32x288xbf16>, vector<32x288xf32> -> vector<32x288xf32>
    %c16_47 = arith.constant 16 : index
    %c0_48 = arith.constant 0 : index
    %103 = vector.load %arg16[%c16_47, %c0_48] : memref<168x512xf32, #tpu.memory_space<vmem>>, vector<32x288xf32>
    tpu.vector_store %arg16[%c16_47, %c0_48], %102 {strides = array<i32>} : memref<168x512xf32, #tpu.memory_space<vmem>>, vector<32x288xf32>,
    %c7_49 = arith.constant 7 : index
    %c0_50 = arith.constant 0 : index
    %104 = vector.load %arg16[%c7_49, %c0_50] : memref<168x512xf32, #tpu.memory_space<vmem>>, vector<32x32xf32>
    %c0_51 = arith.constant 0 : index
    %c0_52 = arith.constant 0 : index
    %105 = vector.load %arg9[%c0_51, %c0_52] : memref<32x9xf32, #tpu.memory_space<vmem>>, vector<32x1xf32>
    %106 = vector.broadcast %105 : vector<32x1xf32> to vector<32x32xf32>
    %107 = arith.mulf %106, %104 : vector<32x32xf32>
    %c15_53 = arith.constant 15 : index
    %c32_54 = arith.constant 32 : index
    %108 = vector.load %arg16[%c15_53, %c32_54] : memref<168x512xf32, #tpu.memory_space<vmem>>, vector<32x32xf32>
    %c0_55 = arith.constant 0 : index
    %c1_56 = arith.constant 1 : index
    %109 = vector.load %arg9[%c0_55, %c1_56] : memref<32x9xf32, #tpu.memory_space<vmem>>, vector<32x1xf32>
    %110 = vector.broadcast %109 : vector<32x1xf32> to vector<32x32xf32>
    %111 = arith.mulf %110, %108 : vector<32x32xf32>
    %112 = arith.addf %107, %111 : vector<32x32xf32>
    %c23_57 = arith.constant 23 : index
    %c64_58 = arith.constant 64 : index
    %113 = vector.load %arg16[%c23_57, %c64_58] : memref<168x512xf32, #tpu.memory_space<vmem>>, vector<32x32xf32>
    %c0_59 = arith.constant 0 : index
    %c2_60 = arith.constant 2 : index
    %114 = vector.load %arg9[%c0_59, %c2_60] : memref<32x9xf32, #tpu.memory_space<vmem>>, vector<32x1xf32>
    %115 = vector.broadcast %114 : vector<32x1xf32> to vector<32x32xf32>
    %116 = arith.mulf %115, %113 : vector<32x32xf32>
    %117 = arith.addf %112, %116 : vector<32x32xf32>
    %c8_61 = arith.constant 8 : index
    %c96_62 = arith.constant 96 : index
    %118 = vector.load %arg16[%c8_61, %c96_62] : memref<168x512xf32, #tpu.memory_space<vmem>>, vector<32x32xf32>
    %c0_63 = arith.constant 0 : index
    %c3_64 = arith.constant 3 : index
    %119 = vector.load %arg9[%c0_63, %c3_64] : memref<32x9xf32, #tpu.memory_space<vmem>>, vector<32x1xf32>
    %120 = vector.broadcast %119 : vector<32x1xf32> to vector<32x32xf32>
    %121 = arith.mulf %120, %118 : vector<32x32xf32>
    %122 = arith.addf %117, %121 : vector<32x32xf32>
    %c16_65 = arith.constant 16 : index
    %c128_66 = arith.constant 128 : index
    %123 = vector.load %arg16[%c16_65, %c128_66] : memref<168x512xf32, #tpu.memory_space<vmem>>, vector<32x32xf32>
    %c0_67 = arith.constant 0 : index
    %c4_68 = arith.constant 4 : index
    %124 = vector.load %arg9[%c0_67, %c4_68] : memref<32x9xf32, #tpu.memory_space<vmem>>, vector<32x1xf32>
    %125 = vector.broadcast %124 : vector<32x1xf32> to vector<32x32xf32>
    %126 = arith.mulf %125, %123 : vector<32x32xf32>
    %127 = arith.addf %122, %126 : vector<32x32xf32>
    %c24_69 = arith.constant 24 : index
    %c160_70 = arith.constant 160 : index
    %128 = vector.load %arg16[%c24_69, %c160_70] : memref<168x512xf32, #tpu.memory_space<vmem>>, vector<32x32xf32>
    %c0_71 = arith.constant 0 : index
    %c5_72 = arith.constant 5 : index
    %129 = vector.load %arg9[%c0_71, %c5_72] : memref<32x9xf32, #tpu.memory_space<vmem>>, vector<32x1xf32>
    %130 = vector.broadcast %129 : vector<32x1xf32> to vector<32x32xf32>
    %131 = arith.mulf %130, %128 : vector<32x32xf32>
    %132 = arith.addf %127, %131 : vector<32x32xf32>
    %c9_73 = arith.constant 9 : index
    %c192_74 = arith.constant 192 : index
    %133 = vector.load %arg16[%c9_73, %c192_74] : memref<168x512xf32, #tpu.memory_space<vmem>>, vector<32x32xf32>
    %c0_75 = arith.constant 0 : index
    %c6_76 = arith.constant 6 : index
    %134 = vector.load %arg9[%c0_75, %c6_76] : memref<32x9xf32, #tpu.memory_space<vmem>>, vector<32x1xf32>
    %135 = vector.broadcast %134 : vector<32x1xf32> to vector<32x32xf32>
    %136 = arith.mulf %135, %133 : vector<32x32xf32>
    %137 = arith.addf %132, %136 : vector<32x32xf32>
    %c17_77 = arith.constant 17 : index
    %c224_78 = arith.constant 224 : index
    %138 = vector.load %arg16[%c17_77, %c224_78] : memref<168x512xf32, #tpu.memory_space<vmem>>, vector<32x32xf32>
    %c0_79 = arith.constant 0 : index
    %c7_80 = arith.constant 7 : index
    %139 = vector.load %arg9[%c0_79, %c7_80] : memref<32x9xf32, #tpu.memory_space<vmem>>, vector<32x1xf32>
    %140 = vector.broadcast %139 : vector<32x1xf32> to vector<32x32xf32>
    %141 = arith.mulf %140, %138 : vector<32x32xf32>
    %142 = arith.addf %137, %141 : vector<32x32xf32>
    %c25_81 = arith.constant 25 : index
    %c256_82 = arith.constant 256 : index
    %143 = vector.load %arg16[%c25_81, %c256_82] : memref<168x512xf32, #tpu.memory_space<vmem>>, vector<32x32xf32>
    %c0_83 = arith.constant 0 : index
    %c8_84 = arith.constant 8 : index
    %144 = vector.load %arg9[%c0_83, %c8_84] : memref<32x9xf32, #tpu.memory_space<vmem>>, vector<32x1xf32>
    %145 = vector.broadcast %144 : vector<32x1xf32> to vector<32x32xf32>
    %146 = arith.mulf %145, %143 : vector<32x32xf32>
    %147 = arith.addf %142, %146 : vector<32x32xf32>
    %c0_85 = arith.constant 0 : index
    %c0_86 = arith.constant 0 : index
    %148 = vector.load %arg10[%c0_85, %c0_86] : memref<1x32xf32, #tpu.memory_space<vmem>>, vector<1x32xf32>
    %149 = vector.broadcast %148 : vector<1x32xf32> to vector<32x32xf32>
    %150 = arith.addf %147, %149 : vector<32x32xf32>
    %cst_87 = arith.constant 0.000000e+00 : f32
    %151 = vector.broadcast %cst_87 : f32 to vector<32x32xf32>
    %152 = arith.maximumf %150, %151 : vector<32x32xf32>
    %c0_88 = arith.constant 0 : index
    %c0_89 = arith.constant 0 : index
    %153 = vector.load %arg11[%c0_88, %c0_89] : memref<32x144xbf16, #tpu.memory_space<vmem>>, vector<32x144xbf16>
    %154 = arith.truncf %152 : vector<32x32xf32> to vector<32x32xbf16>
    %cst_90 = arith.constant dense<0.000000e+00> : vector<32x144xf32>
    %155 = tpu.matmul %154, %153, %cst_90 {dimension_numbers = #tpu.dot_dimension_numbers<[1], [0], [0], [1], [0, 0, 1, 1], [], []>} : vector<32x32xbf16>, vector<32x144xbf16>, vector<32x144xf32> -> vector<32x144xf32>
    %c16_91 = arith.constant 16 : index
    %c0_92 = arith.constant 0 : index
    %156 = vector.load %arg16[%c16_91, %c0_92] : memref<168x512xf32, #tpu.memory_space<vmem>>, vector<32x144xf32>
    tpu.vector_store %arg16[%c16_91, %c0_92], %155 {strides = array<i32>} : memref<168x512xf32, #tpu.memory_space<vmem>>, vector<32x144xf32>,
    %c7_93 = arith.constant 7 : index
    %c0_94 = arith.constant 0 : index
    %157 = vector.load %arg16[%c7_93, %c0_94] : memref<168x512xf32, #tpu.memory_space<vmem>>, vector<32x16xf32>
    %c0_95 = arith.constant 0 : index
    %c0_96 = arith.constant 0 : index
    %158 = vector.load %arg9[%c0_95, %c0_96] : memref<32x9xf32, #tpu.memory_space<vmem>>, vector<32x1xf32>
    %159 = vector.broadcast %158 : vector<32x1xf32> to vector<32x16xf32>
    %160 = arith.mulf %159, %157 : vector<32x16xf32>
    %c15_97 = arith.constant 15 : index
    %c16_98 = arith.constant 16 : index
    %161 = vector.load %arg16[%c15_97, %c16_98] : memref<168x512xf32, #tpu.memory_space<vmem>>, vector<32x16xf32>
    %c0_99 = arith.constant 0 : index
    %c1_100 = arith.constant 1 : index
    %162 = vector.load %arg9[%c0_99, %c1_100] : memref<32x9xf32, #tpu.memory_space<vmem>>, vector<32x1xf32>
    %163 = vector.broadcast %162 : vector<32x1xf32> to vector<32x16xf32>
    %164 = arith.mulf %163, %161 : vector<32x16xf32>
    %165 = arith.addf %160, %164 : vector<32x16xf32>
    %c23_101 = arith.constant 23 : index
    %c32_102 = arith.constant 32 : index
    %166 = vector.load %arg16[%c23_101, %c32_102] : memref<168x512xf32, #tpu.memory_space<vmem>>, vector<32x16xf32>
    %c0_103 = arith.constant 0 : index
    %c2_104 = arith.constant 2 : index
    %167 = vector.load %arg9[%c0_103, %c2_104] : memref<32x9xf32, #tpu.memory_space<vmem>>, vector<32x1xf32>
    %168 = vector.broadcast %167 : vector<32x1xf32> to vector<32x16xf32>
    %169 = arith.mulf %168, %166 : vector<32x16xf32>
    %170 = arith.addf %165, %169 : vector<32x16xf32>
    %c8_105 = arith.constant 8 : index
    %c48 = arith.constant 48 : index
    %171 = vector.load %arg16[%c8_105, %c48] : memref<168x512xf32, #tpu.memory_space<vmem>>, vector<32x16xf32>
    %c0_106 = arith.constant 0 : index
    %c3_107 = arith.constant 3 : index
    %172 = vector.load %arg9[%c0_106, %c3_107] : memref<32x9xf32, #tpu.memory_space<vmem>>, vector<32x1xf32>
    %173 = vector.broadcast %172 : vector<32x1xf32> to vector<32x16xf32>
    %174 = arith.mulf %173, %171 : vector<32x16xf32>
    %175 = arith.addf %170, %174 : vector<32x16xf32>
    %c16_108 = arith.constant 16 : index
    %c64_109 = arith.constant 64 : index
    %176 = vector.load %arg16[%c16_108, %c64_109] : memref<168x512xf32, #tpu.memory_space<vmem>>, vector<32x16xf32>
    %c0_110 = arith.constant 0 : index
    %c4_111 = arith.constant 4 : index
    %177 = vector.load %arg9[%c0_110, %c4_111] : memref<32x9xf32, #tpu.memory_space<vmem>>, vector<32x1xf32>
    %178 = vector.broadcast %177 : vector<32x1xf32> to vector<32x16xf32>
    %179 = arith.mulf %178, %176 : vector<32x16xf32>
    %180 = arith.addf %175, %179 : vector<32x16xf32>
    %c24_112 = arith.constant 24 : index
    %c80 = arith.constant 80 : index
    %181 = vector.load %arg16[%c24_112, %c80] : memref<168x512xf32, #tpu.memory_space<vmem>>, vector<32x16xf32>
    %c0_113 = arith.constant 0 : index
    %c5_114 = arith.constant 5 : index
    %182 = vector.load %arg9[%c0_113, %c5_114] : memref<32x9xf32, #tpu.memory_space<vmem>>, vector<32x1xf32>
    %183 = vector.broadcast %182 : vector<32x1xf32> to vector<32x16xf32>
    %184 = arith.mulf %183, %181 : vector<32x16xf32>
    %185 = arith.addf %180, %184 : vector<32x16xf32>
    %c9_115 = arith.constant 9 : index
    %c96_116 = arith.constant 96 : index
    %186 = vector.load %arg16[%c9_115, %c96_116] : memref<168x512xf32, #tpu.memory_space<vmem>>, vector<32x16xf32>
    %c0_117 = arith.constant 0 : index
    %c6_118 = arith.constant 6 : index
    %187 = vector.load %arg9[%c0_117, %c6_118] : memref<32x9xf32, #tpu.memory_space<vmem>>, vector<32x1xf32>
    %188 = vector.broadcast %187 : vector<32x1xf32> to vector<32x16xf32>
    %189 = arith.mulf %188, %186 : vector<32x16xf32>
    %190 = arith.addf %185, %189 : vector<32x16xf32>
    %c17_119 = arith.constant 17 : index
    %c112 = arith.constant 112 : index
    %191 = vector.load %arg16[%c17_119, %c112] : memref<168x512xf32, #tpu.memory_space<vmem>>, vector<32x16xf32>
    %c0_120 = arith.constant 0 : index
    %c7_121 = arith.constant 7 : index
    %192 = vector.load %arg9[%c0_120, %c7_121] : memref<32x9xf32, #tpu.memory_space<vmem>>, vector<32x1xf32>
    %193 = vector.broadcast %192 : vector<32x1xf32> to vector<32x16xf32>
    %194 = arith.mulf %193, %191 : vector<32x16xf32>
    %195 = arith.addf %190, %194 : vector<32x16xf32>
    %c25_122 = arith.constant 25 : index
    %c128_123 = arith.constant 128 : index
    %196 = vector.load %arg16[%c25_122, %c128_123] : memref<168x512xf32, #tpu.memory_space<vmem>>, vector<32x16xf32>
    %c0_124 = arith.constant 0 : index
    %c8_125 = arith.constant 8 : index
    %197 = vector.load %arg9[%c0_124, %c8_125] : memref<32x9xf32, #tpu.memory_space<vmem>>, vector<32x1xf32>
    %198 = vector.broadcast %197 : vector<32x1xf32> to vector<32x16xf32>
    %199 = arith.mulf %198, %196 : vector<32x16xf32>
    %200 = arith.addf %195, %199 : vector<32x16xf32>
    %cst_126 = arith.constant 0.000000e+00 : f32
    %201 = vector.broadcast %cst_126 : f32 to vector<32x16xf32>
    %202 = arith.maximumf %200, %201 : vector<32x16xf32>
    %c0_127 = arith.constant 0 : index
    %c0_128 = arith.constant 0 : index
    %203 = vector.load %arg12[%c0_127, %c0_128] : memref<16x32xbf16, #tpu.memory_space<vmem>>, vector<16x32xbf16>
    %204 = arith.truncf %202 : vector<32x16xf32> to vector<32x16xbf16>
    %cst_129 = arith.constant dense<0.000000e+00> : vector<32x32xf32>
    %205 = tpu.matmul %204, %203, %cst_129 {dimension_numbers = #tpu.dot_dimension_numbers<[1], [0], [0], [1], [0, 0, 1, 1], [], []>} : vector<32x16xbf16>, vector<16x32xbf16>, vector<32x32xf32> -> vector<32x32xf32>
    %206 = arith.addf %150, %205 : vector<32x32xf32>
    %cst_130 = arith.constant 0.000000e+00 : f32
    %207 = vector.broadcast %cst_130 : f32 to vector<32x32xf32>
    %208 = arith.maximumf %206, %207 : vector<32x32xf32>
    %c0_131 = arith.constant 0 : index
    %c0_132 = arith.constant 0 : index
    %209 = vector.load %arg13[%c0_131, %c0_132] : memref<32x144xbf16, #tpu.memory_space<vmem>>, vector<32x144xbf16>
    %210 = arith.truncf %208 : vector<32x32xf32> to vector<32x32xbf16>
    %cst_133 = arith.constant dense<0.000000e+00> : vector<32x144xf32>
    %211 = tpu.matmul %210, %209, %cst_133 {dimension_numbers = #tpu.dot_dimension_numbers<[1], [0], [0], [1], [0, 0, 1, 1], [], []>} : vector<32x32xbf16>, vector<32x144xbf16>, vector<32x144xf32> -> vector<32x144xf32>
    %c16_134 = arith.constant 16 : index
    %c0_135 = arith.constant 0 : index
    %212 = vector.load %arg16[%c16_134, %c0_135] : memref<168x512xf32, #tpu.memory_space<vmem>>, vector<32x144xf32>
    tpu.vector_store %arg16[%c16_134, %c0_135], %211 {strides = array<i32>} : memref<168x512xf32, #tpu.memory_space<vmem>>, vector<32x144xf32>,
    %c7_136 = arith.constant 7 : index
    %c0_137 = arith.constant 0 : index
    %213 = vector.load %arg16[%c7_136, %c0_137] : memref<168x512xf32, #tpu.memory_space<vmem>>, vector<32x16xf32>
    %c0_138 = arith.constant 0 : index
    %c0_139 = arith.constant 0 : index
    %214 = vector.load %arg9[%c0_138, %c0_139] : memref<32x9xf32, #tpu.memory_space<vmem>>, vector<32x1xf32>
    %215 = vector.broadcast %214 : vector<32x1xf32> to vector<32x16xf32>
    %216 = arith.mulf %215, %213 : vector<32x16xf32>
    %c15_140 = arith.constant 15 : index
    %c16_141 = arith.constant 16 : index
    %217 = vector.load %arg16[%c15_140, %c16_141] : memref<168x512xf32, #tpu.memory_space<vmem>>, vector<32x16xf32>
    %c0_142 = arith.constant 0 : index
    %c1_143 = arith.constant 1 : index
    %218 = vector.load %arg9[%c0_142, %c1_143] : memref<32x9xf32, #tpu.memory_space<vmem>>, vector<32x1xf32>
    %219 = vector.broadcast %218 : vector<32x1xf32> to vector<32x16xf32>
    %220 = arith.mulf %219, %217 : vector<32x16xf32>
    %221 = arith.addf %216, %220 : vector<32x16xf32>
    %c23_144 = arith.constant 23 : index
    %c32_145 = arith.constant 32 : index
    %222 = vector.load %arg16[%c23_144, %c32_145] : memref<168x512xf32, #tpu.memory_space<vmem>>, vector<32x16xf32>
    %c0_146 = arith.constant 0 : index
    %c2_147 = arith.constant 2 : index
    %223 = vector.load %arg9[%c0_146, %c2_147] : memref<32x9xf32, #tpu.memory_space<vmem>>, vector<32x1xf32>
    %224 = vector.broadcast %223 : vector<32x1xf32> to vector<32x16xf32>
    %225 = arith.mulf %224, %222 : vector<32x16xf32>
    %226 = arith.addf %221, %225 : vector<32x16xf32>
    %c8_148 = arith.constant 8 : index
    %c48_149 = arith.constant 48 : index
    %227 = vector.load %arg16[%c8_148, %c48_149] : memref<168x512xf32, #tpu.memory_space<vmem>>, vector<32x16xf32>
    %c0_150 = arith.constant 0 : index
    %c3_151 = arith.constant 3 : index
    %228 = vector.load %arg9[%c0_150, %c3_151] : memref<32x9xf32, #tpu.memory_space<vmem>>, vector<32x1xf32>
    %229 = vector.broadcast %228 : vector<32x1xf32> to vector<32x16xf32>
    %230 = arith.mulf %229, %227 : vector<32x16xf32>
    %231 = arith.addf %226, %230 : vector<32x16xf32>
    %c16_152 = arith.constant 16 : index
    %c64_153 = arith.constant 64 : index
    %232 = vector.load %arg16[%c16_152, %c64_153] : memref<168x512xf32, #tpu.memory_space<vmem>>, vector<32x16xf32>
    %c0_154 = arith.constant 0 : index
    %c4_155 = arith.constant 4 : index
    %233 = vector.load %arg9[%c0_154, %c4_155] : memref<32x9xf32, #tpu.memory_space<vmem>>, vector<32x1xf32>
    %234 = vector.broadcast %233 : vector<32x1xf32> to vector<32x16xf32>
    %235 = arith.mulf %234, %232 : vector<32x16xf32>
    %236 = arith.addf %231, %235 : vector<32x16xf32>
    %c24_156 = arith.constant 24 : index
    %c80_157 = arith.constant 80 : index
    %237 = vector.load %arg16[%c24_156, %c80_157] : memref<168x512xf32, #tpu.memory_space<vmem>>, vector<32x16xf32>
    %c0_158 = arith.constant 0 : index
    %c5_159 = arith.constant 5 : index
    %238 = vector.load %arg9[%c0_158, %c5_159] : memref<32x9xf32, #tpu.memory_space<vmem>>, vector<32x1xf32>
    %239 = vector.broadcast %238 : vector<32x1xf32> to vector<32x16xf32>
    %240 = arith.mulf %239, %237 : vector<32x16xf32>
    %241 = arith.addf %236, %240 : vector<32x16xf32>
    %c9_160 = arith.constant 9 : index
    %c96_161 = arith.constant 96 : index
    %242 = vector.load %arg16[%c9_160, %c96_161] : memref<168x512xf32, #tpu.memory_space<vmem>>, vector<32x16xf32>
    %c0_162 = arith.constant 0 : index
    %c6_163 = arith.constant 6 : index
    %243 = vector.load %arg9[%c0_162, %c6_163] : memref<32x9xf32, #tpu.memory_space<vmem>>, vector<32x1xf32>
    %244 = vector.broadcast %243 : vector<32x1xf32> to vector<32x16xf32>
    %245 = arith.mulf %244, %242 : vector<32x16xf32>
    %246 = arith.addf %241, %245 : vector<32x16xf32>
    %c17_164 = arith.constant 17 : index
    %c112_165 = arith.constant 112 : index
    %247 = vector.load %arg16[%c17_164, %c112_165] : memref<168x512xf32, #tpu.memory_space<vmem>>, vector<32x16xf32>
    %c0_166 = arith.constant 0 : index
    %c7_167 = arith.constant 7 : index
    %248 = vector.load %arg9[%c0_166, %c7_167] : memref<32x9xf32, #tpu.memory_space<vmem>>, vector<32x1xf32>
    %249 = vector.broadcast %248 : vector<32x1xf32> to vector<32x16xf32>
    %250 = arith.mulf %249, %247 : vector<32x16xf32>
    %251 = arith.addf %246, %250 : vector<32x16xf32>
    %c25_168 = arith.constant 25 : index
    %c128_169 = arith.constant 128 : index
    %252 = vector.load %arg16[%c25_168, %c128_169] : memref<168x512xf32, #tpu.memory_space<vmem>>, vector<32x16xf32>
    %c0_170 = arith.constant 0 : index
    %c8_171 = arith.constant 8 : index
    %253 = vector.load %arg9[%c0_170, %c8_171] : memref<32x9xf32, #tpu.memory_space<vmem>>, vector<32x1xf32>
    %254 = vector.broadcast %253 : vector<32x1xf32> to vector<32x16xf32>
    %255 = arith.mulf %254, %252 : vector<32x16xf32>
    %256 = arith.addf %251, %255 : vector<32x16xf32>
    %cst_172 = arith.constant 0.000000e+00 : f32
    %257 = vector.broadcast %cst_172 : f32 to vector<32x16xf32>
    %258 = arith.maximumf %256, %257 : vector<32x16xf32>
    %c0_173 = arith.constant 0 : index
    %c0_174 = arith.constant 0 : index
    %259 = vector.load %arg14[%c0_173, %c0_174] : memref<16x32xbf16, #tpu.memory_space<vmem>>, vector<16x32xbf16>
    %260 = arith.truncf %258 : vector<32x16xf32> to vector<32x16xbf16>
    %cst_175 = arith.constant dense<0.000000e+00> : vector<32x32xf32>
    %261 = tpu.matmul %260, %259, %cst_175 {dimension_numbers = #tpu.dot_dimension_numbers<[1], [0], [0], [1], [0, 0, 1, 1], [], []>} : vector<32x16xbf16>, vector<16x32xbf16>, vector<32x32xf32> -> vector<32x32xf32>
    %262 = arith.addf %206, %261 : vector<32x32xf32>
    %cst_176 = arith.constant 0.000000e+00 : f32
    %263 = vector.broadcast %cst_176 : f32 to vector<32x32xf32>
    %264 = arith.maximumf %262, %263 : vector<32x32xf32>
    %265 = vector.extract_strided_slice %264 {offsets = [0, 0], sizes = [8, 32], strides = [1, 1]} : vector<32x32xf32> to vector<8x32xf32>
    %c0_177 = arith.constant 0 : index
    %c0_178 = arith.constant 0 : index
    %266 = vector.load %arg15[%c0_177, %c0_178] : memref<8x128xf32, #tpu.memory_space<vmem>>, vector<8x32xf32>
    tpu.vector_store %arg15[%c0_177, %c0_178], %265 {strides = array<i32>} : memref<8x128xf32, #tpu.memory_space<vmem>>, vector<8x32xf32>,
    %267 = vector.extract_strided_slice %264 {offsets = [8, 0], sizes = [8, 32], strides = [1, 1]} : vector<32x32xf32> to vector<8x32xf32>
    %c0_179 = arith.constant 0 : index
    %c32_180 = arith.constant 32 : index
    %268 = vector.load %arg15[%c0_179, %c32_180] : memref<8x128xf32, #tpu.memory_space<vmem>>, vector<8x32xf32>
    tpu.vector_store %arg15[%c0_179, %c32_180], %267 {strides = array<i32>} : memref<8x128xf32, #tpu.memory_space<vmem>>, vector<8x32xf32>,
    %269 = vector.extract_strided_slice %264 {offsets = [16, 0], sizes = [8, 32], strides = [1, 1]} : vector<32x32xf32> to vector<8x32xf32>
    %c0_181 = arith.constant 0 : index
    %c64_182 = arith.constant 64 : index
    %270 = vector.load %arg15[%c0_181, %c64_182] : memref<8x128xf32, #tpu.memory_space<vmem>>, vector<8x32xf32>
    tpu.vector_store %arg15[%c0_181, %c64_182], %269 {strides = array<i32>} : memref<8x128xf32, #tpu.memory_space<vmem>>, vector<8x32xf32>,
    %271 = vector.extract_strided_slice %264 {offsets = [24, 0], sizes = [8, 32], strides = [1, 1]} : vector<32x32xf32> to vector<8x32xf32>
    %c0_183 = arith.constant 0 : index
    %c96_184 = arith.constant 96 : index
    %272 = vector.load %arg15[%c0_183, %c96_184] : memref<8x128xf32, #tpu.memory_space<vmem>>, vector<8x32xf32>
    tpu.vector_store %arg15[%c0_183, %c96_184], %271 {strides = array<i32>} : memref<8x128xf32, #tpu.memory_space<vmem>>, vector<8x32xf32>,
    return
  }
  func.func @transform_0(%arg0: i32) -> (i32, i32) {
    %c0_i32 = arith.constant 0 : i32
    %c0_i32_0 = arith.constant 0 : i32
    %c0_i32_1 = arith.constant 0 : i32
    return %c0_i32, %c0_i32_0 : i32, i32
  }
  func.func @transform_1(%arg0: i32) -> (i32, i32) {
    %c0_i32 = arith.constant 0 : i32
    %c0_i32_0 = arith.constant 0 : i32
    %c0_i32_1 = arith.constant 0 : i32
    return %c0_i32, %c0_i32_0 : i32, i32
  }
  func.func @transform_2(%arg0: i32) -> (i32, i32) {
    %c0_i32 = arith.constant 0 : i32
    %c0_i32_0 = arith.constant 0 : i32
    %c0_i32_1 = arith.constant 0 : i32
    return %c0_i32, %c0_i32_0 : i32, i32
  }
  func.func @transform_3(%arg0: i32) -> (i32, i32) {
    %c0_i32 = arith.constant 0 : i32
    %c0_i32_0 = arith.constant 0 : i32
    %c0_i32_1 = arith.constant 0 : i32
    return %c0_i32, %c0_i32_0 : i32, i32
  }
  func.func @transform_4(%arg0: i32) -> (i32, i32) {
    %c0_i32 = arith.constant 0 : i32
    %c0_i32_0 = arith.constant 0 : i32
    %c0_i32_1 = arith.constant 0 : i32
    return %c0_i32, %c0_i32_0 : i32, i32
  }
  func.func @transform_5(%arg0: i32) -> (i32, i32) {
    %c0_i32 = arith.constant 0 : i32
    %c0_i32_0 = arith.constant 0 : i32
    %c0_i32_1 = arith.constant 0 : i32
    return %c0_i32, %c0_i32_0 : i32, i32
  }
  func.func @transform_6(%arg0: i32) -> (i32, i32) {
    %c0_i32 = arith.constant 0 : i32
    %c0_i32_0 = arith.constant 0 : i32
    %c0_i32_1 = arith.constant 0 : i32
    return %c0_i32, %c0_i32_0 : i32, i32
  }
  func.func @transform_7(%arg0: i32) -> (i32, i32) {
    %c0_i32 = arith.constant 0 : i32
    %c0_i32_0 = arith.constant 0 : i32
    %c0_i32_1 = arith.constant 0 : i32
    return %c0_i32, %c0_i32_0 : i32, i32
  }
  func.func @transform_8(%arg0: i32) -> (i32, i32) {
    %c0_i32 = arith.constant 0 : i32
    %c0_i32_0 = arith.constant 0 : i32
    %c0_i32_1 = arith.constant 0 : i32
    return %c0_i32, %c0_i32_0 : i32, i32
  }
  func.func @transform_9(%arg0: i32) -> (i32, i32) {
    %c0_i32 = arith.constant 0 : i32
    %c0_i32_0 = arith.constant 0 : i32
    %c0_i32_1 = arith.constant 0 : i32
    return %c0_i32, %c0_i32_0 : i32, i32
  }
  func.func @transform_10(%arg0: i32) -> (i32, i32) {
    %c0_i32 = arith.constant 0 : i32
    %c0_i32_0 = arith.constant 0 : i32
    %c0_i32_1 = arith.constant 0 : i32
    return %c0_i32, %c0_i32_0 : i32, i32
  }
  func.func @transform_11(%arg0: i32) -> (i32, i32) {
    %c0_i32 = arith.constant 0 : i32
    %c0_i32_0 = arith.constant 0 : i32
    %c0_i32_1 = arith.constant 0 : i32
    return %c0_i32, %c0_i32_0 : i32, i32
  }
  func.func @transform_12(%arg0: i32) -> (i32, i32) {
    %c0_i32 = arith.constant 0 : i32
    %c0_i32_0 = arith.constant 0 : i32
    %c0_i32_1 = arith.constant 0 : i32
    return %c0_i32, %c0_i32_0 : i32, i32
  }
  func.func @transform_13(%arg0: i32) -> (i32, i32) {
    %c0_i32 = arith.constant 0 : i32
    %c0_i32_0 = arith.constant 0 : i32
    %c0_i32_1 = arith.constant 0 : i32
    return %c0_i32, %c0_i32_0 : i32, i32
  }
  func.func @transform_14(%arg0: i32) -> (i32, i32) {
    %c0_i32 = arith.constant 0 : i32
    %c0_i32_0 = arith.constant 0 : i32
    %c0_i32_1 = arith.constant 0 : i32
    return %c0_i32, %c0_i32_0 : i32, i32
  }
}

</mosaic_0001>

<llo_original>
// kernel: encoder_forward.1
$region0: #{encoder_forward.1}
  #allocation0 [shape = 'u32[]', space=smem, size = 0x4, offset = 0x4, fixed_abs, tag = 'smem constant byte address 0x4 - core index']
  #allocation1 [shape = 'u32[144,128]{1,0:T(1,128)}', space=vmem, size = 0x12000, scoped, tag = 'internal scratch']
  #allocation2 [shape = 'f32[168,512]{1,0:T(8,128)}', space=vmem, size = 0x54000, scoped, tag = 'scratch operand']
  %s0 = inlined_call_operand.vmem [shape: bf16[128,16], index: 0, kind: input, shape index: {}]
  %s1 = inlined_call_operand.vmem [shape: bf16[16,16], index: 1, kind: input, shape index: {}]
  %s2 = inlined_call_operand.vmem [shape: f32[1,16], index: 2, kind: input, shape index: {}]
  %s3 = inlined_call_operand.vmem [shape: bf16[16,512], index: 3, kind: input, shape index: {}]
  %s4 = inlined_call_operand.vmem [shape: f32[128,16], index: 4, kind: input, shape index: {}]
  %s5 = inlined_call_operand.vmem [shape: f32[32,128], index: 5, kind: input, shape index: {}]
  %s6 = inlined_call_operand.vmem [shape: f32[1,32], index: 6, kind: input, shape index: {}]
  %s7 = inlined_call_operand.vmem [shape: bf16[32,288], index: 7, kind: input, shape index: {}]
  %s8 = inlined_call_operand.vmem [shape: f32[32,9], index: 8, kind: input, shape index: {}]
  %s9 = inlined_call_operand.vmem [shape: f32[1,32], index: 9, kind: input, shape index: {}]
  %s10 = inlined_call_operand.vmem [shape: bf16[32,144], index: 10, kind: input, shape index: {}]
  %s11 = inlined_call_operand.vmem [shape: bf16[16,32], index: 11, kind: input, shape index: {}]
  %s12 = inlined_call_operand.vmem [shape: bf16[32,144], index: 12, kind: input, shape index: {}]
  %s13 = inlined_call_operand.vmem [shape: bf16[16,32], index: 13, kind: input, shape index: {}]
  %s14 = inlined_call_operand.vmem [shape: f32[8,128], index: 14, kind: output, shape index: {}]
  %s15 = sld [smem:[#allocation0]]
  $region66: #{encoder_forward.1} parent=0
    _
  %s17 = ssub.s32 1, %s15
  %s18 = scalar_select 0, %s17, %s15
  // Predicated region
  $region2: #{encoder_forward.1} parent=0 // pred_check
    _
  $region3: #{encoder_forward.1} parent=0 // pred_check_branch
    %20 = sbr.rel (0) target = $region5
  $region4: #{encoder_forward.1} parent=0 // pred_region
    _
  $region5: #{encoder_forward.1} parent=0 // pred_fallthru
    _
  // Predicated region
  $region6: #{encoder_forward.1} parent=0 // pred_check
    _
  $region7: #{encoder_forward.1} parent=0 // pred_check_branch
    %22 = sbr.rel (0) target = $region9
  $region8: #{encoder_forward.1} parent=0 // pred_region
    _
  $region9: #{encoder_forward.1} parent=0 // pred_fallthru
    _
  // Predicated region
  $region10: #{encoder_forward.1} parent=0 // pred_check
    _
  $region11: #{encoder_forward.1} parent=0 // pred_check_branch
    %24 = sbr.rel (0) target = $region13
  $region12: #{encoder_forward.1} parent=0 // pred_region
    _
  $region13: #{encoder_forward.1} parent=0 // pred_fallthru
    _
  // Predicated region
  $region14: #{encoder_forward.1} parent=0 // pred_check
    _
  $region15: #{encoder_forward.1} parent=0 // pred_check_branch
    %26 = sbr.rel (0) target = $region17
  $region16: #{encoder_forward.1} parent=0 // pred_region
    _
  $region17: #{encoder_forward.1} parent=0 // pred_fallthru
    _
  // Predicated region
  $region18: #{encoder_forward.1} parent=0 // pred_check
    _
  $region19: #{encoder_forward.1} parent=0 // pred_check_branch
    %28 = sbr.rel (0) target = $region21
  $region20: #{encoder_forward.1} parent=0 // pred_region
    _
  $region21: #{encoder_forward.1} parent=0 // pred_fallthru
    _
  // Predicated region
  $region22: #{encoder_forward.1} parent=0 // pred_check
    _
  $region23: #{encoder_forward.1} parent=0 // pred_check_branch
    %30 = sbr.rel (0) target = $region25
  $region24: #{encoder_forward.1} parent=0 // pred_region
    _
  $region25: #{encoder_forward.1} parent=0 // pred_fallthru
    _
  // Predicated region
  $region26: #{encoder_forward.1} parent=0 // pred_check
    _
  $region27: #{encoder_forward.1} parent=0 // pred_check_branch
    %32 = sbr.rel (0) target = $region29
  $region28: #{encoder_forward.1} parent=0 // pred_region
    _
  $region29: #{encoder_forward.1} parent=0 // pred_fallthru
    _
  // Predicated region
  $region30: #{encoder_forward.1} parent=0 // pred_check
    _
  $region31: #{encoder_forward.1} parent=0 // pred_check_branch
    %34 = sbr.rel (0) target = $region33
  $region32: #{encoder_forward.1} parent=0 // pred_region
    _
  $region33: #{encoder_forward.1} parent=0 // pred_fallthru
    _
  // Predicated region
  $region34: #{encoder_forward.1} parent=0 // pred_check
    _
  $region35: #{encoder_forward.1} parent=0 // pred_check_branch
    %36 = sbr.rel (0) target = $region37
  $region36: #{encoder_forward.1} parent=0 // pred_region
    _
  $region37: #{encoder_forward.1} parent=0 // pred_fallthru
    _
  // Predicated region
  $region38: #{encoder_forward.1} parent=0 // pred_check
    _
  $region39: #{encoder_forward.1} parent=0 // pred_check_branch
    %38 = sbr.rel (0) target = $region41
  $region40: #{encoder_forward.1} parent=0 // pred_region
    _
  $region41: #{encoder_forward.1} parent=0 // pred_fallthru
    _
  // Predicated region
  $region42: #{encoder_forward.1} parent=0 // pred_check
    _
  $region43: #{encoder_forward.1} parent=0 // pred_check_branch
    %40 = sbr.rel (0) target = $region45
  $region44: #{encoder_forward.1} parent=0 // pred_region
    _
  $region45: #{encoder_forward.1} parent=0 // pred_fallthru
    _
  // Predicated region
  $region46: #{encoder_forward.1} parent=0 // pred_check
    _
  $region47: #{encoder_forward.1} parent=0 // pred_check_branch
    %42 = sbr.rel (0) target = $region49
  $region48: #{encoder_forward.1} parent=0 // pred_region
    _
  $region49: #{encoder_forward.1} parent=0 // pred_fallthru
    _
  // Predicated region
  $region50: #{encoder_forward.1} parent=0 // pred_check
    _
  $region51: #{encoder_forward.1} parent=0 // pred_check_branch
    %44 = sbr.rel (0) target = $region53
  $region52: #{encoder_forward.1} parent=0 // pred_region
    _
  $region53: #{encoder_forward.1} parent=0 // pred_fallthru
    _
  // Predicated region
  $region54: #{encoder_forward.1} parent=0 // pred_check
    _
  $region55: #{encoder_forward.1} parent=0 // pred_check_branch
    %46 = sbr.rel (0) target = $region57
  $region56: #{encoder_forward.1} parent=0 // pred_region
    _
  $region57: #{encoder_forward.1} parent=0 // pred_fallthru
    _
  %48 = vst [vmem:[#allocation2] sm:$0xff] 0.0
  %49 = vst [vmem:[#allocation2 + $0x8] sm:$0xff] 0.0
  %50 = vst [vmem:[#allocation2 + $0x10] sm:$0xff] 0.0
  %51 = vst [vmem:[#allocation2 + $0x18] sm:$0xff] 0.0
  %52 = vst [vmem:[#allocation2 + $0x20] sm:$0xff] 0.0
  %53 = vst [vmem:[#allocation2 + $0x28] sm:$0xff] 0.0
  %54 = vst [vmem:[#allocation2 + $0x30] sm:$0xff] 0.0
  %55 = vst [vmem:[#allocation2 + $0x38] sm:$0xff] 0.0
  %56 = vst [vmem:[#allocation2 + $0x40] sm:$0xff] 0.0
  %57 = vst [vmem:[#allocation2 + $0x48] sm:$0xff] 0.0
  %58 = vst [vmem:[#allocation2 + $0x50] sm:$0xff] 0.0
  %59 = vst [vmem:[#allocation2 + $0x58] sm:$0xff] 0.0
  %60 = vst [vmem:[#allocation2 + $0x60] sm:$0xff] 0.0
  %61 = vst [vmem:[#allocation2 + $0x68] sm:$0xff] 0.0
  %62 = vst [vmem:[#allocation2 + $0x70] sm:$0xff] 0.0
  %63 = vst [vmem:[#allocation2 + $0x78] sm:$0xff] 0.0
  %64 = vst [vmem:[#allocation2 + $0x80] sm:$0xff] 0.0
  %65 = vst [vmem:[#allocation2 + $0x88] sm:$0xff] 0.0
  %66 = vst [vmem:[#allocation2 + $0x90] sm:$0xff] 0.0
  %67 = vst [vmem:[#allocation2 + $0x98] sm:$0xff] 0.0
  %68 = vst [vmem:[#allocation2 + $0xa0] sm:$0xff] 0.0
  %69 = vst [vmem:[#allocation2 + $0xa8] sm:$0xff] 0.0
  %70 = vst [vmem:[#allocation2 + $0xb0] sm:$0xff] 0.0
  %71 = vst [vmem:[#allocation2 + $0xb8] sm:$0xff] 0.0
  %72 = vst [vmem:[#allocation2 + $0xc0] sm:$0xff] 0.0
  %73 = vst [vmem:[#allocation2 + $0xc8] sm:$0xff] 0.0
  %74 = vst [vmem:[#allocation2 + $0xd0] sm:$0xff] 0.0
  %75 = vst [vmem:[#allocation2 + $0xd8] sm:$0xff] 0.0
  %76 = vst [vmem:[#allocation2 + $0xe0] sm:$0xff] 0.0
  %77 = vst [vmem:[#allocation2 + $0xe8] sm:$0xff] 0.0
  %78 = vst [vmem:[#allocation2 + $0xf0] sm:$0xff] 0.0
  %79 = vst [vmem:[#allocation2 + $0xf8] sm:$0xff] 0.0
  %80 = vst [vmem:[#allocation2 + $0x100] sm:$0xff] 0.0
  %81 = vst [vmem:[#allocation2 + $0x108] sm:$0xff] 0.0
  %82 = vst [vmem:[#allocation2 + $0x110] sm:$0xff] 0.0
  %83 = vst [vmem:[#allocation2 + $0x118] sm:$0xff] 0.0
  %84 = vst [vmem:[#allocation2 + $0x120] sm:$0xff] 0.0
  %85 = vst [vmem:[#allocation2 + $0x128] sm:$0xff] 0.0
  %86 = vst [vmem:[#allocation2 + $0x130] sm:$0xff] 0.0
  %87 = vst [vmem:[#allocation2 + $0x138] sm:$0xff] 0.0
  %88 = vst [vmem:[#allocation2 + $0x140] sm:$0xff] 0.0
  %89 = vst [vmem:[#allocation2 + $0x148] sm:$0xff] 0.0
  %90 = vst [vmem:[#allocation2 + $0x150] sm:$0xff] 0.0
  %91 = vst [vmem:[#allocation2 + $0x158] sm:$0xff] 0.0
  %92 = vst [vmem:[#allocation2 + $0x160] sm:$0xff] 0.0
  %93 = vst [vmem:[#allocation2 + $0x168] sm:$0xff] 0.0
  %94 = vst [vmem:[#allocation2 + $0x170] sm:$0xff] 0.0
  %95 = vst [vmem:[#allocation2 + $0x178] sm:$0xff] 0.0
  %96 = vst [vmem:[#allocation2 + $0x180] sm:$0xff] 0.0
  %97 = vst [vmem:[#allocation2 + $0x188] sm:$0xff] 0.0
  %98 = vst [vmem:[#allocation2 + $0x190] sm:$0xff] 0.0
  %99 = vst [vmem:[#allocation2 + $0x198] sm:$0xff] 0.0
  %100 = vst [vmem:[#allocation2 + $0x1a0] sm:$0xff] 0.0
  %101 = vst [vmem:[#allocation2 + $0x1a8] sm:$0xff] 0.0
  %102 = vst [vmem:[#allocation2 + $0x1b0] sm:$0xff] 0.0
  %103 = vst [vmem:[#allocation2 + $0x1b8] sm:$0xff] 0.0
  %104 = vst [vmem:[#allocation2 + $0x1c0] sm:$0xff] 0.0
  %105 = vst [vmem:[#allocation2 + $0x1c8] sm:$0xff] 0.0
  %106 = vst [vmem:[#allocation2 + $0x1d0] sm:$0xff] 0.0
  %107 = vst [vmem:[#allocation2 + $0x1d8] sm:$0xff] 0.0
  %108 = vst [vmem:[#allocation2 + $0x1e0] sm:$0xff] 0.0
  %109 = vst [vmem:[#allocation2 + $0x1e8] sm:$0xff] 0.0
  %110 = vst [vmem:[#allocation2 + $0x1f0] sm:$0xff] 0.0
  %111 = vst [vmem:[#allocation2 + $0x1f8] sm:$0xff] 0.0
  %112 = vst [vmem:[#allocation2 + $0x200] sm:$0xff] 0.0
  %113 = vst [vmem:[#allocation2 + $0x208] sm:$0xff] 0.0
  %114 = vst [vmem:[#allocation2 + $0x210] sm:$0xff] 0.0
  %115 = vst [vmem:[#allocation2 + $0x218] sm:$0xff] 0.0
  %116 = vst [vmem:[#allocation2 + $0x220] sm:$0xff] 0.0
  %117 = vst [vmem:[#allocation2 + $0x228] sm:$0xff] 0.0
  %118 = vst [vmem:[#allocation2 + $0x230] sm:$0xff] 0.0
  %119 = vst [vmem:[#allocation2 + $0x238] sm:$0xff] 0.0
  %120 = vst [vmem:[#allocation2 + $0x240] sm:$0xff] 0.0
  %121 = vst [vmem:[#allocation2 + $0x248] sm:$0xff] 0.0
  %122 = vst [vmem:[#allocation2 + $0x250] sm:$0xff] 0.0
  %123 = vst [vmem:[#allocation2 + $0x258] sm:$0xff] 0.0
  %124 = vst [vmem:[#allocation2 + $0x260] sm:$0xff] 0.0
  %125 = vst [vmem:[#allocation2 + $0x268] sm:$0xff] 0.0
  %126 = vst [vmem:[#allocation2 + $0x270] sm:$0xff] 0.0
  %127 = vst [vmem:[#allocation2 + $0x278] sm:$0xff] 0.0
  %128 = vst [vmem:[#allocation2 + $0x280] sm:$0xff] 0.0
  %129 = vst [vmem:[#allocation2 + $0x288] sm:$0xff] 0.0
  %130 = vst [vmem:[#allocation2 + $0x290] sm:$0xff] 0.0
  %131 = vst [vmem:[#allocation2 + $0x298] sm:$0xff] 0.0
  %v132 = vld [vmem:[%s0] sm:$0xf]
  %v133 = vld [vmem:[%s0 + $0x4] sm:$0xf]
  %v134 = vld [vmem:[%s0 + $0x8] sm:$0xf]
  %v135 = vld [vmem:[%s0 + $0xc] sm:$0xf]
  %v136 = vld [vmem:[%s0 + $0x10] sm:$0xf]
  %v137 = vld [vmem:[%s0 + $0x14] sm:$0xf]
  %v138 = vld [vmem:[%s0 + $0x18] sm:$0xf]
  %v139 = vld [vmem:[%s0 + $0x1c] sm:$0xf]
  %v140 = vld [vmem:[%s0 + $0x20] sm:$0xf]
  %v141 = vld [vmem:[%s0 + $0x24] sm:$0xf]
  %v142 = vld [vmem:[%s0 + $0x28] sm:$0xf]
  %v143 = vld [vmem:[%s0 + $0x2c] sm:$0xf]
  %v144 = vld [vmem:[%s0 + $0x30] sm:$0xf]
  %v145 = vld [vmem:[%s0 + $0x34] sm:$0xf]
  %v146 = vld [vmem:[%s0 + $0x38] sm:$0xf]
  %v147 = vld [vmem:[%s0 + $0x3c] sm:$0xf]
  %v148 = vld [vmem:[%s1] sm:$0xf]
  %v149 = vld [vmem:[%s1 + $0x4] sm:$0xf]
  %v150 = vld [vmem:[%s2] sm:$0x1]
  %v152 = vlaneseq
  %v153 = vshrl.u32 %v152, 7
  %v154 = vsub.s32 0, %v153
  %v155 = vrot.slane %v150, %v154
  %v173 = vunpack.c.l.b16 %v132
  %v174 = vunpack.c.l.b16 %v133
  %v175 = vunpack.c.l.b16 %v134
  %v176 = vunpack.c.l.b16 %v135
  %v177 = vunpack.c.l.b16 %v136
  %v178 = vunpack.c.l.b16 %v137
  %v179 = vunpack.c.l.b16 %v138
  %v180 = vunpack.c.l.b16 %v139
  %v181 = vunpack.c.l.b16 %v140
  %v182 = vunpack.c.l.b16 %v141
  %v183 = vunpack.c.l.b16 %v142
  %v184 = vunpack.c.l.b16 %v143
  %v185 = vunpack.c.l.b16 %v144
  %v186 = vunpack.c.l.b16 %v145
  %v187 = vunpack.c.l.b16 %v146
  %v188 = vunpack.c.l.b16 %v147
  %v189 = vpack.c.b16 %v174, %v173
  %v190 = vpack.c.b16 %v176, %v175
  %v191 = vpack.c.b16 %v178, %v177
  %v192 = vpack.c.b16 %v180, %v179
  %v193 = vpack.c.b16 %v182, %v181
  %v194 = vpack.c.b16 %v184, %v183
  %v195 = vpack.c.b16 %v186, %v185
  %v196 = vpack.c.b16 %v188, %v187
  %v199 = vunpack.c.l.b16 %v148
  %v200 = vunpack.c.l.b16 %v149
  %v201 = vpack.c.b16 %v200, %v199
  %vm203 = vcmask 130048
  %v205 = vsel %vm203, %v189, 0
  %v208 = vsel %vm203, %v190, 0
  %v211 = vsel %vm203, %v191, 0
  %v214 = vsel %vm203, %v192, 0
  %v217 = vsel %vm203, %v193, 0
  %v220 = vsel %vm203, %v194, 0
  %v223 = vsel %vm203, %v195, 0
  %v226 = vsel %vm203, %v196, 0
  %228 = vmatprep.subr.bf16.mxu0 0
  %229 = vmatpush1.bf16.msra.mxu0 %v201
  %230 = vmatprep.subr.bf16.mxu0 0
  %231 = vmatpush1.bf16.msra.mxu0 0
  %232 = vmatprep.subr.bf16.mxu0 0
  %233 = vmatpush1.bf16.msra.mxu0 0
  %234 = vmatprep.subr.bf16.mxu0 0
  %235 = vmatpush1.bf16.msra.mxu0 0
  %236 = vmatprep.subr.bf16.mxu0 0
  %237 = vmatpush1.bf16.msra.mxu0 0
  %238 = vmatprep.subr.bf16.mxu0 0
  %239 = vmatpush1.bf16.msra.mxu0 0
  %240 = vmatprep.subr.bf16.mxu0 0
  %241 = vmatpush1.bf16.msra.mxu0 0
  %242 = vmatprep.subr.bf16.mxu0 0
  %243 = vmatpush1.bf16.msra.mxu0 0
  %244 = vmatprep.subr.bf16.mxu0 0
  %245 = vmatpush1.bf16.msra.mxu0 0
  %246 = vmatprep.subr.bf16.mxu0 0
  %247 = vmatpush1.bf16.msra.mxu0 0
  %248 = vmatprep.subr.bf16.mxu0 0
  %249 = vmatpush1.bf16.msra.mxu0 0
  %250 = vmatprep.subr.bf16.mxu0 0
  %251 = vmatpush1.bf16.msra.mxu0 0
  %252 = vmatprep.subr.bf16.mxu0 0
  %253 = vmatpush1.bf16.msra.mxu0 0
  %254 = vmatprep.subr.bf16.mxu0 0
  %255 = vmatpush1.bf16.msra.mxu0 0
  %256 = vmatprep.subr.bf16.mxu0 0
  %257 = vmatpush1.bf16.msra.mxu0 0
  %258 = vmatprep.subr.bf16.mxu0 0
  %259 = vmatpush1.bf16.msra.mxu0 0
  %260 = vmatprep.mubr.bf16.mxu0 0
  %261 = vmatmul.mubr.bf16.gmra.mrb[0].mxu0 %v205
  %v262 = vpop.f32.mrb[0].mxu0
  %v263 = vadd.f32 %v155, %v262
  %v264 = vpop.f32.mrb[0].mxu0
  %v265 = vpop.f32.mrb[0].mxu0
  %v266 = vadd.f32 %v155, %v265
  %v267 = vpop.f32.mrb[0].mxu0
  %268 = vmatprep.mubr.bf16.mxu0 0
  %269 = vmatmul.mubr.bf16.gmra.mrb[0].mxu0 %v208
  %v270 = vpop.f32.mrb[0].mxu0
  %v271 = vadd.f32 %v155, %v270
  %v272 = vpop.f32.mrb[0].mxu0
  %v273 = vpop.f32.mrb[0].mxu0
  %v274 = vadd.f32 %v155, %v273
  %v275 = vpop.f32.mrb[0].mxu0
  %276 = vmatprep.mubr.bf16.mxu0 0
  %277 = vmatmul.mubr.bf16.gmra.mrb[0].mxu0 %v211
  %v278 = vpop.f32.mrb[0].mxu0
  %v279 = vadd.f32 %v155, %v278
  %v280 = vpop.f32.mrb[0].mxu0
  %v281 = vpop.f32.mrb[0].mxu0
  %v282 = vadd.f32 %v155, %v281
  %v283 = vpop.f32.mrb[0].mxu0
  %284 = vmatprep.mubr.bf16.mxu0 0
  %285 = vmatmul.mubr.bf16.gmra.mrb[0].mxu0 %v214
  %v286 = vpop.f32.mrb[0].mxu0
  %v287 = vadd.f32 %v155, %v286
  %v288 = vpop.f32.mrb[0].mxu0
  %v289 = vpop.f32.mrb[0].mxu0
  %v290 = vadd.f32 %v155, %v289
  %v291 = vpop.f32.mrb[0].mxu0
  %292 = vmatprep.mubr.bf16.mxu0 0
  %293 = vmatmul.mubr.bf16.gmra.mrb[0].mxu0 %v217
  %v294 = vpop.f32.mrb[0].mxu0
  %v295 = vadd.f32 %v155, %v294
  %v296 = vpop.f32.mrb[0].mxu0
  %v297 = vpop.f32.mrb[0].mxu0
  %v298 = vadd.f32 %v155, %v297
  %v299 = vpop.f32.mrb[0].mxu0
  %300 = vmatprep.mubr.bf16.mxu0 0
  %301 = vmatmul.mubr.bf16.gmra.mrb[0].mxu0 %v220
  %v302 = vpop.f32.mrb[0].mxu0
  %v303 = vadd.f32 %v155, %v302
  %v304 = vpop.f32.mrb[0].mxu0
  %v305 = vpop.f32.mrb[0].mxu0
  %v306 = vadd.f32 %v155, %v305
  %v307 = vpop.f32.mrb[0].mxu0
  %308 = vmatprep.mubr.bf16.mxu0 0
  %309 = vmatmul.mubr.bf16.gmra.mrb[0].mxu0 %v223
  %v310 = vpop.f32.mrb[0].mxu0
  %v311 = vadd.f32 %v155, %v310
  %v312 = vpop.f32.mrb[0].mxu0
  %v313 = vpop.f32.mrb[0].mxu0
  %v314 = vadd.f32 %v155, %v313
  %v315 = vpop.f32.mrb[0].mxu0
  %316 = vmatprep.mubr.bf16.mxu0 0
  %317 = vmatmul.mubr.bf16.gmra.mrb[0].mxu0 %v226
  %v318 = vpop.f32.mrb[0].mxu0
  %v319 = vadd.f32 %v155, %v318
  %v320 = vpop.f32.mrb[0].mxu0
  %v321 = vpop.f32.mrb[0].mxu0
  %v322 = vadd.f32 %v155, %v321
  %v323 = vpop.f32.mrb[0].mxu0
  %324 = vdwg.mxu0
  %v325 = vmax.f32 %v263, 0.0
  %v326 = vmax.f32 %v266, 0.0
  %v327 = vmax.f32 %v271, 0.0
  %v328 = vmax.f32 %v274, 0.0
  %v329 = vmax.f32 %v279, 0.0
  %v330 = vmax.f32 %v282, 0.0
  %v331 = vmax.f32 %v287, 0.0
  %v332 = vmax.f32 %v290, 0.0
  %v333 = vmax.f32 %v295, 0.0
  %v334 = vmax.f32 %v298, 0.0
  %v335 = vmax.f32 %v303, 0.0
  %v336 = vmax.f32 %v306, 0.0
  %v337 = vmax.f32 %v311, 0.0
  %v338 = vmax.f32 %v314, 0.0
  %v339 = vmax.f32 %v319, 0.0
  %v340 = vmax.f32 %v322, 0.0
  %v341 = vld [vmem:[%s3] sm:$0xff]
  %v342 = vld [vmem:[%s3 + $0x8] sm:$0xff]
  %v343 = vld [vmem:[%s3 + $0x10] sm:$0xff]
  %v344 = vld [vmem:[%s3 + $0x18] sm:$0xff]
  %v345 = vpack.c.bf16 %v326, %v325
  %v346 = vpack.c.bf16 %v328, %v327
  %v347 = vpack.c.bf16 %v330, %v329
  %v348 = vpack.c.bf16 %v332, %v331
  %v349 = vpack.c.bf16 %v334, %v333
  %v350 = vpack.c.bf16 %v336, %v335
  %v351 = vpack.c.bf16 %v338, %v337
  %v352 = vpack.c.bf16 %v340, %v339
  %v357 = vunpack.c.l.b16 %v341
  %v358 = vunpack.c.h.b16 %v341
  %v359 = vunpack.c.l.b16 %v342
  %v360 = vunpack.c.h.b16 %v342
  %v361 = vunpack.c.l.b16 %v343
  %v362 = vunpack.c.h.b16 %v343
  %v363 = vunpack.c.l.b16 %v344
  %v364 = vunpack.c.h.b16 %v344
  %v365 = vpack.c.b16 %v361, %v357
  %v366 = vpack.c.b16 %v362, %v358
  %v367 = vpack.c.b16 %v363, %v359
  %v368 = vpack.c.b16 %v364, %v360
  %v374 = vsel %vm203, %v345, 0
  %v377 = vsel %vm203, %v346, 0
  %v380 = vsel %vm203, %v347, 0
  %v383 = vsel %vm203, %v348, 0
  %v386 = vsel %vm203, %v349, 0
  %v389 = vsel %vm203, %v350, 0
  %v392 = vsel %vm203, %v351, 0
  %v395 = vsel %vm203, %v352, 0
  %397 = vmatprep.subr.bf16.mxu0 %v366
  %398 = vmatpush1.bf16.msra.mxu0 %v365
  %399 = vmatprep.subr.bf16.mxu0 0
  %400 = vmatpush1.bf16.msra.mxu0 0
  %401 = vmatprep.subr.bf16.mxu0 0
  %402 = vmatpush1.bf16.msra.mxu0 0
  %403 = vmatprep.subr.bf16.mxu0 0
  %404 = vmatpush1.bf16.msra.mxu0 0
  %405 = vmatprep.subr.bf16.mxu0 0
  %406 = vmatpush1.bf16.msra.mxu0 0
  %407 = vmatprep.subr.bf16.mxu0 0
  %408 = vmatpush1.bf16.msra.mxu0 0
  %409 = vmatprep.subr.bf16.mxu0 0
  %410 = vmatpush1.bf16.msra.mxu0 0
  %411 = vmatprep.subr.bf16.mxu0 0
  %412 = vmatpush1.bf16.msra.mxu0 0
  %413 = vmatprep.subr.bf16.mxu0 0
  %414 = vmatpush1.bf16.msra.mxu0 0
  %415 = vmatprep.subr.bf16.mxu0 0
  %416 = vmatpush1.bf16.msra.mxu0 0
  %417 = vmatprep.subr.bf16.mxu0 0
  %418 = vmatpush1.bf16.msra.mxu0 0
  %419 = vmatprep.subr.bf16.mxu0 0
  %420 = vmatpush1.bf16.msra.mxu0 0
  %421 = vmatprep.subr.bf16.mxu0 0
  %422 = vmatpush1.bf16.msra.mxu0 0
  %423 = vmatprep.subr.bf16.mxu0 0
  %424 = vmatpush1.bf16.msra.mxu0 0
  %425 = vmatprep.subr.bf16.mxu0 0
  %426 = vmatpush1.bf16.msra.mxu0 0
  %427 = vmatprep.subr.bf16.mxu0 0
  %428 = vmatpush1.bf16.msra.mxu0 0
  %429 = vmatprep.mubr.bf16.mxu0 0
  %430 = vmatmul.mubr.bf16.gmra.mrb[0].mxu0 %v374
  %v431 = vpop.f32.mrb[0].mxu0
  %v432 = vadd.f32 0.0, %v431
  %v433 = vpop.f32.mrb[0].mxu0
  %v434 = vadd.f32 0.0, %v433
  %v435 = vpop.f32.mrb[0].mxu0
  %v436 = vadd.f32 0.0, %v435
  %v437 = vpop.f32.mrb[0].mxu0
  %v438 = vadd.f32 0.0, %v437
  %439 = vmatprep.mubr.bf16.mxu0 0
  %440 = vmatmul.mubr.bf16.gmra.mrb[0].mxu0 %v377
  %v441 = vpop.f32.mrb[0].mxu0
  %v442 = vadd.f32 0.0, %v441
  %v443 = vpop.f32.mrb[0].mxu0
  %v444 = vadd.f32 0.0, %v443
  %v445 = vpop.f32.mrb[0].mxu0
  %v446 = vadd.f32 0.0, %v445
  %v447 = vpop.f32.mrb[0].mxu0
  %v448 = vadd.f32 0.0, %v447
  %449 = vmatprep.mubr.bf16.mxu0 0
  %450 = vmatmul.mubr.bf16.gmra.mrb[0].mxu0 %v380
  %v451 = vpop.f32.mrb[0].mxu0
  %v452 = vadd.f32 0.0, %v451
  %v453 = vpop.f32.mrb[0].mxu0
  %v454 = vadd.f32 0.0, %v453
  %v455 = vpop.f32.mrb[0].mxu0
  %v456 = vadd.f32 0.0, %v455
  %v457 = vpop.f32.mrb[0].mxu0
  %v458 = vadd.f32 0.0, %v457
  %459 = vmatprep.mubr.bf16.mxu0 0
  %460 = vmatmul.mubr.bf16.gmra.mrb[0].mxu0 %v383
  %v461 = vpop.f32.mrb[0].mxu0
  %v462 = vadd.f32 0.0, %v461
  %v463 = vpop.f32.mrb[0].mxu0
  %v464 = vadd.f32 0.0, %v463
  %v465 = vpop.f32.mrb[0].mxu0
  %v466 = vadd.f32 0.0, %v465
  %v467 = vpop.f32.mrb[0].mxu0
  %v468 = vadd.f32 0.0, %v467
  %469 = vmatprep.mubr.bf16.mxu0 0
  %470 = vmatmul.mubr.bf16.gmra.mrb[0].mxu0 %v386
  %v471 = vpop.f32.mrb[0].mxu0
  %v472 = vadd.f32 0.0, %v471
  %v473 = vpop.f32.mrb[0].mxu0
  %v474 = vadd.f32 0.0, %v473
  %v475 = vpop.f32.mrb[0].mxu0
  %v476 = vadd.f32 0.0, %v475
  %v477 = vpop.f32.mrb[0].mxu0
  %v478 = vadd.f32 0.0, %v477
  %479 = vmatprep.mubr.bf16.mxu0 0
  %480 = vmatmul.mubr.bf16.gmra.mrb[0].mxu0 %v389
  %v481 = vpop.f32.mrb[0].mxu0
  %v482 = vadd.f32 0.0, %v481
  %v483 = vpop.f32.mrb[0].mxu0
  %v484 = vadd.f32 0.0, %v483
  %v485 = vpop.f32.mrb[0].mxu0
  %v486 = vadd.f32 0.0, %v485
  %v487 = vpop.f32.mrb[0].mxu0
  %v488 = vadd.f32 0.0, %v487
  %489 = vmatprep.mubr.bf16.mxu0 0
  %490 = vmatmul.mubr.bf16.gmra.mrb[0].mxu0 %v392
  %v491 = vpop.f32.mrb[0].mxu0
  %v492 = vadd.f32 0.0, %v491
  %v493 = vpop.f32.mrb[0].mxu0
  %v494 = vadd.f32 0.0, %v493
  %v495 = vpop.f32.mrb[0].mxu0
  %v496 = vadd.f32 0.0, %v495
  %v497 = vpop.f32.mrb[0].mxu0
  %v498 = vadd.f32 0.0, %v497
  %499 = vmatprep.mubr.bf16.mxu0 0
  %500 = vmatmul.mubr.bf16.gmra.mrb[0].mxu0 %v395
  %v501 = vpop.f32.mrb[0].mxu0
  %v502 = vadd.f32 0.0, %v501
  %v503 = vpop.f32.mrb[0].mxu0
  %v504 = vadd.f32 0.0, %v503
  %v505 = vpop.f32.mrb[0].mxu0
  %v506 = vadd.f32 0.0, %v505
  %v507 = vpop.f32.mrb[0].mxu0
  %v508 = vadd.f32 0.0, %v507
  %509 = vdwg.mxu0
  %510 = vmatprep.subr.bf16.mxu0 %v368
  %511 = vmatpush1.bf16.msra.mxu0 %v367
  %512 = vmatprep.subr.bf16.mxu0 0
  %513 = vmatpush1.bf16.msra.mxu0 0
  %514 = vmatprep.subr.bf16.mxu0 0
  %515 = vmatpush1.bf16.msra.mxu0 0
  %516 = vmatprep.subr.bf16.mxu0 0
  %517 = vmatpush1.bf16.msra.mxu0 0
  %518 = vmatprep.subr.bf16.mxu0 0
  %519 = vmatpush1.bf16.msra.mxu0 0
  %520 = vmatprep.subr.bf16.mxu0 0
  %521 = vmatpush1.bf16.msra.mxu0 0
  %522 = vmatprep.subr.bf16.mxu0 0
  %523 = vmatpush1.bf16.msra.mxu0 0
  %524 = vmatprep.subr.bf16.mxu0 0
  %525 = vmatpush1.bf16.msra.mxu0 0
  %526 = vmatprep.subr.bf16.mxu0 0
  %527 = vmatpush1.bf16.msra.mxu0 0
  %528 = vmatprep.subr.bf16.mxu0 0
  %529 = vmatpush1.bf16.msra.mxu0 0
  %530 = vmatprep.subr.bf16.mxu0 0
  %531 = vmatpush1.bf16.msra.mxu0 0
  %532 = vmatprep.subr.bf16.mxu0 0
  %533 = vmatpush1.bf16.msra.mxu0 0
  %534 = vmatprep.subr.bf16.mxu0 0
  %535 = vmatpush1.bf16.msra.mxu0 0
  %536 = vmatprep.subr.bf16.mxu0 0
  %537 = vmatpush1.bf16.msra.mxu0 0
  %538 = vmatprep.subr.bf16.mxu0 0
  %539 = vmatpush1.bf16.msra.mxu0 0
  %540 = vmatprep.subr.bf16.mxu0 0
  %541 = vmatpush1.bf16.msra.mxu0 0
  %542 = vmatprep.mubr.bf16.mxu0 0
  %543 = vmatmul.mubr.bf16.gmra.mrb[0].mxu0 %v374
  %v544 = vpop.f32.mrb[0].mxu0
  %v545 = vadd.f32 0.0, %v544
  %v546 = vpop.f32.mrb[0].mxu0
  %v547 = vadd.f32 0.0, %v546
  %v548 = vpop.f32.mrb[0].mxu0
  %v549 = vadd.f32 0.0, %v548
  %v550 = vpop.f32.mrb[0].mxu0
  %v551 = vadd.f32 0.0, %v550
  %552 = vmatprep.mubr.bf16.mxu0 0
  %553 = vmatmul.mubr.bf16.gmra.mrb[0].mxu0 %v377
  %v554 = vpop.f32.mrb[0].mxu0
  %v555 = vadd.f32 0.0, %v554
  %v556 = vpop.f32.mrb[0].mxu0
  %v557 = vadd.f32 0.0, %v556
  %v558 = vpop.f32.mrb[0].mxu0
  %v559 = vadd.f32 0.0, %v558
  %v560 = vpop.f32.mrb[0].mxu0
  %v561 = vadd.f32 0.0, %v560
  %562 = vmatprep.mubr.bf16.mxu0 0
  %563 = vmatmul.mubr.bf16.gmra.mrb[0].mxu0 %v380
  %v564 = vpop.f32.mrb[0].mxu0
  %v565 = vadd.f32 0.0, %v564
  %v566 = vpop.f32.mrb[0].mxu0
  %v567 = vadd.f32 0.0, %v566
  %v568 = vpop.f32.mrb[0].mxu0
  %v569 = vadd.f32 0.0, %v568
  %v570 = vpop.f32.mrb[0].mxu0
  %v571 = vadd.f32 0.0, %v570
  %572 = vmatprep.mubr.bf16.mxu0 0
  %573 = vmatmul.mubr.bf16.gmra.mrb[0].mxu0 %v383
  %v574 = vpop.f32.mrb[0].mxu0
  %v575 = vadd.f32 0.0, %v574
  %v576 = vpop.f32.mrb[0].mxu0
  %v577 = vadd.f32 0.0, %v576
  %v578 = vpop.f32.mrb[0].mxu0
  %v579 = vadd.f32 0.0, %v578
  %v580 = vpop.f32.mrb[0].mxu0
  %v581 = vadd.f32 0.0, %v580
  %582 = vmatprep.mubr.bf16.mxu0 0
  %583 = vmatmul.mubr.bf16.gmra.mrb[0].mxu0 %v386
  %v584 = vpop.f32.mrb[0].mxu0
  %v585 = vadd.f32 0.0, %v584
  %v586 = vpop.f32.mrb[0].mxu0
  %v587 = vadd.f32 0.0, %v586
  %v588 = vpop.f32.mrb[0].mxu0
  %v589 = vadd.f32 0.0, %v588
  %v590 = vpop.f32.mrb[0].mxu0
  %v591 = vadd.f32 0.0, %v590
  %592 = vmatprep.mubr.bf16.mxu0 0
  %593 = vmatmul.mubr.bf16.gmra.mrb[0].mxu0 %v389
  %v594 = vpop.f32.mrb[0].mxu0
  %v595 = vadd.f32 0.0, %v594
  %v596 = vpop.f32.mrb[0].mxu0
  %v597 = vadd.f32 0.0, %v596
  %v598 = vpop.f32.mrb[0].mxu0
  %v599 = vadd.f32 0.0, %v598
  %v600 = vpop.f32.mrb[0].mxu0
  %v601 = vadd.f32 0.0, %v600
  %602 = vmatprep.mubr.bf16.mxu0 0
  %603 = vmatmul.mubr.bf16.gmra.mrb[0].mxu0 %v392
  %v604 = vpop.f32.mrb[0].mxu0
  %v605 = vadd.f32 0.0, %v604
  %v606 = vpop.f32.mrb[0].mxu0
  %v607 = vadd.f32 0.0, %v606
  %v608 = vpop.f32.mrb[0].mxu0
  %v609 = vadd.f32 0.0, %v608
  %v610 = vpop.f32.mrb[0].mxu0
  %v611 = vadd.f32 0.0, %v610
  %612 = vmatprep.mubr.bf16.mxu0 0
  %613 = vmatmul.mubr.bf16.gmra.mrb[0].mxu0 %v395
  %v614 = vpop.f32.mrb[0].mxu0
  %v615 = vadd.f32 0.0, %v614
  %v616 = vpop.f32.mrb[0].mxu0
  %v617 = vadd.f32 0.0, %v616
  %v618 = vpop.f32.mrb[0].mxu0
  %v619 = vadd.f32 0.0, %v618
  %v620 = vpop.f32.mrb[0].mxu0
  %v621 = vadd.f32 0.0, %v620
  %622 = vdwg.mxu0
  %623 = vst [vmem:[#allocation2 + $0x40] sm:$0xff] %v432
  %624 = vst [vmem:[#allocation2 + $0x48] sm:$0xff] %v434
  %625 = vst [vmem:[#allocation2 + $0x50] sm:$0xff] %v545
  %626 = vst [vmem:[#allocation2 + $0x58] sm:$0xff] %v547
  %627 = vst [vmem:[#allocation2 + $0x60] sm:$0xff] %v436
  %628 = vst [vmem:[#allocation2 + $0x68] sm:$0xff] %v438
  %629 = vst [vmem:[#allocation2 + $0x70] sm:$0xff] %v549
  %630 = vst [vmem:[#allocation2 + $0x78] sm:$0xff] %v551
  %631 = vst [vmem:[#allocation2 + $0x80] sm:$0xff] %v442
  %632 = vst [vmem:[#allocation2 + $0x88] sm:$0xff] %v444
  %633 = vst [vmem:[#allocation2 + $0x90] sm:$0xff] %v555
  %634 = vst [vmem:[#allocation2 + $0x98] sm:$0xff] %v557
  %635 = vst [vmem:[#allocation2 + $0xa0] sm:$0xff] %v446
  %636 = vst [vmem:[#allocation2 + $0xa8] sm:$0xff] %v448
  %637 = vst [vmem:[#allocation2 + $0xb0] sm:$0xff] %v559
  %638 = vst [vmem:[#allocation2 + $0xb8] sm:$0xff] %v561
  %639 = vst [vmem:[#allocation2 + $0xc0] sm:$0xff] %v452
  %640 = vst [vmem:[#allocation2 + $0xc8] sm:$0xff] %v454
  %641 = vst [vmem:[#allocation2 + $0xd0] sm:$0xff] %v565
  %642 = vst [vmem:[#allocation2 + $0xd8] sm:$0xff] %v567
  %643 = vst [vmem:[#allocation2 + $0xe0] sm:$0xff] %v456
  %644 = vst [vmem:[#allocation2 + $0xe8] sm:$0xff] %v458
  %645 = vst [vmem:[#allocation2 + $0xf0] sm:$0xff] %v569
  %646 = vst [vmem:[#allocation2 + $0xf8] sm:$0xff] %v571
  %647 = vst [vmem:[#allocation2 + $0x100] sm:$0xff] %v462
  %648 = vst [vmem:[#allocation2 + $0x108] sm:$0xff] %v464
  %649 = vst [vmem:[#allocation2 + $0x110] sm:$0xff] %v575
  %650 = vst [vmem:[#allocation2 + $0x118] sm:$0xff] %v577
  %651 = vst [vmem:[#allocation2 + $0x120] sm:$0xff] %v466
  %652 = vst [vmem:[#allocation2 + $0x128] sm:$0xff] %v468
  %653 = vst [vmem:[#allocation2 + $0x130] sm:$0xff] %v579
  %654 = vst [vmem:[#allocation2 + $0x138] sm:$0xff] %v581
  %655 = vst [vmem:[#allocation2 + $0x140] sm:$0xff] %v472
  %656 = vst [vmem:[#allocation2 + $0x148] sm:$0xff] %v474
  %657 = vst [vmem:[#allocation2 + $0x150] sm:$0xff] %v585
  %658 = vst [vmem:[#allocation2 + $0x158] sm:$0xff] %v587
  %659 = vst [vmem:[#allocation2 + $0x160] sm:$0xff] %v476
  %660 = vst [vmem:[#allocation2 + $0x168] sm:$0xff] %v478
  %661 = vst [vmem:[#allocation2 + $0x170] sm:$0xff] %v589
  %662 = vst [vmem:[#allocation2 + $0x178] sm:$0xff] %v591
  %663 = vst [vmem:[#allocation2 + $0x180] sm:$0xff] %v482
  %664 = vst [vmem:[#allocation2 + $0x188] sm:$0xff] %v484
  %665 = vst [vmem:[#allocation2 + $0x190] sm:$0xff] %v595
  %666 = vst [vmem:[#allocation2 + $0x198] sm:$0xff] %v597
  %667 = vst [vmem:[#allocation2 + $0x1a0] sm:$0xff] %v486
  %668 = vst [vmem:[#allocation2 + $0x1a8] sm:$0xff] %v488
  %669 = vst [vmem:[#allocation2 + $0x1b0] sm:$0xff] %v599
  %670 = vst [vmem:[#allocation2 + $0x1b8] sm:$0xff] %v601
  %671 = vst [vmem:[#allocation2 + $0x1c0] sm:$0xff] %v492
  %672 = vst [vmem:[#allocation2 + $0x1c8] sm:$0xff] %v494
  %673 = vst [vmem:[#allocation2 + $0x1d0] sm:$0xff] %v605
  %674 = vst [vmem:[#allocation2 + $0x1d8] sm:$0xff] %v607
  %675 = vst [vmem:[#allocation2 + $0x1e0] sm:$0xff] %v496
  %676 = vst [vmem:[#allocation2 + $0x1e8] sm:$0xff] %v498
  %677 = vst [vmem:[#allocation2 + $0x1f0] sm:$0xff] %v609
  %678 = vst [vmem:[#allocation2 + $0x1f8] sm:$0xff] %v611
  %679 = vst [vmem:[#allocation2 + $0x200] sm:$0xff] %v502
  %680 = vst [vmem:[#allocation2 + $0x208] sm:$0xff] %v504
  %681 = vst [vmem:[#allocation2 + $0x210] sm:$0xff] %v615
  %682 = vst [vmem:[#allocation2 + $0x218] sm:$0xff] %v617
  %683 = vst [vmem:[#allocation2 + $0x220] sm:$0xff] %v506
  %684 = vst [vmem:[#allocation2 + $0x228] sm:$0xff] %v508
  %685 = vst [vmem:[#allocation2 + $0x230] sm:$0xff] %v619
  %686 = vst [vmem:[#allocation2 + $0x238] sm:$0xff] %v621
  %v687 = vld [vmem:[#allocation2] sm:$0x80]
  %v688 = vld [vmem:[#allocation2 + $0x20] sm:$0xff]
  %v689 = vld [vmem:[#allocation2 + $0x40] sm:$0xff]
  %v690 = vld [vmem:[#allocation2 + $0x60] sm:$0xff]
  %v691 = vld [vmem:[#allocation2 + $0x80] sm:$0xff]
  %v692 = vld [vmem:[#allocation2 + $0xa0] sm:$0xff]
  %v693 = vld [vmem:[#allocation2 + $0xc0] sm:$0xff]
  %v694 = vld [vmem:[#allocation2 + $0xe0] sm:$0xff]
  %v695 = vld [vmem:[#allocation2 + $0x100] sm:$0xff]
  %v696 = vld [vmem:[#allocation2 + $0x120] sm:$0xff]
  %v697 = vld [vmem:[#allocation2 + $0x140] sm:$0xff]
  %v698 = vld [vmem:[#allocation2 + $0x160] sm:$0xff]
  %v699 = vld [vmem:[#allocation2 + $0x180] sm:$0xff]
  %v700 = vld [vmem:[#allocation2 + $0x1a0] sm:$0xff]
  %v701 = vld [vmem:[#allocation2 + $0x1c0] sm:$0xff]
  %v702 = vld [vmem:[#allocation2 + $0x1e0] sm:$0xff]
  %v703 = vld [vmem:[#allocation2 + $0x200] sm:$0x7f]
  %v704 = vld [vmem:[%s4] sm:$0xff]
  %v705 = vld [vmem:[%s4 + $0x8] sm:$0xff]
  %v706 = vld [vmem:[%s4 + $0x10] sm:$0xff]
  %v707 = vld [vmem:[%s4 + $0x18] sm:$0xff]
  %v708 = vld [vmem:[%s4 + $0x20] sm:$0xff]
  %v709 = vld [vmem:[%s4 + $0x28] sm:$0xff]
  %v710 = vld [vmem:[%s4 + $0x30] sm:$0xff]
  %v711 = vld [vmem:[%s4 + $0x38] sm:$0xff]
  %v712 = vld [vmem:[%s4 + $0x40] sm:$0xff]
  %v713 = vld [vmem:[%s4 + $0x48] sm:$0xff]
  %v714 = vld [vmem:[%s4 + $0x50] sm:$0xff]
  %v715 = vld [vmem:[%s4 + $0x58] sm:$0xff]
  %v716 = vld [vmem:[%s4 + $0x60] sm:$0xff]
  %v717 = vld [vmem:[%s4 + $0x68] sm:$0xff]
  %v718 = vld [vmem:[%s4 + $0x70] sm:$0xff]
  %v719 = vld [vmem:[%s4 + $0x78] sm:$0xff]
  %721 = vset.pattern.permute.xlu0 0
  %722 = vperm.xlu0 %721, %v704
  %v723 = vpop.permute.xlu0 %722
  %726 = vset.pattern.permute.xlu0 0
  %727 = vperm.xlu0 %726, %v705
  %v728 = vpop.permute.xlu0 %727
  %731 = vset.pattern.permute.xlu0 0
  %732 = vperm.xlu0 %731, %v706
  %v733 = vpop.permute.xlu0 %732
  %736 = vset.pattern.permute.xlu0 0
  %737 = vperm.xlu0 %736, %v707
  %v738 = vpop.permute.xlu0 %737
  %741 = vset.pattern.permute.xlu0 0
  %742 = vperm.xlu0 %741, %v708
  %v743 = vpop.permute.xlu0 %742
  %746 = vset.pattern.permute.xlu0 0
  %747 = vperm.xlu0 %746, %v709
  %v748 = vpop.permute.xlu0 %747
  %751 = vset.pattern.permute.xlu0 0
  %752 = vperm.xlu0 %751, %v710
  %v753 = vpop.permute.xlu0 %752
  %756 = vset.pattern.permute.xlu0 0
  %757 = vperm.xlu0 %756, %v711
  %v758 = vpop.permute.xlu0 %757
  %761 = vset.pattern.permute.xlu0 0
  %762 = vperm.xlu0 %761, %v712
  %v763 = vpop.permute.xlu0 %762
  %766 = vset.pattern.permute.xlu0 0
  %767 = vperm.xlu0 %766, %v713
  %v768 = vpop.permute.xlu0 %767
  %771 = vset.pattern.permute.xlu0 0
  %772 = vperm.xlu0 %771, %v714
  %v773 = vpop.permute.xlu0 %772
  %776 = vset.pattern.permute.xlu0 0
  %777 = vperm.xlu0 %776, %v715
  %v778 = vpop.permute.xlu0 %777
  %781 = vset.pattern.permute.xlu0 0
  %782 = vperm.xlu0 %781, %v716
  %v783 = vpop.permute.xlu0 %782
  %786 = vset.pattern.permute.xlu0 0
  %787 = vperm.xlu0 %786, %v717
  %v788 = vpop.permute.xlu0 %787
  %791 = vset.pattern.permute.xlu0 0
  %792 = vperm.xlu0 %791, %v718
  %v793 = vpop.permute.xlu0 %792
  %796 = vset.pattern.permute.xlu0 0
  %797 = vperm.xlu0 %796, %v719
  %v798 = vpop.permute.xlu0 %797
  %vm817 = vcmask 1040384
  %v818 = vrot.slane %v687, 7
  %v819 = vrot.slane %v688, 7
  %v820 = vsel %vm817, %v818, %v819
  %v821 = vrot.slane %v689, 7
  %v822 = vsel %vm817, %v819, %v821
  %v823 = vrot.slane %v690, 7
  %v824 = vsel %vm817, %v821, %v823
  %v825 = vrot.slane %v691, 7
  %v826 = vsel %vm817, %v823, %v825
  %v827 = vrot.slane %v692, 7
  %v828 = vsel %vm817, %v825, %v827
  %v829 = vrot.slane %v693, 7
  %v830 = vsel %vm817, %v827, %v829
  %v831 = vrot.slane %v694, 7
  %v832 = vsel %vm817, %v829, %v831
  %v833 = vrot.slane %v695, 7
  %v834 = vsel %vm817, %v831, %v833
  %v835 = vrot.slane %v696, 7
  %v836 = vsel %vm817, %v833, %v835
  %v837 = vrot.slane %v697, 7
  %v838 = vsel %vm817, %v835, %v837
  %v839 = vrot.slane %v698, 7
  %v840 = vsel %vm817, %v837, %v839
  %v841 = vrot.slane %v699, 7
  %v842 = vsel %vm817, %v839, %v841
  %v843 = vrot.slane %v700, 7
  %v844 = vsel %vm817, %v841, %v843
  %v845 = vrot.slane %v701, 7
  %v846 = vsel %vm817, %v843, %v845
  %v847 = vrot.slane %v702, 7
  %v848 = vsel %vm817, %v845, %v847
  %v849 = vrot.slane %v703, 7
  %v850 = vsel %vm817, %v847, %v849
  %v867 = vmul.f32 %v723, %v820
  %v868 = vmul.f32 %v728, %v822
  %v869 = vmul.f32 %v733, %v824
  %v870 = vmul.f32 %v738, %v826
  %v871 = vmul.f32 %v743, %v828
  %v872 = vmul.f32 %v748, %v830
  %v873 = vmul.f32 %v753, %v832
  %v874 = vmul.f32 %v758, %v834
  %v875 = vmul.f32 %v763, %v836
  %v876 = vmul.f32 %v768, %v838
  %v877 = vmul.f32 %v773, %v840
  %v878 = vmul.f32 %v778, %v842
  %v879 = vmul.f32 %v783, %v844
  %v880 = vmul.f32 %v788, %v846
  %v881 = vmul.f32 %v793, %v848
  %v882 = vmul.f32 %v798, %v850
  %v883 = vld [vmem:[#allocation2 + $0x200] sm:$0xff]
  %884 = vset.pattern.permute.xlu0 1
  %885 = vperm.xlu0 %884, %v704
  %v886 = vpop.permute.xlu0 %885
  %888 = vset.pattern.permute.xlu0 1
  %889 = vperm.xlu0 %888, %v705
  %v890 = vpop.permute.xlu0 %889
  %892 = vset.pattern.permute.xlu0 1
  %893 = vperm.xlu0 %892, %v706
  %v894 = vpop.permute.xlu0 %893
  %896 = vset.pattern.permute.xlu0 1
  %897 = vperm.xlu0 %896, %v707
  %v898 = vpop.permute.xlu0 %897
  %900 = vset.pattern.permute.xlu0 1
  %901 = vperm.xlu0 %900, %v708
  %v902 = vpop.permute.xlu0 %901
  %904 = vset.pattern.permute.xlu0 1
  %905 = vperm.xlu0 %904, %v709
  %v906 = vpop.permute.xlu0 %905
  %908 = vset.pattern.permute.xlu0 1
  %909 = vperm.xlu0 %908, %v710
  %v910 = vpop.permute.xlu0 %909
  %912 = vset.pattern.permute.xlu0 1
  %913 = vperm.xlu0 %912, %v711
  %v914 = vpop.permute.xlu0 %913
  %916 = vset.pattern.permute.xlu0 1
  %917 = vperm.xlu0 %916, %v712
  %v918 = vpop.permute.xlu0 %917
  %920 = vset.pattern.permute.xlu0 1
  %921 = vperm.xlu0 %920, %v713
  %v922 = vpop.permute.xlu0 %921
  %924 = vset.pattern.permute.xlu0 1
  %925 = vperm.xlu0 %924, %v714
  %v926 = vpop.permute.xlu0 %925
  %928 = vset.pattern.permute.xlu0 1
  %929 = vperm.xlu0 %928, %v715
  %v930 = vpop.permute.xlu0 %929
  %932 = vset.pattern.permute.xlu0 1
  %933 = vperm.xlu0 %932, %v716
  %v934 = vpop.permute.xlu0 %933
  %936 = vset.pattern.permute.xlu0 1
  %937 = vperm.xlu0 %936, %v717
  %v938 = vpop.permute.xlu0 %937
  %940 = vset.pattern.permute.xlu0 1
  %941 = vperm.xlu0 %940, %v718
  %v942 = vpop.permute.xlu0 %941
  %944 = vset.pattern.permute.xlu0 1
  %945 = vperm.xlu0 %944, %v719
  %v946 = vpop.permute.xlu0 %945
  %v948 = vmul.f32 %v886, %v688
  %v949 = vmul.f32 %v890, %v689
  %v950 = vmul.f32 %v894, %v690
  %v951 = vmul.f32 %v898, %v691
  %v952 = vmul.f32 %v902, %v692
  %v953 = vmul.f32 %v906, %v693
  %v954 = vmul.f32 %v910, %v694
  %v955 = vmul.f32 %v914, %v695
  %v956 = vmul.f32 %v918, %v696
  %v957 = vmul.f32 %v922, %v697
  %v958 = vmul.f32 %v926, %v698
  %v959 = vmul.f32 %v930, %v699
  %v960 = vmul.f32 %v934, %v700
  %v961 = vmul.f32 %v938, %v701
  %v962 = vmul.f32 %v942, %v702
  %v963 = vmul.f32 %v946, %v883
  %980 = vrot.lane.b32.xlu0 %v948, 96
  %v981 = vpop.permute.xlu0 %980
  %982 = vrot.lane.b32.xlu0 %v949, 96
  %v983 = vpop.permute.xlu0 %982
  %984 = vrot.lane.b32.xlu0 %v950, 96
  %v985 = vpop.permute.xlu0 %984
  %986 = vrot.lane.b32.xlu0 %v951, 96
  %v987 = vpop.permute.xlu0 %986
  %988 = vrot.lane.b32.xlu0 %v952, 96
  %v989 = vpop.permute.xlu0 %988
  %990 = vrot.lane.b32.xlu0 %v953, 96
  %v991 = vpop.permute.xlu0 %990
  %992 = vrot.lane.b32.xlu0 %v954, 96
  %v993 = vpop.permute.xlu0 %992
  %994 = vrot.lane.b32.xlu0 %v955, 96
  %v995 = vpop.permute.xlu0 %994
  %996 = vrot.lane.b32.xlu0 %v956, 96
  %v997 = vpop.permute.xlu0 %996
  %998 = vrot.lane.b32.xlu0 %v957, 96
  %v999 = vpop.permute.xlu0 %998
  %1000 = vrot.lane.b32.xlu0 %v958, 96
  %v1001 = vpop.permute.xlu0 %1000
  %1002 = vrot.lane.b32.xlu0 %v959, 96
  %v1003 = vpop.permute.xlu0 %1002
  %1004 = vrot.lane.b32.xlu0 %v960, 96
  %v1005 = vpop.permute.xlu0 %1004
  %1006 = vrot.lane.b32.xlu0 %v961, 96
  %v1007 = vpop.permute.xlu0 %1006
  %1008 = vrot.lane.b32.xlu0 %v962, 96
  %v1009 = vpop.permute.xlu0 %1008
  %1010 = vrot.lane.b32.xlu0 %v963, 96
  %v1011 = vpop.permute.xlu0 %1010
  %v1028 = vadd.f32 %v867, %v981
  %v1029 = vadd.f32 %v868, %v983
  %v1030 = vadd.f32 %v869, %v985
  %v1031 = vadd.f32 %v870, %v987
  %v1032 = vadd.f32 %v871, %v989
  %v1033 = vadd.f32 %v872, %v991
  %v1034 = vadd.f32 %v873, %v993
  %v1035 = vadd.f32 %v874, %v995
  %v1036 = vadd.f32 %v875, %v997
  %v1037 = vadd.f32 %v876, %v999
  %v1038 = vadd.f32 %v877, %v1001
  %v1039 = vadd.f32 %v878, %v1003
  %v1040 = vadd.f32 %v879, %v1005
  %v1041 = vadd.f32 %v880, %v1007
  %v1042 = vadd.f32 %v881, %v1009
  %v1043 = vadd.f32 %v882, %v1011
  %v1044 = vld [vmem:[#allocation2 + $0x20] sm:$0xfe]
  %v1045 = vld [vmem:[#allocation2 + $0x40] sm:$0xff]
  %v1046 = vld [vmem:[#allocation2 + $0x60] sm:$0xff]
  %v1047 = vld [vmem:[#allocation2 + $0x80] sm:$0xff]
  %v1048 = vld [vmem:[#allocation2 + $0xa0] sm:$0xff]
  %v1049 = vld [vmem:[#allocation2 + $0xc0] sm:$0xff]
  %v1050 = vld [vmem:[#allocation2 + $0xe0] sm:$0xff]
  %v1051 = vld [vmem:[#allocation2 + $0x100] sm:$0xff]
  %v1052 = vld [vmem:[#allocation2 + $0x120] sm:$0xff]
  %v1053 = vld [vmem:[#allocation2 + $0x140] sm:$0xff]
  %v1054 = vld [vmem:[#allocation2 + $0x160] sm:$0xff]
  %v1055 = vld [vmem:[#allocation2 + $0x180] sm:$0xff]
  %v1056 = vld [vmem:[#allocation2 + $0x1a0] sm:$0xff]
  %v1057 = vld [vmem:[#allocation2 + $0x1c0] sm:$0xff]
  %v1058 = vld [vmem:[#allocation2 + $0x1e0] sm:$0xff]
  %v1059 = vld [vmem:[#allocation2 + $0x200] sm:$0xff]
  %v1060 = vld [vmem:[#allocation2 + $0x220] sm:$0x1]
  %1061 = vset.pattern.permute.xlu0 2
  %1062 = vperm.xlu0 %1061, %v704
  %v1063 = vpop.permute.xlu0 %1062
  %1065 = vset.pattern.permute.xlu0 2
  %1066 = vperm.xlu0 %1065, %v705
  %v1067 = vpop.permute.xlu0 %1066
  %1069 = vset.pattern.permute.xlu0 2
  %1070 = vperm.xlu0 %1069, %v706
  %v1071 = vpop.permute.xlu0 %1070
  %1073 = vset.pattern.permute.xlu0 2
  %1074 = vperm.xlu0 %1073, %v707
  %v1075 = vpop.permute.xlu0 %1074
  %1077 = vset.pattern.permute.xlu0 2
  %1078 = vperm.xlu0 %1077, %v708
  %v1079 = vpop.permute.xlu0 %1078
  %1081 = vset.pattern.permute.xlu0 2
  %1082 = vperm.xlu0 %1081, %v709
  %v1083 = vpop.permute.xlu0 %1082
  %1085 = vset.pattern.permute.xlu0 2
  %1086 = vperm.xlu0 %1085, %v710
  %v1087 = vpop.permute.xlu0 %1086
  %1089 = vset.pattern.permute.xlu0 2
  %1090 = vperm.xlu0 %1089, %v711
  %v1091 = vpop.permute.xlu0 %1090
  %1093 = vset.pattern.permute.xlu0 2
  %1094 = vperm.xlu0 %1093, %v712
  %v1095 = vpop.permute.xlu0 %1094
  %1097 = vset.pattern.permute.xlu0 2
  %1098 = vperm.xlu0 %1097, %v713
  %v1099 = vpop.permute.xlu0 %1098
  %1101 = vset.pattern.permute.xlu0 2
  %1102 = vperm.xlu0 %1101, %v714
  %v1103 = vpop.permute.xlu0 %1102
  %1105 = vset.pattern.permute.xlu0 2
  %1106 = vperm.xlu0 %1105, %v715
  %v1107 = vpop.permute.xlu0 %1106
  %1109 = vset.pattern.permute.xlu0 2
  %1110 = vperm.xlu0 %1109, %v716
  %v1111 = vpop.permute.xlu0 %1110
  %1113 = vset.pattern.permute.xlu0 2
  %1114 = vperm.xlu0 %1113, %v717
  %v1115 = vpop.permute.xlu0 %1114
  %1117 = vset.pattern.permute.xlu0 2
  %1118 = vperm.xlu0 %1117, %v718
  %v1119 = vpop.permute.xlu0 %1118
  %1121 = vset.pattern.permute.xlu0 2
  %1122 = vperm.xlu0 %1121, %v719
  %v1123 = vpop.permute.xlu0 %1122
  %vm1142 = vcmask 1046528
  %v1143 = vrot.slane %v1044, 1
  %v1144 = vrot.slane %v1045, 1
  %v1145 = vsel %vm1142, %v1143, %v1144
  %v1146 = vrot.slane %v1046, 1
  %v1147 = vsel %vm1142, %v1144, %v1146
  %v1148 = vrot.slane %v1047, 1
  %v1149 = vsel %vm1142, %v1146, %v1148
  %v1150 = vrot.slane %v1048, 1
  %v1151 = vsel %vm1142, %v1148, %v1150
  %v1152 = vrot.slane %v1049, 1
  %v1153 = vsel %vm1142, %v1150, %v1152
  %v1154 = vrot.slane %v1050, 1
  %v1155 = vsel %vm1142, %v1152, %v1154
  %v1156 = vrot.slane %v1051, 1
  %v1157 = vsel %vm1142, %v1154, %v1156
  %v1158 = vrot.slane %v1052, 1
  %v1159 = vsel %vm1142, %v1156, %v1158
  %v1160 = vrot.slane %v1053, 1
  %v1161 = vsel %vm1142, %v1158, %v1160
  %v1162 = vrot.slane %v1054, 1
  %v1163 = vsel %vm1142, %v1160, %v1162
  %v1164 = vrot.slane %v1055, 1
  %v1165 = vsel %vm1142, %v1162, %v1164
  %v1166 = vrot.slane %v1056, 1
  %v1167 = vsel %vm1142, %v1164, %v1166
  %v1168 = vrot.slane %v1057, 1
  %v1169 = vsel %vm1142, %v1166, %v1168
  %v1170 = vrot.slane %v1058, 1
  %v1171 = vsel %vm1142, %v1168, %v1170
  %v1172 = vrot.slane %v1059, 1
  %v1173 = vsel %vm1142, %v1170, %v1172
  %v1174 = vrot.slane %v1060, 1
  %v1175 = vsel %vm1142, %v1172, %v1174
  %1176 = vrot.lane.b32.xlu0 %v1145, 64
  %v1177 = vpop.permute.xlu0 %1176
  %1178 = vrot.lane.b32.xlu0 %v1147, 64
  %v1179 = vpop.permute.xlu0 %1178
  %1180 = vrot.lane.b32.xlu0 %v1149, 64
  %v1181 = vpop.permute.xlu0 %1180
  %1182 = vrot.lane.b32.xlu0 %v1151, 64
  %v1183 = vpop.permute.xlu0 %1182
  %1184 = vrot.lane.b32.xlu0 %v1153, 64
  %v1185 = vpop.permute.xlu0 %1184
  %1186 = vrot.lane.b32.xlu0 %v1155, 64
  %v1187 = vpop.permute.xlu0 %1186
  %1188 = vrot.lane.b32.xlu0 %v1157, 64
  %v1189 = vpop.permute.xlu0 %1188
  %1190 = vrot.lane.b32.xlu0 %v1159, 64
  %v1191 = vpop.permute.xlu0 %1190
  %1192 = vrot.lane.b32.xlu0 %v1161, 64
  %v1193 = vpop.permute.xlu0 %1192
  %1194 = vrot.lane.b32.xlu0 %v1163, 64
  %v1195 = vpop.permute.xlu0 %1194
  %1196 = vrot.lane.b32.xlu0 %v1165, 64
  %v1197 = vpop.permute.xlu0 %1196
  %1198 = vrot.lane.b32.xlu0 %v1167, 64
  %v1199 = vpop.permute.xlu0 %1198
  %1200 = vrot.lane.b32.xlu0 %v1169, 64
  %v1201 = vpop.permute.xlu0 %1200
  %1202 = vrot.lane.b32.xlu0 %v1171, 64
  %v1203 = vpop.permute.xlu0 %1202
  %1204 = vrot.lane.b32.xlu0 %v1173, 64
  %v1205 = vpop.permute.xlu0 %1204
  %1206 = vrot.lane.b32.xlu0 %v1175, 64
  %v1207 = vpop.permute.xlu0 %1206
  %v1224 = vmul.f32 %v1063, %v1177
  %v1225 = vmul.f32 %v1067, %v1179
  %v1226 = vmul.f32 %v1071, %v1181
  %v1227 = vmul.f32 %v1075, %v1183
  %v1228 = vmul.f32 %v1079, %v1185
  %v1229 = vmul.f32 %v1083, %v1187
  %v1230 = vmul.f32 %v1087, %v1189
  %v1231 = vmul.f32 %v1091, %v1191
  %v1232 = vmul.f32 %v1095, %v1193
  %v1233 = vmul.f32 %v1099, %v1195
  %v1234 = vmul.f32 %v1103, %v1197
  %v1235 = vmul.f32 %v1107, %v1199
  %v1236 = vmul.f32 %v1111, %v1201
  %v1237 = vmul.f32 %v1115, %v1203
  %v1238 = vmul.f32 %v1119, %v1205
  %v1239 = vmul.f32 %v1123, %v1207
  %v1240 = vadd.f32 %v1028, %v1224
  %v1241 = vadd.f32 %v1029, %v1225
  %v1242 = vadd.f32 %v1030, %v1226
  %v1243 = vadd.f32 %v1031, %v1227
  %v1244 = vadd.f32 %v1032, %v1228
  %v1245 = vadd.f32 %v1033, %v1229
  %v1246 = vadd.f32 %v1034, %v1230
  %v1247 = vadd.f32 %v1035, %v1231
  %v1248 = vadd.f32 %v1036, %v1232
  %v1249 = vadd.f32 %v1037, %v1233
  %v1250 = vadd.f32 %v1038, %v1234
  %v1251 = vadd.f32 %v1039, %v1235
  %v1252 = vadd.f32 %v1040, %v1236
  %v1253 = vadd.f32 %v1041, %v1237
  %v1254 = vadd.f32 %v1042, %v1238
  %v1255 = vadd.f32 %v1043, %v1239
  %v1256 = vld [vmem:[#allocation2 + $0x20] sm:$0xfc]
  %v1257 = vld [vmem:[#allocation2 + $0x220] sm:$0x3]
  %1258 = vset.pattern.permute.xlu0 3
  %1259 = vperm.xlu0 %1258, %v704
  %v1260 = vpop.permute.xlu0 %1259
  %1262 = vset.pattern.permute.xlu0 3
  %1263 = vperm.xlu0 %1262, %v705
  %v1264 = vpop.permute.xlu0 %1263
  %1266 = vset.pattern.permute.xlu0 3
  %1267 = vperm.xlu0 %1266, %v706
  %v1268 = vpop.permute.xlu0 %1267
  %1270 = vset.pattern.permute.xlu0 3
  %1271 = vperm.xlu0 %1270, %v707
  %v1272 = vpop.permute.xlu0 %1271
  %1274 = vset.pattern.permute.xlu0 3
  %1275 = vperm.xlu0 %1274, %v708
  %v1276 = vpop.permute.xlu0 %1275
  %1278 = vset.pattern.permute.xlu0 3
  %1279 = vperm.xlu0 %1278, %v709
  %v1280 = vpop.permute.xlu0 %1279
  %1282 = vset.pattern.permute.xlu0 3
  %1283 = vperm.xlu0 %1282, %v710
  %v1284 = vpop.permute.xlu0 %1283
  %1286 = vset.pattern.permute.xlu0 3
  %1287 = vperm.xlu0 %1286, %v711
  %v1288 = vpop.permute.xlu0 %1287
  %1290 = vset.pattern.permute.xlu0 3
  %1291 = vperm.xlu0 %1290, %v712
  %v1292 = vpop.permute.xlu0 %1291
  %1294 = vset.pattern.permute.xlu0 3
  %1295 = vperm.xlu0 %1294, %v713
  %v1296 = vpop.permute.xlu0 %1295
  %1298 = vset.pattern.permute.xlu0 3
  %1299 = vperm.xlu0 %1298, %v714
  %v1300 = vpop.permute.xlu0 %1299
  %1302 = vset.pattern.permute.xlu0 3
  %1303 = vperm.xlu0 %1302, %v715
  %v1304 = vpop.permute.xlu0 %1303
  %1306 = vset.pattern.permute.xlu0 3
  %1307 = vperm.xlu0 %1306, %v716
  %v1308 = vpop.permute.xlu0 %1307
  %1310 = vset.pattern.permute.xlu0 3
  %1311 = vperm.xlu0 %1310, %v717
  %v1312 = vpop.permute.xlu0 %1311
  %1314 = vset.pattern.permute.xlu0 3
  %1315 = vperm.xlu0 %1314, %v718
  %v1316 = vpop.permute.xlu0 %1315
  %1318 = vset.pattern.permute.xlu0 3
  %1319 = vperm.xlu0 %1318, %v719
  %v1320 = vpop.permute.xlu0 %1319
  %vm1324 = vcmask 1045504
  %v1325 = vrot.slane %v1256, 2
  %v1326 = vrot.slane %v1045, 2
  %v1327 = vsel %vm1324, %v1325, %v1326
  %v1328 = vrot.slane %v1046, 2
  %v1329 = vsel %vm1324, %v1326, %v1328
  %v1330 = vrot.slane %v1047, 2
  %v1331 = vsel %vm1324, %v1328, %v1330
  %v1332 = vrot.slane %v1048, 2
  %v1333 = vsel %vm1324, %v1330, %v1332
  %v1334 = vrot.slane %v1049, 2
  %v1335 = vsel %vm1324, %v1332, %v1334
  %v1336 = vrot.slane %v1050, 2
  %v1337 = vsel %vm1324, %v1334, %v1336
  %v1338 = vrot.slane %v1051, 2
  %v1339 = vsel %vm1324, %v1336, %v1338
  %v1340 = vrot.slane %v1052, 2
  %v1341 = vsel %vm1324, %v1338, %v1340
  %v1342 = vrot.slane %v1053, 2
  %v1343 = vsel %vm1324, %v1340, %v1342
  %v1344 = vrot.slane %v1054, 2
  %v1345 = vsel %vm1324, %v1342, %v1344
  %v1346 = vrot.slane %v1055, 2
  %v1347 = vsel %vm1324, %v1344, %v1346
  %v1348 = vrot.slane %v1056, 2
  %v1349 = vsel %vm1324, %v1346, %v1348
  %v1350 = vrot.slane %v1057, 2
  %v1351 = vsel %vm1324, %v1348, %v1350
  %v1352 = vrot.slane %v1058, 2
  %v1353 = vsel %vm1324, %v1350, %v1352
  %v1354 = vrot.slane %v1059, 2
  %v1355 = vsel %vm1324, %v1352, %v1354
  %v1356 = vrot.slane %v1257, 2
  %v1357 = vsel %vm1324, %v1354, %v1356
  %1358 = vrot.lane.b32.xlu0 %v1327, 32
  %v1359 = vpop.permute.xlu0 %1358
  %1360 = vrot.lane.b32.xlu0 %v1329, 32
  %v1361 = vpop.permute.xlu0 %1360
  %1362 = vrot.lane.b32.xlu0 %v1331, 32
  %v1363 = vpop.permute.xlu0 %1362
  %1364 = vrot.lane.b32.xlu0 %v1333, 32
  %v1365 = vpop.permute.xlu0 %1364
  %1366 = vrot.lane.b32.xlu0 %v1335, 32
  %v1367 = vpop.permute.xlu0 %1366
  %1368 = vrot.lane.b32.xlu0 %v1337, 32
  %v1369 = vpop.permute.xlu0 %1368
  %1370 = vrot.lane.b32.xlu0 %v1339, 32
  %v1371 = vpop.permute.xlu0 %1370
  %1372 = vrot.lane.b32.xlu0 %v1341, 32
  %v1373 = vpop.permute.xlu0 %1372
  %1374 = vrot.lane.b32.xlu0 %v1343, 32
  %v1375 = vpop.permute.xlu0 %1374
  %1376 = vrot.lane.b32.xlu0 %v1345, 32
  %v1377 = vpop.permute.xlu0 %1376
  %1378 = vrot.lane.b32.xlu0 %v1347, 32
  %v1379 = vpop.permute.xlu0 %1378
  %1380 = vrot.lane.b32.xlu0 %v1349, 32
  %v1381 = vpop.permute.xlu0 %1380
  %1382 = vrot.lane.b32.xlu0 %v1351, 32
  %v1383 = vpop.permute.xlu0 %1382
  %1384 = vrot.lane.b32.xlu0 %v1353, 32
  %v1385 = vpop.permute.xlu0 %1384
  %1386 = vrot.lane.b32.xlu0 %v1355, 32
  %v1387 = vpop.permute.xlu0 %1386
  %1388 = vrot.lane.b32.xlu0 %v1357, 32
  %v1389 = vpop.permute.xlu0 %1388
  %v1406 = vmul.f32 %v1260, %v1359
  %v1407 = vmul.f32 %v1264, %v1361
  %v1408 = vmul.f32 %v1268, %v1363
  %v1409 = vmul.f32 %v1272, %v1365
  %v1410 = vmul.f32 %v1276, %v1367
  %v1411 = vmul.f32 %v1280, %v1369
  %v1412 = vmul.f32 %v1284, %v1371
  %v1413 = vmul.f32 %v1288, %v1373
  %v1414 = vmul.f32 %v1292, %v1375
  %v1415 = vmul.f32 %v1296, %v1377
  %v1416 = vmul.f32 %v1300, %v1379
  %v1417 = vmul.f32 %v1304, %v1381
  %v1418 = vmul.f32 %v1308, %v1383
  %v1419 = vmul.f32 %v1312, %v1385
  %v1420 = vmul.f32 %v1316, %v1387
  %v1421 = vmul.f32 %v1320, %v1389
  %v1422 = vadd.f32 %v1240, %v1406
  %v1423 = vadd.f32 %v1241, %v1407
  %v1424 = vadd.f32 %v1242, %v1408
  %v1425 = vadd.f32 %v1243, %v1409
  %v1426 = vadd.f32 %v1244, %v1410
  %v1427 = vadd.f32 %v1245, %v1411
  %v1428 = vadd.f32 %v1246, %v1412
  %v1429 = vadd.f32 %v1247, %v1413
  %v1430 = vadd.f32 %v1248, %v1414
  %v1431 = vadd.f32 %v1249, %v1415
  %v1432 = vadd.f32 %v1250, %v1416
  %v1433 = vadd.f32 %v1251, %v1417
  %v1434 = vadd.f32 %v1252, %v1418
  %v1435 = vadd.f32 %v1253, %v1419
  %v1436 = vadd.f32 %v1254, %v1420
  %v1437 = vadd.f32 %v1255, %v1421
  %v1438 = vld [vmem:[#allocation2 + $0x28] sm:$0x80]
  %v1439 = vld [vmem:[#allocation2 + $0x48] sm:$0xff]
  %v1440 = vld [vmem:[#allocation2 + $0x68] sm:$0xff]
  %v1441 = vld [vmem:[#allocation2 + $0x88] sm:$0xff]
  %v1442 = vld [vmem:[#allocation2 + $0xa8] sm:$0xff]
  %v1443 = vld [vmem:[#allocation2 + $0xc8] sm:$0xff]
  %v1444 = vld [vmem:[#allocation2 + $0xe8] sm:$0xff]
  %v1445 = vld [vmem:[#allocation2 + $0x108] sm:$0xff]
  %v1446 = vld [vmem:[#allocation2 + $0x128] sm:$0xff]
  %v1447 = vld [vmem:[#allocation2 + $0x148] sm:$0xff]
  %v1448 = vld [vmem:[#allocation2 + $0x168] sm:$0xff]
  %v1449 = vld [vmem:[#allocation2 + $0x188] sm:$0xff]
  %v1450 = vld [vmem:[#allocation2 + $0x1a8] sm:$0xff]
  %v1451 = vld [vmem:[#allocation2 + $0x1c8] sm:$0xff]
  %v1452 = vld [vmem:[#allocation2 + $0x1e8] sm:$0xff]
  %v1453 = vld [vmem:[#allocation2 + $0x208] sm:$0xff]
  %v1454 = vld [vmem:[#allocation2 + $0x228] sm:$0x7f]
  %1455 = vset.pattern.permute.xlu0 4
  %1456 = vperm.xlu0 %1455, %v704
  %v1457 = vpop.permute.xlu0 %1456
  %1459 = vset.pattern.permute.xlu0 4
  %1460 = vperm.xlu0 %1459, %v705
  %v1461 = vpop.permute.xlu0 %1460
  %1463 = vset.pattern.permute.xlu0 4
  %1464 = vperm.xlu0 %1463, %v706
  %v1465 = vpop.permute.xlu0 %1464
  %1467 = vset.pattern.permute.xlu0 4
  %1468 = vperm.xlu0 %1467, %v707
  %v1469 = vpop.permute.xlu0 %1468
  %1471 = vset.pattern.permute.xlu0 4
  %1472 = vperm.xlu0 %1471, %v708
  %v1473 = vpop.permute.xlu0 %1472
  %1475 = vset.pattern.permute.xlu0 4
  %1476 = vperm.xlu0 %1475, %v709
  %v1477 = vpop.permute.xlu0 %1476
  %1479 = vset.pattern.permute.xlu0 4
  %1480 = vperm.xlu0 %1479, %v710
  %v1481 = vpop.permute.xlu0 %1480
  %1483 = vset.pattern.permute.xlu0 4
  %1484 = vperm.xlu0 %1483, %v711
  %v1485 = vpop.permute.xlu0 %1484
  %1487 = vset.pattern.permute.xlu0 4
  %1488 = vperm.xlu0 %1487, %v712
  %v1489 = vpop.permute.xlu0 %1488
  %1491 = vset.pattern.permute.xlu0 4
  %1492 = vperm.xlu0 %1491, %v713
  %v1493 = vpop.permute.xlu0 %1492
  %1495 = vset.pattern.permute.xlu0 4
  %1496 = vperm.xlu0 %1495, %v714
  %v1497 = vpop.permute.xlu0 %1496
  %1499 = vset.pattern.permute.xlu0 4
  %1500 = vperm.xlu0 %1499, %v715
  %v1501 = vpop.permute.xlu0 %1500
  %1503 = vset.pattern.permute.xlu0 4
  %1504 = vperm.xlu0 %1503, %v716
  %v1505 = vpop.permute.xlu0 %1504
  %1507 = vset.pattern.permute.xlu0 4
  %1508 = vperm.xlu0 %1507, %v717
  %v1509 = vpop.permute.xlu0 %1508
  %1511 = vset.pattern.permute.xlu0 4
  %1512 = vperm.xlu0 %1511, %v718
  %v1513 = vpop.permute.xlu0 %1512
  %1515 = vset.pattern.permute.xlu0 4
  %1516 = vperm.xlu0 %1515, %v719
  %v1517 = vpop.permute.xlu0 %1516
  %v1536 = vrot.slane %v1438, 7
  %v1537 = vrot.slane %v1439, 7
  %v1538 = vsel %vm817, %v1536, %v1537
  %v1539 = vrot.slane %v1440, 7
  %v1540 = vsel %vm817, %v1537, %v1539
  %v1541 = vrot.slane %v1441, 7
  %v1542 = vsel %vm817, %v1539, %v1541
  %v1543 = vrot.slane %v1442, 7
  %v1544 = vsel %vm817, %v1541, %v1543
  %v1545 = vrot.slane %v1443, 7
  %v1546 = vsel %vm817, %v1543, %v1545
  %v1547 = vrot.slane %v1444, 7
  %v1548 = vsel %vm817, %v1545, %v1547
  %v1549 = vrot.slane %v1445, 7
  %v1550 = vsel %vm817, %v1547, %v1549
  %v1551 = vrot.slane %v1446, 7
  %v1552 = vsel %vm817, %v1549, %v1551
  %v1553 = vrot.slane %v1447, 7
  %v1554 = vsel %vm817, %v1551, %v1553
  %v1555 = vrot.slane %v1448, 7
  %v1556 = vsel %vm817, %v1553, %v1555
  %v1557 = vrot.slane %v1449, 7
  %v1558 = vsel %vm817, %v1555, %v1557
  %v1559 = vrot.slane %v1450, 7
  %v1560 = vsel %vm817, %v1557, %v1559
  %v1561 = vrot.slane %v1451, 7
  %v1562 = vsel %vm817, %v1559, %v1561
  %v1563 = vrot.slane %v1452, 7
  %v1564 = vsel %vm817, %v1561, %v1563
  %v1565 = vrot.slane %v1453, 7
  %v1566 = vsel %vm817, %v1563, %v1565
  %v1567 = vrot.slane %v1454, 7
  %v1568 = vsel %vm817, %v1565, %v1567
  %v1585 = vmul.f32 %v1457, %v1538
  %v1586 = vmul.f32 %v1461, %v1540
  %v1587 = vmul.f32 %v1465, %v1542
  %v1588 = vmul.f32 %v1469, %v1544
  %v1589 = vmul.f32 %v1473, %v1546
  %v1590 = vmul.f32 %v1477, %v1548
  %v1591 = vmul.f32 %v1481, %v1550
  %v1592 = vmul.f32 %v1485, %v1552
  %v1593 = vmul.f32 %v1489, %v1554
  %v1594 = vmul.f32 %v1493, %v1556
  %v1595 = vmul.f32 %v1497, %v1558
  %v1596 = vmul.f32 %v1501, %v1560
  %v1597 = vmul.f32 %v1505, %v1562
  %v1598 = vmul.f32 %v1509, %v1564
  %v1599 = vmul.f32 %v1513, %v1566
  %v1600 = vmul.f32 %v1517, %v1568
  %v1601 = vadd.f32 %v1422, %v1585
  %v1602 = vadd.f32 %v1423, %v1586
  %v1603 = vadd.f32 %v1424, %v1587
  %v1604 = vadd.f32 %v1425, %v1588
  %v1605 = vadd.f32 %v1426, %v1589
  %v1606 = vadd.f32 %v1427, %v1590
  %v1607 = vadd.f32 %v1428, %v1591
  %v1608 = vadd.f32 %v1429, %v1592
  %v1609 = vadd.f32 %v1430, %v1593
  %v1610 = vadd.f32 %v1431, %v1594
  %v1611 = vadd.f32 %v1432, %v1595
  %v1612 = vadd.f32 %v1433, %v1596
  %v1613 = vadd.f32 %v1434, %v1597
  %v1614 = vadd.f32 %v1435, %v1598
  %v1615 = vadd.f32 %v1436, %v1599
  %v1616 = vadd.f32 %v1437, %v1600
  %v1617 = vld [vmem:[#allocation2 + $0x228] sm:$0xff]
  %1618 = vset.pattern.permute.xlu0 5
  %1619 = vperm.xlu0 %1618, %v704
  %v1620 = vpop.permute.xlu0 %1619
  %1622 = vset.pattern.permute.xlu0 5
  %1623 = vperm.xlu0 %1622, %v705
  %v1624 = vpop.permute.xlu0 %1623
  %1626 = vset.pattern.permute.xlu0 5
  %1627 = vperm.xlu0 %1626, %v706
  %v1628 = vpop.permute.xlu0 %1627
  %1630 = vset.pattern.permute.xlu0 5
  %1631 = vperm.xlu0 %1630, %v707
  %v1632 = vpop.permute.xlu0 %1631
  %1634 = vset.pattern.permute.xlu0 5
  %1635 = vperm.xlu0 %1634, %v708
  %v1636 = vpop.permute.xlu0 %1635
  %1638 = vset.pattern.permute.xlu0 5
  %1639 = vperm.xlu0 %1638, %v709
  %v1640 = vpop.permute.xlu0 %1639
  %1642 = vset.pattern.permute.xlu0 5
  %1643 = vperm.xlu0 %1642, %v710
  %v1644 = vpop.permute.xlu0 %1643
  %1646 = vset.pattern.permute.xlu0 5
  %1647 = vperm.xlu0 %1646, %v711
  %v1648 = vpop.permute.xlu0 %1647
  %1650 = vset.pattern.permute.xlu0 5
  %1651 = vperm.xlu0 %1650, %v712
  %v1652 = vpop.permute.xlu0 %1651
  %1654 = vset.pattern.permute.xlu0 5
  %1655 = vperm.xlu0 %1654, %v713
  %v1656 = vpop.permute.xlu0 %1655
  %1658 = vset.pattern.permute.xlu0 5
  %1659 = vperm.xlu0 %1658, %v714
  %v1660 = vpop.permute.xlu0 %1659
  %1662 = vset.pattern.permute.xlu0 5
  %1663 = vperm.xlu0 %1662, %v715
  %v1664 = vpop.permute.xlu0 %1663
  %1666 = vset.pattern.permute.xlu0 5
  %1667 = vperm.xlu0 %1666, %v716
  %v1668 = vpop.permute.xlu0 %1667
  %1670 = vset.pattern.permute.xlu0 5
  %1671 = vperm.xlu0 %1670, %v717
  %v1672 = vpop.permute.xlu0 %1671
  %1674 = vset.pattern.permute.xlu0 5
  %1675 = vperm.xlu0 %1674, %v718
  %v1676 = vpop.permute.xlu0 %1675
  %1678 = vset.pattern.permute.xlu0 5
  %1679 = vperm.xlu0 %1678, %v719
  %v1680 = vpop.permute.xlu0 %1679
  %v1682 = vmul.f32 %v1620, %v1439
  %v1683 = vmul.f32 %v1624, %v1440
  %v1684 = vmul.f32 %v1628, %v1441
  %v1685 = vmul.f32 %v1632, %v1442
  %v1686 = vmul.f32 %v1636, %v1443
  %v1687 = vmul.f32 %v1640, %v1444
  %v1688 = vmul.f32 %v1644, %v1445
  %v1689 = vmul.f32 %v1648, %v1446
  %v1690 = vmul.f32 %v1652, %v1447
  %v1691 = vmul.f32 %v1656, %v1448
  %v1692 = vmul.f32 %v1660, %v1449
  %v1693 = vmul.f32 %v1664, %v1450
  %v1694 = vmul.f32 %v1668, %v1451
  %v1695 = vmul.f32 %v1672, %v1452
  %v1696 = vmul.f32 %v1676, %v1453
  %v1697 = vmul.f32 %v1680, %v1617
  %1714 = vrot.lane.b32.xlu0 %v1682, 96
  %v1715 = vpop.permute.xlu0 %1714
  %1716 = vrot.lane.b32.xlu0 %v1683, 96
  %v1717 = vpop.permute.xlu0 %1716
  %1718 = vrot.lane.b32.xlu0 %v1684, 96
  %v1719 = vpop.permute.xlu0 %1718
  %1720 = vrot.lane.b32.xlu0 %v1685, 96
  %v1721 = vpop.permute.xlu0 %1720
  %1722 = vrot.lane.b32.xlu0 %v1686, 96
  %v1723 = vpop.permute.xlu0 %1722
  %1724 = vrot.lane.b32.xlu0 %v1687, 96
  %v1725 = vpop.permute.xlu0 %1724
  %1726 = vrot.lane.b32.xlu0 %v1688, 96
  %v1727 = vpop.permute.xlu0 %1726
  %1728 = vrot.lane.b32.xlu0 %v1689, 96
  %v1729 = vpop.permute.xlu0 %1728
  %1730 = vrot.lane.b32.xlu0 %v1690, 96
  %v1731 = vpop.permute.xlu0 %1730
  %1732 = vrot.lane.b32.xlu0 %v1691, 96
  %v1733 = vpop.permute.xlu0 %1732
  %1734 = vrot.lane.b32.xlu0 %v1692, 96
  %v1735 = vpop.permute.xlu0 %1734
  %1736 = vrot.lane.b32.xlu0 %v1693, 96
  %v1737 = vpop.permute.xlu0 %1736
  %1738 = vrot.lane.b32.xlu0 %v1694, 96
  %v1739 = vpop.permute.xlu0 %1738
  %1740 = vrot.lane.b32.xlu0 %v1695, 96
  %v1741 = vpop.permute.xlu0 %1740
  %1742 = vrot.lane.b32.xlu0 %v1696, 96
  %v1743 = vpop.permute.xlu0 %1742
  %1744 = vrot.lane.b32.xlu0 %v1697, 96
  %v1745 = vpop.permute.xlu0 %1744
  %v1762 = vadd.f32 %v1601, %v1715
  %v1763 = vadd.f32 %v1602, %v1717
  %v1764 = vadd.f32 %v1603, %v1719
  %v1765 = vadd.f32 %v1604, %v1721
  %v1766 = vadd.f32 %v1605, %v1723
  %v1767 = vadd.f32 %v1606, %v1725
  %v1768 = vadd.f32 %v1607, %v1727
  %v1769 = vadd.f32 %v1608, %v1729
  %v1770 = vadd.f32 %v1609, %v1731
  %v1771 = vadd.f32 %v1610, %v1733
  %v1772 = vadd.f32 %v1611, %v1735
  %v1773 = vadd.f32 %v1612, %v1737
  %v1774 = vadd.f32 %v1613, %v1739
  %v1775 = vadd.f32 %v1614, %v1741
  %v1776 = vadd.f32 %v1615, %v1743
  %v1777 = vadd.f32 %v1616, %v1745
  %v1778 = vld [vmem:[#allocation2 + $0x48] sm:$0xfe]
  %v1779 = vld [vmem:[#allocation2 + $0x68] sm:$0xff]
  %v1780 = vld [vmem:[#allocation2 + $0x88] sm:$0xff]
  %v1781 = vld [vmem:[#allocation2 + $0xa8] sm:$0xff]
  %v1782 = vld [vmem:[#allocation2 + $0xc8] sm:$0xff]
  %v1783 = vld [vmem:[#allocation2 + $0xe8] sm:$0xff]
  %v1784 = vld [vmem:[#allocation2 + $0x108] sm:$0xff]
  %v1785 = vld [vmem:[#allocation2 + $0x128] sm:$0xff]
  %v1786 = vld [vmem:[#allocation2 + $0x148] sm:$0xff]
  %v1787 = vld [vmem:[#allocation2 + $0x168] sm:$0xff]
  %v1788 = vld [vmem:[#allocation2 + $0x188] sm:$0xff]
  %v1789 = vld [vmem:[#allocation2 + $0x1a8] sm:$0xff]
  %v1790 = vld [vmem:[#allocation2 + $0x1c8] sm:$0xff]
  %v1791 = vld [vmem:[#allocation2 + $0x1e8] sm:$0xff]
  %v1792 = vld [vmem:[#allocation2 + $0x208] sm:$0xff]
  %v1793 = vld [vmem:[#allocation2 + $0x228] sm:$0xff]
  %v1794 = vld [vmem:[#allocation2 + $0x248] sm:$0x1]
  %1795 = vset.pattern.permute.xlu0 6
  %1796 = vperm.xlu0 %1795, %v704
  %v1797 = vpop.permute.xlu0 %1796
  %1799 = vset.pattern.permute.xlu0 6
  %1800 = vperm.xlu0 %1799, %v705
  %v1801 = vpop.permute.xlu0 %1800
  %1803 = vset.pattern.permute.xlu0 6
  %1804 = vperm.xlu0 %1803, %v706
  %v1805 = vpop.permute.xlu0 %1804
  %1807 = vset.pattern.permute.xlu0 6
  %1808 = vperm.xlu0 %1807, %v707
  %v1809 = vpop.permute.xlu0 %1808
  %1811 = vset.pattern.permute.xlu0 6
  %1812 = vperm.xlu0 %1811, %v708
  %v1813 = vpop.permute.xlu0 %1812
  %1815 = vset.pattern.permute.xlu0 6
  %1816 = vperm.xlu0 %1815, %v709
  %v1817 = vpop.permute.xlu0 %1816
  %1819 = vset.pattern.permute.xlu0 6
  %1820 = vperm.xlu0 %1819, %v710
  %v1821 = vpop.permute.xlu0 %1820
  %1823 = vset.pattern.permute.xlu0 6
  %1824 = vperm.xlu0 %1823, %v711
  %v1825 = vpop.permute.xlu0 %1824
  %1827 = vset.pattern.permute.xlu0 6
  %1828 = vperm.xlu0 %1827, %v712
  %v1829 = vpop.permute.xlu0 %1828
  %1831 = vset.pattern.permute.xlu0 6
  %1832 = vperm.xlu0 %1831, %v713
  %v1833 = vpop.permute.xlu0 %1832
  %1835 = vset.pattern.permute.xlu0 6
  %1836 = vperm.xlu0 %1835, %v714
  %v1837 = vpop.permute.xlu0 %1836
  %1839 = vset.pattern.permute.xlu0 6
  %1840 = vperm.xlu0 %1839, %v715
  %v1841 = vpop.permute.xlu0 %1840
  %1843 = vset.pattern.permute.xlu0 6
  %1844 = vperm.xlu0 %1843, %v716
  %v1845 = vpop.permute.xlu0 %1844
  %1847 = vset.pattern.permute.xlu0 6
  %1848 = vperm.xlu0 %1847, %v717
  %v1849 = vpop.permute.xlu0 %1848
  %1851 = vset.pattern.permute.xlu0 6
  %1852 = vperm.xlu0 %1851, %v718
  %v1853 = vpop.permute.xlu0 %1852
  %1855 = vset.pattern.permute.xlu0 6
  %1856 = vperm.xlu0 %1855, %v719
  %v1857 = vpop.permute.xlu0 %1856
  %v1876 = vrot.slane %v1778, 1
  %v1877 = vrot.slane %v1779, 1
  %v1878 = vsel %vm1142, %v1876, %v1877
  %v1879 = vrot.slane %v1780, 1
  %v1880 = vsel %vm1142, %v1877, %v1879
  %v1881 = vrot.slane %v1781, 1
  %v1882 = vsel %vm1142, %v1879, %v1881
  %v1883 = vrot.slane %v1782, 1
  %v1884 = vsel %vm1142, %v1881, %v1883
  %v1885 = vrot.slane %v1783, 1
  %v1886 = vsel %vm1142, %v1883, %v1885
  %v1887 = vrot.slane %v1784, 1
  %v1888 = vsel %vm1142, %v1885, %v1887
  %v1889 = vrot.slane %v1785, 1
  %v1890 = vsel %vm1142, %v1887, %v1889
  %v1891 = vrot.slane %v1786, 1
  %v1892 = vsel %vm1142, %v1889, %v1891
  %v1893 = vrot.slane %v1787, 1
  %v1894 = vsel %vm1142, %v1891, %v1893
  %v1895 = vrot.slane %v1788, 1
  %v1896 = vsel %vm1142, %v1893, %v1895
  %v1897 = vrot.slane %v1789, 1
  %v1898 = vsel %vm1142, %v1895, %v1897
  %v1899 = vrot.slane %v1790, 1
  %v1900 = vsel %vm1142, %v1897, %v1899
  %v1901 = vrot.slane %v1791, 1
  %v1902 = vsel %vm1142, %v1899, %v1901
  %v1903 = vrot.slane %v1792, 1
  %v1904 = vsel %vm1142, %v1901, %v1903
  %v1905 = vrot.slane %v1793, 1
  %v1906 = vsel %vm1142, %v1903, %v1905
  %v1907 = vrot.slane %v1794, 1
  %v1908 = vsel %vm1142, %v1905, %v1907
  %1909 = vrot.lane.b32.xlu0 %v1878, 64
  %v1910 = vpop.permute.xlu0 %1909
  %1911 = vrot.lane.b32.xlu0 %v1880, 64
  %v1912 = vpop.permute.xlu0 %1911
  %1913 = vrot.lane.b32.xlu0 %v1882, 64
  %v1914 = vpop.permute.xlu0 %1913
  %1915 = vrot.lane.b32.xlu0 %v1884, 64
  %v1916 = vpop.permute.xlu0 %1915
  %1917 = vrot.lane.b32.xlu0 %v1886, 64
  %v1918 = vpop.permute.xlu0 %1917
  %1919 = vrot.lane.b32.xlu0 %v1888, 64
  %v1920 = vpop.permute.xlu0 %1919
  %1921 = vrot.lane.b32.xlu0 %v1890, 64
  %v1922 = vpop.permute.xlu0 %1921
  %1923 = vrot.lane.b32.xlu0 %v1892, 64
  %v1924 = vpop.permute.xlu0 %1923
  %1925 = vrot.lane.b32.xlu0 %v1894, 64
  %v1926 = vpop.permute.xlu0 %1925
  %1927 = vrot.lane.b32.xlu0 %v1896, 64
  %v1928 = vpop.permute.xlu0 %1927
  %1929 = vrot.lane.b32.xlu0 %v1898, 64
  %v1930 = vpop.permute.xlu0 %1929
  %1931 = vrot.lane.b32.xlu0 %v1900, 64
  %v1932 = vpop.permute.xlu0 %1931
  %1933 = vrot.lane.b32.xlu0 %v1902, 64
  %v1934 = vpop.permute.xlu0 %1933
  %1935 = vrot.lane.b32.xlu0 %v1904, 64
  %v1936 = vpop.permute.xlu0 %1935
  %1937 = vrot.lane.b32.xlu0 %v1906, 64
  %v1938 = vpop.permute.xlu0 %1937
  %1939 = vrot.lane.b32.xlu0 %v1908, 64
  %v1940 = vpop.permute.xlu0 %1939
  %v1957 = vmul.f32 %v1797, %v1910
  %v1958 = vmul.f32 %v1801, %v1912
  %v1959 = vmul.f32 %v1805, %v1914
  %v1960 = vmul.f32 %v1809, %v1916
  %v1961 = vmul.f32 %v1813, %v1918
  %v1962 = vmul.f32 %v1817, %v1920
  %v1963 = vmul.f32 %v1821, %v1922
  %v1964 = vmul.f32 %v1825, %v1924
  %v1965 = vmul.f32 %v1829, %v1926
  %v1966 = vmul.f32 %v1833, %v1928
  %v1967 = vmul.f32 %v1837, %v1930
  %v1968 = vmul.f32 %v1841, %v1932
  %v1969 = vmul.f32 %v1845, %v1934
  %v1970 = vmul.f32 %v1849, %v1936
  %v1971 = vmul.f32 %v1853, %v1938
  %v1972 = vmul.f32 %v1857, %v1940
  %v1973 = vadd.f32 %v1762, %v1957
  %v1974 = vadd.f32 %v1763, %v1958
  %v1975 = vadd.f32 %v1764, %v1959
  %v1976 = vadd.f32 %v1765, %v1960
  %v1977 = vadd.f32 %v1766, %v1961
  %v1978 = vadd.f32 %v1767, %v1962
  %v1979 = vadd.f32 %v1768, %v1963
  %v1980 = vadd.f32 %v1769, %v1964
  %v1981 = vadd.f32 %v1770, %v1965
  %v1982 = vadd.f32 %v1771, %v1966
  %v1983 = vadd.f32 %v1772, %v1967
  %v1984 = vadd.f32 %v1773, %v1968
  %v1985 = vadd.f32 %v1774, %v1969
  %v1986 = vadd.f32 %v1775, %v1970
  %v1987 = vadd.f32 %v1776, %v1971
  %v1988 = vadd.f32 %v1777, %v1972
  %v1989 = vld [vmem:[#allocation2 + $0x48] sm:$0xfc]
  %v1990 = vld [vmem:[#allocation2 + $0x248] sm:$0x3]
  %1991 = vset.pattern.permute.xlu0 7
  %1992 = vperm.xlu0 %1991, %v704
  %v1993 = vpop.permute.xlu0 %1992
  %1995 = vset.pattern.permute.xlu0 7
  %1996 = vperm.xlu0 %1995, %v705
  %v1997 = vpop.permute.xlu0 %1996
  %1999 = vset.pattern.permute.xlu0 7
  %2000 = vperm.xlu0 %1999, %v706
  %v2001 = vpop.permute.xlu0 %2000
  %2003 = vset.pattern.permute.xlu0 7
  %2004 = vperm.xlu0 %2003, %v707
  %v2005 = vpop.permute.xlu0 %2004
  %2007 = vset.pattern.permute.xlu0 7
  %2008 = vperm.xlu0 %2007, %v708
  %v2009 = vpop.permute.xlu0 %2008
  %2011 = vset.pattern.permute.xlu0 7
  %2012 = vperm.xlu0 %2011, %v709
  %v2013 = vpop.permute.xlu0 %2012
  %2015 = vset.pattern.permute.xlu0 7
  %2016 = vperm.xlu0 %2015, %v710
  %v2017 = vpop.permute.xlu0 %2016
  %2019 = vset.pattern.permute.xlu0 7
  %2020 = vperm.xlu0 %2019, %v711
  %v2021 = vpop.permute.xlu0 %2020
  %2023 = vset.pattern.permute.xlu0 7
  %2024 = vperm.xlu0 %2023, %v712
  %v2025 = vpop.permute.xlu0 %2024
  %2027 = vset.pattern.permute.xlu0 7
  %2028 = vperm.xlu0 %2027, %v713
  %v2029 = vpop.permute.xlu0 %2028
  %2031 = vset.pattern.permute.xlu0 7
  %2032 = vperm.xlu0 %2031, %v714
  %v2033 = vpop.permute.xlu0 %2032
  %2035 = vset.pattern.permute.xlu0 7
  %2036 = vperm.xlu0 %2035, %v715
  %v2037 = vpop.permute.xlu0 %2036
  %2039 = vset.pattern.permute.xlu0 7
  %2040 = vperm.xlu0 %2039, %v716
  %v2041 = vpop.permute.xlu0 %2040
  %2043 = vset.pattern.permute.xlu0 7
  %2044 = vperm.xlu0 %2043, %v717
  %v2045 = vpop.permute.xlu0 %2044
  %2047 = vset.pattern.permute.xlu0 7
  %2048 = vperm.xlu0 %2047, %v718
  %v2049 = vpop.permute.xlu0 %2048
  %2051 = vset.pattern.permute.xlu0 7
  %2052 = vperm.xlu0 %2051, %v719
  %v2053 = vpop.permute.xlu0 %2052
  %v2057 = vrot.slane %v1989, 2
  %v2058 = vrot.slane %v1779, 2
  %v2059 = vsel %vm1324, %v2057, %v2058
  %v2060 = vrot.slane %v1780, 2
  %v2061 = vsel %vm1324, %v2058, %v2060
  %v2062 = vrot.slane %v1781, 2
  %v2063 = vsel %vm1324, %v2060, %v2062
  %v2064 = vrot.slane %v1782, 2
  %v2065 = vsel %vm1324, %v2062, %v2064
  %v2066 = vrot.slane %v1783, 2
  %v2067 = vsel %vm1324, %v2064, %v2066
  %v2068 = vrot.slane %v1784, 2
  %v2069 = vsel %vm1324, %v2066, %v2068
  %v2070 = vrot.slane %v1785, 2
  %v2071 = vsel %vm1324, %v2068, %v2070
  %v2072 = vrot.slane %v1786, 2
  %v2073 = vsel %vm1324, %v2070, %v2072
  %v2074 = vrot.slane %v1787, 2
  %v2075 = vsel %vm1324, %v2072, %v2074
  %v2076 = vrot.slane %v1788, 2
  %v2077 = vsel %vm1324, %v2074, %v2076
  %v2078 = vrot.slane %v1789, 2
  %v2079 = vsel %vm1324, %v2076, %v2078
  %v2080 = vrot.slane %v1790, 2
  %v2081 = vsel %vm1324, %v2078, %v2080
  %v2082 = vrot.slane %v1791, 2
  %v2083 = vsel %vm1324, %v2080, %v2082
  %v2084 = vrot.slane %v1792, 2
  %v2085 = vsel %vm1324, %v2082, %v2084
  %v2086 = vrot.slane %v1793, 2
  %v2087 = vsel %vm1324, %v2084, %v2086
  %v2088 = vrot.slane %v1990, 2
  %v2089 = vsel %vm1324, %v2086, %v2088
  %2090 = vrot.lane.b32.xlu0 %v2059, 32
  %v2091 = vpop.permute.xlu0 %2090
  %2092 = vrot.lane.b32.xlu0 %v2061, 32
  %v2093 = vpop.permute.xlu0 %2092
  %2094 = vrot.lane.b32.xlu0 %v2063, 32
  %v2095 = vpop.permute.xlu0 %2094
  %2096 = vrot.lane.b32.xlu0 %v2065, 32
  %v2097 = vpop.permute.xlu0 %2096
  %2098 = vrot.lane.b32.xlu0 %v2067, 32
  %v2099 = vpop.permute.xlu0 %2098
  %2100 = vrot.lane.b32.xlu0 %v2069, 32
  %v2101 = vpop.permute.xlu0 %2100
  %2102 = vrot.lane.b32.xlu0 %v2071, 32
  %v2103 = vpop.permute.xlu0 %2102
  %2104 = vrot.lane.b32.xlu0 %v2073, 32
  %v2105 = vpop.permute.xlu0 %2104
  %2106 = vrot.lane.b32.xlu0 %v2075, 32
  %v2107 = vpop.permute.xlu0 %2106
  %2108 = vrot.lane.b32.xlu0 %v2077, 32
  %v2109 = vpop.permute.xlu0 %2108
  %2110 = vrot.lane.b32.xlu0 %v2079, 32
  %v2111 = vpop.permute.xlu0 %2110
  %2112 = vrot.lane.b32.xlu0 %v2081, 32
  %v2113 = vpop.permute.xlu0 %2112
  %2114 = vrot.lane.b32.xlu0 %v2083, 32
  %v2115 = vpop.permute.xlu0 %2114
  %2116 = vrot.lane.b32.xlu0 %v2085, 32
  %v2117 = vpop.permute.xlu0 %2116
  %2118 = vrot.lane.b32.xlu0 %v2087, 32
  %v2119 = vpop.permute.xlu0 %2118
  %2120 = vrot.lane.b32.xlu0 %v2089, 32
  %v2121 = vpop.permute.xlu0 %2120
  %v2138 = vmul.f32 %v1993, %v2091
  %v2139 = vmul.f32 %v1997, %v2093
  %v2140 = vmul.f32 %v2001, %v2095
  %v2141 = vmul.f32 %v2005, %v2097
  %v2142 = vmul.f32 %v2009, %v2099
  %v2143 = vmul.f32 %v2013, %v2101
  %v2144 = vmul.f32 %v2017, %v2103
  %v2145 = vmul.f32 %v2021, %v2105
  %v2146 = vmul.f32 %v2025, %v2107
  %v2147 = vmul.f32 %v2029, %v2109
  %v2148 = vmul.f32 %v2033, %v2111
  %v2149 = vmul.f32 %v2037, %v2113
  %v2150 = vmul.f32 %v2041, %v2115
  %v2151 = vmul.f32 %v2045, %v2117
  %v2152 = vmul.f32 %v2049, %v2119
  %v2153 = vmul.f32 %v2053, %v2121
  %v2154 = vadd.f32 %v1973, %v2138
  %v2155 = vadd.f32 %v1974, %v2139
  %v2156 = vadd.f32 %v1975, %v2140
  %v2157 = vadd.f32 %v1976, %v2141
  %v2158 = vadd.f32 %v1977, %v2142
  %v2159 = vadd.f32 %v1978, %v2143
  %v2160 = vadd.f32 %v1979, %v2144
  %v2161 = vadd.f32 %v1980, %v2145
  %v2162 = vadd.f32 %v1981, %v2146
  %v2163 = vadd.f32 %v1982, %v2147
  %v2164 = vadd.f32 %v1983, %v2148
  %v2165 = vadd.f32 %v1984, %v2149
  %v2166 = vadd.f32 %v1985, %v2150
  %v2167 = vadd.f32 %v1986, %v2151
  %v2168 = vadd.f32 %v1987, %v2152
  %v2169 = vadd.f32 %v1988, %v2153
  %v2170 = vld [vmem:[#allocation2 + $0x50] sm:$0x80]
  %v2171 = vld [vmem:[#allocation2 + $0x70] sm:$0xff]
  %v2172 = vld [vmem:[#allocation2 + $0x90] sm:$0xff]
  %v2173 = vld [vmem:[#allocation2 + $0xb0] sm:$0xff]
  %v2174 = vld [vmem:[#allocation2 + $0xd0] sm:$0xff]
  %v2175 = vld [vmem:[#allocation2 + $0xf0] sm:$0xff]
  %v2176 = vld [vmem:[#allocation2 + $0x110] sm:$0xff]
  %v2177 = vld [vmem:[#allocation2 + $0x130] sm:$0xff]
  %v2178 = vld [vmem:[#allocation2 + $0x150] sm:$0xff]
  %v2179 = vld [vmem:[#allocation2 + $0x170] sm:$0xff]
  %v2180 = vld [vmem:[#allocation2 + $0x190] sm:$0xff]
  %v2181 = vld [vmem:[#allocation2 + $0x1b0] sm:$0xff]
  %v2182 = vld [vmem:[#allocation2 + $0x1d0] sm:$0xff]
  %v2183 = vld [vmem:[#allocation2 + $0x1f0] sm:$0xff]
  %v2184 = vld [vmem:[#allocation2 + $0x210] sm:$0xff]
  %v2185 = vld [vmem:[#allocation2 + $0x230] sm:$0xff]
  %v2186 = vld [vmem:[#allocation2 + $0x250] sm:$0x7f]
  %2187 = vset.pattern.permute.xlu0 8
  %2188 = vperm.xlu0 %2187, %v704
  %v2189 = vpop.permute.xlu0 %2188
  %2191 = vset.pattern.permute.xlu0 8
  %2192 = vperm.xlu0 %2191, %v705
  %v2193 = vpop.permute.xlu0 %2192
  %2195 = vset.pattern.permute.xlu0 8
  %2196 = vperm.xlu0 %2195, %v706
  %v2197 = vpop.permute.xlu0 %2196
  %2199 = vset.pattern.permute.xlu0 8
  %2200 = vperm.xlu0 %2199, %v707
  %v2201 = vpop.permute.xlu0 %2200
  %2203 = vset.pattern.permute.xlu0 8
  %2204 = vperm.xlu0 %2203, %v708
  %v2205 = vpop.permute.xlu0 %2204
  %2207 = vset.pattern.permute.xlu0 8
  %2208 = vperm.xlu0 %2207, %v709
  %v2209 = vpop.permute.xlu0 %2208
  %2211 = vset.pattern.permute.xlu0 8
  %2212 = vperm.xlu0 %2211, %v710
  %v2213 = vpop.permute.xlu0 %2212
  %2215 = vset.pattern.permute.xlu0 8
  %2216 = vperm.xlu0 %2215, %v711
  %v2217 = vpop.permute.xlu0 %2216
  %2219 = vset.pattern.permute.xlu0 8
  %2220 = vperm.xlu0 %2219, %v712
  %v2221 = vpop.permute.xlu0 %2220
  %2223 = vset.pattern.permute.xlu0 8
  %2224 = vperm.xlu0 %2223, %v713
  %v2225 = vpop.permute.xlu0 %2224
  %2227 = vset.pattern.permute.xlu0 8
  %2228 = vperm.xlu0 %2227, %v714
  %v2229 = vpop.permute.xlu0 %2228
  %2231 = vset.pattern.permute.xlu0 8
  %2232 = vperm.xlu0 %2231, %v715
  %v2233 = vpop.permute.xlu0 %2232
  %2235 = vset.pattern.permute.xlu0 8
  %2236 = vperm.xlu0 %2235, %v716
  %v2237 = vpop.permute.xlu0 %2236
  %2239 = vset.pattern.permute.xlu0 8
  %2240 = vperm.xlu0 %2239, %v717
  %v2241 = vpop.permute.xlu0 %2240
  %2243 = vset.pattern.permute.xlu0 8
  %2244 = vperm.xlu0 %2243, %v718
  %v2245 = vpop.permute.xlu0 %2244
  %2247 = vset.pattern.permute.xlu0 8
  %2248 = vperm.xlu0 %2247, %v719
  %v2249 = vpop.permute.xlu0 %2248
  %v2268 = vrot.slane %v2170, 7
  %v2269 = vrot.slane %v2171, 7
  %v2270 = vsel %vm817, %v2268, %v2269
  %v2271 = vrot.slane %v2172, 7
  %v2272 = vsel %vm817, %v2269, %v2271
  %v2273 = vrot.slane %v2173, 7
  %v2274 = vsel %vm817, %v2271, %v2273
  %v2275 = vrot.slane %v2174, 7
  %v2276 = vsel %vm817, %v2273, %v2275
  %v2277 = vrot.slane %v2175, 7
  %v2278 = vsel %vm817, %v2275, %v2277
  %v2279 = vrot.slane %v2176, 7
  %v2280 = vsel %vm817, %v2277, %v2279
  %v2281 = vrot.slane %v2177, 7
  %v2282 = vsel %vm817, %v2279, %v2281
  %v2283 = vrot.slane %v2178, 7
  %v2284 = vsel %vm817, %v2281, %v2283
  %v2285 = vrot.slane %v2179, 7
  %v2286 = vsel %vm817, %v2283, %v2285
  %v2287 = vrot.slane %v2180, 7
  %v2288 = vsel %vm817, %v2285, %v2287
  %v2289 = vrot.slane %v2181, 7
  %v2290 = vsel %vm817, %v2287, %v2289
  %v2291 = vrot.slane %v2182, 7
  %v2292 = vsel %vm817, %v2289, %v2291
  %v2293 = vrot.slane %v2183, 7
  %v2294 = vsel %vm817, %v2291, %v2293
  %v2295 = vrot.slane %v2184, 7
  %v2296 = vsel %vm817, %v2293, %v2295
  %v2297 = vrot.slane %v2185, 7
  %v2298 = vsel %vm817, %v2295, %v2297
  %v2299 = vrot.slane %v2186, 7
  %v2300 = vsel %vm817, %v2297, %v2299
  %v2317 = vmul.f32 %v2189, %v2270
  %v2318 = vmul.f32 %v2193, %v2272
  %v2319 = vmul.f32 %v2197, %v2274
  %v2320 = vmul.f32 %v2201, %v2276
  %v2321 = vmul.f32 %v2205, %v2278
  %v2322 = vmul.f32 %v2209, %v2280
  %v2323 = vmul.f32 %v2213, %v2282
  %v2324 = vmul.f32 %v2217, %v2284
  %v2325 = vmul.f32 %v2221, %v2286
  %v2326 = vmul.f32 %v2225, %v2288
  %v2327 = vmul.f32 %v2229, %v2290
  %v2328 = vmul.f32 %v2233, %v2292
  %v2329 = vmul.f32 %v2237, %v2294
  %v2330 = vmul.f32 %v2241, %v2296
  %v2331 = vmul.f32 %v2245, %v2298
  %v2332 = vmul.f32 %v2249, %v2300
  %v2333 = vadd.f32 %v2154, %v2317
  %v2334 = vadd.f32 %v2155, %v2318
  %v2335 = vadd.f32 %v2156, %v2319
  %v2336 = vadd.f32 %v2157, %v2320
  %v2337 = vadd.f32 %v2158, %v2321
  %v2338 = vadd.f32 %v2159, %v2322
  %v2339 = vadd.f32 %v2160, %v2323
  %v2340 = vadd.f32 %v2161, %v2324
  %v2341 = vadd.f32 %v2162, %v2325
  %v2342 = vadd.f32 %v2163, %v2326
  %v2343 = vadd.f32 %v2164, %v2327
  %v2344 = vadd.f32 %v2165, %v2328
  %v2345 = vadd.f32 %v2166, %v2329
  %v2346 = vadd.f32 %v2167, %v2330
  %v2347 = vadd.f32 %v2168, %v2331
  %v2348 = vadd.f32 %v2169, %v2332
  %v2349 = vld [vmem:[#allocation2 + $0x250] sm:$0xff]
  %2350 = vset.pattern.permute.xlu0 9
  %2351 = vperm.xlu0 %2350, %v704
  %v2352 = vpop.permute.xlu0 %2351
  %2354 = vset.pattern.permute.xlu0 9
  %2355 = vperm.xlu0 %2354, %v705
  %v2356 = vpop.permute.xlu0 %2355
  %2358 = vset.pattern.permute.xlu0 9
  %2359 = vperm.xlu0 %2358, %v706
  %v2360 = vpop.permute.xlu0 %2359
  %2362 = vset.pattern.permute.xlu0 9
  %2363 = vperm.xlu0 %2362, %v707
  %v2364 = vpop.permute.xlu0 %2363
  %2366 = vset.pattern.permute.xlu0 9
  %2367 = vperm.xlu0 %2366, %v708
  %v2368 = vpop.permute.xlu0 %2367
  %2370 = vset.pattern.permute.xlu0 9
  %2371 = vperm.xlu0 %2370, %v709
  %v2372 = vpop.permute.xlu0 %2371
  %2374 = vset.pattern.permute.xlu0 9
  %2375 = vperm.xlu0 %2374, %v710
  %v2376 = vpop.permute.xlu0 %2375
  %2378 = vset.pattern.permute.xlu0 9
  %2379 = vperm.xlu0 %2378, %v711
  %v2380 = vpop.permute.xlu0 %2379
  %2382 = vset.pattern.permute.xlu0 9
  %2383 = vperm.xlu0 %2382, %v712
  %v2384 = vpop.permute.xlu0 %2383
  %2386 = vset.pattern.permute.xlu0 9
  %2387 = vperm.xlu0 %2386, %v713
  %v2388 = vpop.permute.xlu0 %2387
  %2390 = vset.pattern.permute.xlu0 9
  %2391 = vperm.xlu0 %2390, %v714
  %v2392 = vpop.permute.xlu0 %2391
  %2394 = vset.pattern.permute.xlu0 9
  %2395 = vperm.xlu0 %2394, %v715
  %v2396 = vpop.permute.xlu0 %2395
  %2398 = vset.pattern.permute.xlu0 9
  %2399 = vperm.xlu0 %2398, %v716
  %v2400 = vpop.permute.xlu0 %2399
  %2402 = vset.pattern.permute.xlu0 9
  %2403 = vperm.xlu0 %2402, %v717
  %v2404 = vpop.permute.xlu0 %2403
  %2406 = vset.pattern.permute.xlu0 9
  %2407 = vperm.xlu0 %2406, %v718
  %v2408 = vpop.permute.xlu0 %2407
  %2410 = vset.pattern.permute.xlu0 9
  %2411 = vperm.xlu0 %2410, %v719
  %v2412 = vpop.permute.xlu0 %2411
  %v2414 = vmul.f32 %v2352, %v2171
  %v2415 = vmul.f32 %v2356, %v2172
  %v2416 = vmul.f32 %v2360, %v2173
  %v2417 = vmul.f32 %v2364, %v2174
  %v2418 = vmul.f32 %v2368, %v2175
  %v2419 = vmul.f32 %v2372, %v2176
  %v2420 = vmul.f32 %v2376, %v2177
  %v2421 = vmul.f32 %v2380, %v2178
  %v2422 = vmul.f32 %v2384, %v2179
  %v2423 = vmul.f32 %v2388, %v2180
  %v2424 = vmul.f32 %v2392, %v2181
  %v2425 = vmul.f32 %v2396, %v2182
  %v2426 = vmul.f32 %v2400, %v2183
  %v2427 = vmul.f32 %v2404, %v2184
  %v2428 = vmul.f32 %v2408, %v2185
  %v2429 = vmul.f32 %v2412, %v2349
  %2446 = vrot.lane.b32.xlu0 %v2414, 96
  %v2447 = vpop.permute.xlu0 %2446
  %2448 = vrot.lane.b32.xlu0 %v2415, 96
  %v2449 = vpop.permute.xlu0 %2448
  %2450 = vrot.lane.b32.xlu0 %v2416, 96
  %v2451 = vpop.permute.xlu0 %2450
  %2452 = vrot.lane.b32.xlu0 %v2417, 96
  %v2453 = vpop.permute.xlu0 %2452
  %2454 = vrot.lane.b32.xlu0 %v2418, 96
  %v2455 = vpop.permute.xlu0 %2454
  %2456 = vrot.lane.b32.xlu0 %v2419, 96
  %v2457 = vpop.permute.xlu0 %2456
  %2458 = vrot.lane.b32.xlu0 %v2420, 96
  %v2459 = vpop.permute.xlu0 %2458
  %2460 = vrot.lane.b32.xlu0 %v2421, 96
  %v2461 = vpop.permute.xlu0 %2460
  %2462 = vrot.lane.b32.xlu0 %v2422, 96
  %v2463 = vpop.permute.xlu0 %2462
  %2464 = vrot.lane.b32.xlu0 %v2423, 96
  %v2465 = vpop.permute.xlu0 %2464
  %2466 = vrot.lane.b32.xlu0 %v2424, 96
  %v2467 = vpop.permute.xlu0 %2466
  %2468 = vrot.lane.b32.xlu0 %v2425, 96
  %v2469 = vpop.permute.xlu0 %2468
  %2470 = vrot.lane.b32.xlu0 %v2426, 96
  %v2471 = vpop.permute.xlu0 %2470
  %2472 = vrot.lane.b32.xlu0 %v2427, 96
  %v2473 = vpop.permute.xlu0 %2472
  %2474 = vrot.lane.b32.xlu0 %v2428, 96
  %v2475 = vpop.permute.xlu0 %2474
  %2476 = vrot.lane.b32.xlu0 %v2429, 96
  %v2477 = vpop.permute.xlu0 %2476
  %v2494 = vadd.f32 %v2333, %v2447
  %v2495 = vadd.f32 %v2334, %v2449
  %v2496 = vadd.f32 %v2335, %v2451
  %v2497 = vadd.f32 %v2336, %v2453
  %v2498 = vadd.f32 %v2337, %v2455
  %v2499 = vadd.f32 %v2338, %v2457
  %v2500 = vadd.f32 %v2339, %v2459
  %v2501 = vadd.f32 %v2340, %v2461
  %v2502 = vadd.f32 %v2341, %v2463
  %v2503 = vadd.f32 %v2342, %v2465
  %v2504 = vadd.f32 %v2343, %v2467
  %v2505 = vadd.f32 %v2344, %v2469
  %v2506 = vadd.f32 %v2345, %v2471
  %v2507 = vadd.f32 %v2346, %v2473
  %v2508 = vadd.f32 %v2347, %v2475
  %v2509 = vadd.f32 %v2348, %v2477
  %v2510 = vld [vmem:[#allocation2 + $0x70] sm:$0xfe]
  %v2511 = vld [vmem:[#allocation2 + $0x90] sm:$0xff]
  %v2512 = vld [vmem:[#allocation2 + $0xb0] sm:$0xff]
  %v2513 = vld [vmem:[#allocation2 + $0xd0] sm:$0xff]
  %v2514 = vld [vmem:[#allocation2 + $0xf0] sm:$0xff]
  %v2515 = vld [vmem:[#allocation2 + $0x110] sm:$0xff]
  %v2516 = vld [vmem:[#allocation2 + $0x130] sm:$0xff]
  %v2517 = vld [vmem:[#allocation2 + $0x150] sm:$0xff]
  %v2518 = vld [vmem:[#allocation2 + $0x170] sm:$0xff]
  %v2519 = vld [vmem:[#allocation2 + $0x190] sm:$0xff]
  %v2520 = vld [vmem:[#allocation2 + $0x1b0] sm:$0xff]
  %v2521 = vld [vmem:[#allocation2 + $0x1d0] sm:$0xff]
  %v2522 = vld [vmem:[#allocation2 + $0x1f0] sm:$0xff]
  %v2523 = vld [vmem:[#allocation2 + $0x210] sm:$0xff]
  %v2524 = vld [vmem:[#allocation2 + $0x230] sm:$0xff]
  %v2525 = vld [vmem:[#allocation2 + $0x250] sm:$0xff]
  %v2526 = vld [vmem:[#allocation2 + $0x270] sm:$0x1]
  %2527 = vset.pattern.permute.xlu0 10
  %2528 = vperm.xlu0 %2527, %v704
  %v2529 = vpop.permute.xlu0 %2528
  %2531 = vset.pattern.permute.xlu0 10
  %2532 = vperm.xlu0 %2531, %v705
  %v2533 = vpop.permute.xlu0 %2532
  %2535 = vset.pattern.permute.xlu0 10
  %2536 = vperm.xlu0 %2535, %v706
  %v2537 = vpop.permute.xlu0 %2536
  %2539 = vset.pattern.permute.xlu0 10
  %2540 = vperm.xlu0 %2539, %v707
  %v2541 = vpop.permute.xlu0 %2540
  %2543 = vset.pattern.permute.xlu0 10
  %2544 = vperm.xlu0 %2543, %v708
  %v2545 = vpop.permute.xlu0 %2544
  %2547 = vset.pattern.permute.xlu0 10
  %2548 = vperm.xlu0 %2547, %v709
  %v2549 = vpop.permute.xlu0 %2548
  %2551 = vset.pattern.permute.xlu0 10
  %2552 = vperm.xlu0 %2551, %v710
  %v2553 = vpop.permute.xlu0 %2552
  %2555 = vset.pattern.permute.xlu0 10
  %2556 = vperm.xlu0 %2555, %v711
  %v2557 = vpop.permute.xlu0 %2556
  %2559 = vset.pattern.permute.xlu0 10
  %2560 = vperm.xlu0 %2559, %v712
  %v2561 = vpop.permute.xlu0 %2560
  %2563 = vset.pattern.permute.xlu0 10
  %2564 = vperm.xlu0 %2563, %v713
  %v2565 = vpop.permute.xlu0 %2564
  %2567 = vset.pattern.permute.xlu0 10
  %2568 = vperm.xlu0 %2567, %v714
  %v2569 = vpop.permute.xlu0 %2568
  %2571 = vset.pattern.permute.xlu0 10
  %2572 = vperm.xlu0 %2571, %v715
  %v2573 = vpop.permute.xlu0 %2572
  %2575 = vset.pattern.permute.xlu0 10
  %2576 = vperm.xlu0 %2575, %v716
  %v2577 = vpop.permute.xlu0 %2576
  %2579 = vset.pattern.permute.xlu0 10
  %2580 = vperm.xlu0 %2579, %v717
  %v2581 = vpop.permute.xlu0 %2580
  %2583 = vset.pattern.permute.xlu0 10
  %2584 = vperm.xlu0 %2583, %v718
  %v2585 = vpop.permute.xlu0 %2584
  %2587 = vset.pattern.permute.xlu0 10
  %2588 = vperm.xlu0 %2587, %v719
  %v2589 = vpop.permute.xlu0 %2588
  %v2608 = vrot.slane %v2510, 1
  %v2609 = vrot.slane %v2511, 1
  %v2610 = vsel %vm1142, %v2608, %v2609
  %v2611 = vrot.slane %v2512, 1
  %v2612 = vsel %vm1142, %v2609, %v2611
  %v2613 = vrot.slane %v2513, 1
  %v2614 = vsel %vm1142, %v2611, %v2613
  %v2615 = vrot.slane %v2514, 1
  %v2616 = vsel %vm1142, %v2613, %v2615
  %v2617 = vrot.slane %v2515, 1
  %v2618 = vsel %vm1142, %v2615, %v2617
  %v2619 = vrot.slane %v2516, 1
  %v2620 = vsel %vm1142, %v2617, %v2619
  %v2621 = vrot.slane %v2517, 1
  %v2622 = vsel %vm1142, %v2619, %v2621
  %v2623 = vrot.slane %v2518, 1
  %v2624 = vsel %vm1142, %v2621, %v2623
  %v2625 = vrot.slane %v2519, 1
  %v2626 = vsel %vm1142, %v2623, %v2625
  %v2627 = vrot.slane %v2520, 1
  %v2628 = vsel %vm1142, %v2625, %v2627
  %v2629 = vrot.slane %v2521, 1
  %v2630 = vsel %vm1142, %v2627, %v2629
  %v2631 = vrot.slane %v2522, 1
  %v2632 = vsel %vm1142, %v2629, %v2631
  %v2633 = vrot.slane %v2523, 1
  %v2634 = vsel %vm1142, %v2631, %v2633
  %v2635 = vrot.slane %v2524, 1
  %v2636 = vsel %vm1142, %v2633, %v2635
  %v2637 = vrot.slane %v2525, 1
  %v2638 = vsel %vm1142, %v2635, %v2637
  %v2639 = vrot.slane %v2526, 1
  %v2640 = vsel %vm1142, %v2637, %v2639
  %2641 = vrot.lane.b32.xlu0 %v2610, 64
  %v2642 = vpop.permute.xlu0 %2641
  %2643 = vrot.lane.b32.xlu0 %v2612, 64
  %v2644 = vpop.permute.xlu0 %2643
  %2645 = vrot.lane.b32.xlu0 %v2614, 64
  %v2646 = vpop.permute.xlu0 %2645
  %2647 = vrot.lane.b32.xlu0 %v2616, 64
  %v2648 = vpop.permute.xlu0 %2647
  %2649 = vrot.lane.b32.xlu0 %v2618, 64
  %v2650 = vpop.permute.xlu0 %2649
  %2651 = vrot.lane.b32.xlu0 %v2620, 64
  %v2652 = vpop.permute.xlu0 %2651
  %2653 = vrot.lane.b32.xlu0 %v2622, 64
  %v2654 = vpop.permute.xlu0 %2653
  %2655 = vrot.lane.b32.xlu0 %v2624, 64
  %v2656 = vpop.permute.xlu0 %2655
  %2657 = vrot.lane.b32.xlu0 %v2626, 64
  %v2658 = vpop.permute.xlu0 %2657
  %2659 = vrot.lane.b32.xlu0 %v2628, 64
  %v2660 = vpop.permute.xlu0 %2659
  %2661 = vrot.lane.b32.xlu0 %v2630, 64
  %v2662 = vpop.permute.xlu0 %2661
  %2663 = vrot.lane.b32.xlu0 %v2632, 64
  %v2664 = vpop.permute.xlu0 %2663
  %2665 = vrot.lane.b32.xlu0 %v2634, 64
  %v2666 = vpop.permute.xlu0 %2665
  %2667 = vrot.lane.b32.xlu0 %v2636, 64
  %v2668 = vpop.permute.xlu0 %2667
  %2669 = vrot.lane.b32.xlu0 %v2638, 64
  %v2670 = vpop.permute.xlu0 %2669
  %2671 = vrot.lane.b32.xlu0 %v2640, 64
  %v2672 = vpop.permute.xlu0 %2671
  %v2689 = vmul.f32 %v2529, %v2642
  %v2690 = vmul.f32 %v2533, %v2644
  %v2691 = vmul.f32 %v2537, %v2646
  %v2692 = vmul.f32 %v2541, %v2648
  %v2693 = vmul.f32 %v2545, %v2650
  %v2694 = vmul.f32 %v2549, %v2652
  %v2695 = vmul.f32 %v2553, %v2654
  %v2696 = vmul.f32 %v2557, %v2656
  %v2697 = vmul.f32 %v2561, %v2658
  %v2698 = vmul.f32 %v2565, %v2660
  %v2699 = vmul.f32 %v2569, %v2662
  %v2700 = vmul.f32 %v2573, %v2664
  %v2701 = vmul.f32 %v2577, %v2666
  %v2702 = vmul.f32 %v2581, %v2668
  %v2703 = vmul.f32 %v2585, %v2670
  %v2704 = vmul.f32 %v2589, %v2672
  %v2705 = vadd.f32 %v2494, %v2689
  %v2706 = vadd.f32 %v2495, %v2690
  %v2707 = vadd.f32 %v2496, %v2691
  %v2708 = vadd.f32 %v2497, %v2692
  %v2709 = vadd.f32 %v2498, %v2693
  %v2710 = vadd.f32 %v2499, %v2694
  %v2711 = vadd.f32 %v2500, %v2695
  %v2712 = vadd.f32 %v2501, %v2696
  %v2713 = vadd.f32 %v2502, %v2697
  %v2714 = vadd.f32 %v2503, %v2698
  %v2715 = vadd.f32 %v2504, %v2699
  %v2716 = vadd.f32 %v2505, %v2700
  %v2717 = vadd.f32 %v2506, %v2701
  %v2718 = vadd.f32 %v2507, %v2702
  %v2719 = vadd.f32 %v2508, %v2703
  %v2720 = vadd.f32 %v2509, %v2704
  %v2721 = vld [vmem:[#allocation2 + $0x70] sm:$0xfc]
  %v2722 = vld [vmem:[#allocation2 + $0x270] sm:$0x3]
  %2723 = vset.pattern.permute.xlu0 11
  %2724 = vperm.xlu0 %2723, %v704
  %v2725 = vpop.permute.xlu0 %2724
  %2727 = vset.pattern.permute.xlu0 11
  %2728 = vperm.xlu0 %2727, %v705
  %v2729 = vpop.permute.xlu0 %2728
  %2731 = vset.pattern.permute.xlu0 11
  %2732 = vperm.xlu0 %2731, %v706
  %v2733 = vpop.permute.xlu0 %2732
  %2735 = vset.pattern.permute.xlu0 11
  %2736 = vperm.xlu0 %2735, %v707
  %v2737 = vpop.permute.xlu0 %2736
  %2739 = vset.pattern.permute.xlu0 11
  %2740 = vperm.xlu0 %2739, %v708
  %v2741 = vpop.permute.xlu0 %2740
  %2743 = vset.pattern.permute.xlu0 11
  %2744 = vperm.xlu0 %2743, %v709
  %v2745 = vpop.permute.xlu0 %2744
  %2747 = vset.pattern.permute.xlu0 11
  %2748 = vperm.xlu0 %2747, %v710
  %v2749 = vpop.permute.xlu0 %2748
  %2751 = vset.pattern.permute.xlu0 11
  %2752 = vperm.xlu0 %2751, %v711
  %v2753 = vpop.permute.xlu0 %2752
  %2755 = vset.pattern.permute.xlu0 11
  %2756 = vperm.xlu0 %2755, %v712
  %v2757 = vpop.permute.xlu0 %2756
  %2759 = vset.pattern.permute.xlu0 11
  %2760 = vperm.xlu0 %2759, %v713
  %v2761 = vpop.permute.xlu0 %2760
  %2763 = vset.pattern.permute.xlu0 11
  %2764 = vperm.xlu0 %2763, %v714
  %v2765 = vpop.permute.xlu0 %2764
  %2767 = vset.pattern.permute.xlu0 11
  %2768 = vperm.xlu0 %2767, %v715
  %v2769 = vpop.permute.xlu0 %2768
  %2771 = vset.pattern.permute.xlu0 11
  %2772 = vperm.xlu0 %2771, %v716
  %v2773 = vpop.permute.xlu0 %2772
  %2775 = vset.pattern.permute.xlu0 11
  %2776 = vperm.xlu0 %2775, %v717
  %v2777 = vpop.permute.xlu0 %2776
  %2779 = vset.pattern.permute.xlu0 11
  %2780 = vperm.xlu0 %2779, %v718
  %v2781 = vpop.permute.xlu0 %2780
  %2783 = vset.pattern.permute.xlu0 11
  %2784 = vperm.xlu0 %2783, %v719
  %v2785 = vpop.permute.xlu0 %2784
  %v2789 = vrot.slane %v2721, 2
  %v2790 = vrot.slane %v2511, 2
  %v2791 = vsel %vm1324, %v2789, %v2790
  %v2792 = vrot.slane %v2512, 2
  %v2793 = vsel %vm1324, %v2790, %v2792
  %v2794 = vrot.slane %v2513, 2
  %v2795 = vsel %vm1324, %v2792, %v2794
  %v2796 = vrot.slane %v2514, 2
  %v2797 = vsel %vm1324, %v2794, %v2796
  %v2798 = vrot.slane %v2515, 2
  %v2799 = vsel %vm1324, %v2796, %v2798
  %v2800 = vrot.slane %v2516, 2
  %v2801 = vsel %vm1324, %v2798, %v2800
  %v2802 = vrot.slane %v2517, 2
  %v2803 = vsel %vm1324, %v2800, %v2802
  %v2804 = vrot.slane %v2518, 2
  %v2805 = vsel %vm1324, %v2802, %v2804
  %v2806 = vrot.slane %v2519, 2
  %v2807 = vsel %vm1324, %v2804, %v2806
  %v2808 = vrot.slane %v2520, 2
  %v2809 = vsel %vm1324, %v2806, %v2808
  %v2810 = vrot.slane %v2521, 2
  %v2811 = vsel %vm1324, %v2808, %v2810
  %v2812 = vrot.slane %v2522, 2
  %v2813 = vsel %vm1324, %v2810, %v2812
  %v2814 = vrot.slane %v2523, 2
  %v2815 = vsel %vm1324, %v2812, %v2814
  %v2816 = vrot.slane %v2524, 2
  %v2817 = vsel %vm1324, %v2814, %v2816
  %v2818 = vrot.slane %v2525, 2
  %v2819 = vsel %vm1324, %v2816, %v2818
  %v2820 = vrot.slane %v2722, 2
  %v2821 = vsel %vm1324, %v2818, %v2820
  %2822 = vrot.lane.b32.xlu0 %v2791, 32
  %v2823 = vpop.permute.xlu0 %2822
  %2824 = vrot.lane.b32.xlu0 %v2793, 32
  %v2825 = vpop.permute.xlu0 %2824
  %2826 = vrot.lane.b32.xlu0 %v2795, 32
  %v2827 = vpop.permute.xlu0 %2826
  %2828 = vrot.lane.b32.xlu0 %v2797, 32
  %v2829 = vpop.permute.xlu0 %2828
  %2830 = vrot.lane.b32.xlu0 %v2799, 32
  %v2831 = vpop.permute.xlu0 %2830
  %2832 = vrot.lane.b32.xlu0 %v2801, 32
  %v2833 = vpop.permute.xlu0 %2832
  %2834 = vrot.lane.b32.xlu0 %v2803, 32
  %v2835 = vpop.permute.xlu0 %2834
  %2836 = vrot.lane.b32.xlu0 %v2805, 32
  %v2837 = vpop.permute.xlu0 %2836
  %2838 = vrot.lane.b32.xlu0 %v2807, 32
  %v2839 = vpop.permute.xlu0 %2838
  %2840 = vrot.lane.b32.xlu0 %v2809, 32
  %v2841 = vpop.permute.xlu0 %2840
  %2842 = vrot.lane.b32.xlu0 %v2811, 32
  %v2843 = vpop.permute.xlu0 %2842
  %2844 = vrot.lane.b32.xlu0 %v2813, 32
  %v2845 = vpop.permute.xlu0 %2844
  %2846 = vrot.lane.b32.xlu0 %v2815, 32
  %v2847 = vpop.permute.xlu0 %2846
  %2848 = vrot.lane.b32.xlu0 %v2817, 32
  %v2849 = vpop.permute.xlu0 %2848
  %2850 = vrot.lane.b32.xlu0 %v2819, 32
  %v2851 = vpop.permute.xlu0 %2850
  %2852 = vrot.lane.b32.xlu0 %v2821, 32
  %v2853 = vpop.permute.xlu0 %2852
  %v2870 = vmul.f32 %v2725, %v2823
  %v2871 = vmul.f32 %v2729, %v2825
  %v2872 = vmul.f32 %v2733, %v2827
  %v2873 = vmul.f32 %v2737, %v2829
  %v2874 = vmul.f32 %v2741, %v2831
  %v2875 = vmul.f32 %v2745, %v2833
  %v2876 = vmul.f32 %v2749, %v2835
  %v2877 = vmul.f32 %v2753, %v2837
  %v2878 = vmul.f32 %v2757, %v2839
  %v2879 = vmul.f32 %v2761, %v2841
  %v2880 = vmul.f32 %v2765, %v2843
  %v2881 = vmul.f32 %v2769, %v2845
  %v2882 = vmul.f32 %v2773, %v2847
  %v2883 = vmul.f32 %v2777, %v2849
  %v2884 = vmul.f32 %v2781, %v2851
  %v2885 = vmul.f32 %v2785, %v2853
  %v2886 = vadd.f32 %v2705, %v2870
  %v2887 = vadd.f32 %v2706, %v2871
  %v2888 = vadd.f32 %v2707, %v2872
  %v2889 = vadd.f32 %v2708, %v2873
  %v2890 = vadd.f32 %v2709, %v2874
  %v2891 = vadd.f32 %v2710, %v2875
  %v2892 = vadd.f32 %v2711, %v2876
  %v2893 = vadd.f32 %v2712, %v2877
  %v2894 = vadd.f32 %v2713, %v2878
  %v2895 = vadd.f32 %v2714, %v2879
  %v2896 = vadd.f32 %v2715, %v2880
  %v2897 = vadd.f32 %v2716, %v2881
  %v2898 = vadd.f32 %v2717, %v2882
  %v2899 = vadd.f32 %v2718, %v2883
  %v2900 = vadd.f32 %v2719, %v2884
  %v2901 = vadd.f32 %v2720, %v2885
  %v2902 = vld [vmem:[#allocation2 + $0x78] sm:$0x80]
  %v2903 = vld [vmem:[#allocation2 + $0x98] sm:$0xff]
  %v2904 = vld [vmem:[#allocation2 + $0xb8] sm:$0xff]
  %v2905 = vld [vmem:[#allocation2 + $0xd8] sm:$0xff]
  %v2906 = vld [vmem:[#allocation2 + $0xf8] sm:$0xff]
  %v2907 = vld [vmem:[#allocation2 + $0x118] sm:$0xff]
  %v2908 = vld [vmem:[#allocation2 + $0x138] sm:$0xff]
  %v2909 = vld [vmem:[#allocation2 + $0x158] sm:$0xff]
  %v2910 = vld [vmem:[#allocation2 + $0x178] sm:$0xff]
  %v2911 = vld [vmem:[#allocation2 + $0x198] sm:$0xff]
  %v2912 = vld [vmem:[#allocation2 + $0x1b8] sm:$0xff]
  %v2913 = vld [vmem:[#allocation2 + $0x1d8] sm:$0xff]
  %v2914 = vld [vmem:[#allocation2 + $0x1f8] sm:$0xff]
  %v2915 = vld [vmem:[#allocation2 + $0x218] sm:$0xff]
  %v2916 = vld [vmem:[#allocation2 + $0x238] sm:$0xff]
  %v2917 = vld [vmem:[#allocation2 + $0x258] sm:$0xff]
  %v2918 = vld [vmem:[#allocation2 + $0x278] sm:$0x7f]
  %2919 = vset.pattern.permute.xlu0 12
  %2920 = vperm.xlu0 %2919, %v704
  %v2921 = vpop.permute.xlu0 %2920
  %2923 = vset.pattern.permute.xlu0 12
  %2924 = vperm.xlu0 %2923, %v705
  %v2925 = vpop.permute.xlu0 %2924
  %2927 = vset.pattern.permute.xlu0 12
  %2928 = vperm.xlu0 %2927, %v706
  %v2929 = vpop.permute.xlu0 %2928
  %2931 = vset.pattern.permute.xlu0 12
  %2932 = vperm.xlu0 %2931, %v707
  %v2933 = vpop.permute.xlu0 %2932
  %2935 = vset.pattern.permute.xlu0 12
  %2936 = vperm.xlu0 %2935, %v708
  %v2937 = vpop.permute.xlu0 %2936
  %2939 = vset.pattern.permute.xlu0 12
  %2940 = vperm.xlu0 %2939, %v709
  %v2941 = vpop.permute.xlu0 %2940
  %2943 = vset.pattern.permute.xlu0 12
  %2944 = vperm.xlu0 %2943, %v710
  %v2945 = vpop.permute.xlu0 %2944
  %2947 = vset.pattern.permute.xlu0 12
  %2948 = vperm.xlu0 %2947, %v711
  %v2949 = vpop.permute.xlu0 %2948
  %2951 = vset.pattern.permute.xlu0 12
  %2952 = vperm.xlu0 %2951, %v712
  %v2953 = vpop.permute.xlu0 %2952
  %2955 = vset.pattern.permute.xlu0 12
  %2956 = vperm.xlu0 %2955, %v713
  %v2957 = vpop.permute.xlu0 %2956
  %2959 = vset.pattern.permute.xlu0 12
  %2960 = vperm.xlu0 %2959, %v714
  %v2961 = vpop.permute.xlu0 %2960
  %2963 = vset.pattern.permute.xlu0 12
  %2964 = vperm.xlu0 %2963, %v715
  %v2965 = vpop.permute.xlu0 %2964
  %2967 = vset.pattern.permute.xlu0 12
  %2968 = vperm.xlu0 %2967, %v716
  %v2969 = vpop.permute.xlu0 %2968
  %2971 = vset.pattern.permute.xlu0 12
  %2972 = vperm.xlu0 %2971, %v717
  %v2973 = vpop.permute.xlu0 %2972
  %2975 = vset.pattern.permute.xlu0 12
  %2976 = vperm.xlu0 %2975, %v718
  %v2977 = vpop.permute.xlu0 %2976
  %2979 = vset.pattern.permute.xlu0 12
  %2980 = vperm.xlu0 %2979, %v719
  %v2981 = vpop.permute.xlu0 %2980
  %v3000 = vrot.slane %v2902, 7
  %v3001 = vrot.slane %v2903, 7
  %v3002 = vsel %vm817, %v3000, %v3001
  %v3003 = vrot.slane %v2904, 7
  %v3004 = vsel %vm817, %v3001, %v3003
  %v3005 = vrot.slane %v2905, 7
  %v3006 = vsel %vm817, %v3003, %v3005
  %v3007 = vrot.slane %v2906, 7
  %v3008 = vsel %vm817, %v3005, %v3007
  %v3009 = vrot.slane %v2907, 7
  %v3010 = vsel %vm817, %v3007, %v3009
  %v3011 = vrot.slane %v2908, 7
  %v3012 = vsel %vm817, %v3009, %v3011
  %v3013 = vrot.slane %v2909, 7
  %v3014 = vsel %vm817, %v3011, %v3013
  %v3015 = vrot.slane %v2910, 7
  %v3016 = vsel %vm817, %v3013, %v3015
  %v3017 = vrot.slane %v2911, 7
  %v3018 = vsel %vm817, %v3015, %v3017
  %v3019 = vrot.slane %v2912, 7
  %v3020 = vsel %vm817, %v3017, %v3019
  %v3021 = vrot.slane %v2913, 7
  %v3022 = vsel %vm817, %v3019, %v3021
  %v3023 = vrot.slane %v2914, 7
  %v3024 = vsel %vm817, %v3021, %v3023
  %v3025 = vrot.slane %v2915, 7
  %v3026 = vsel %vm817, %v3023, %v3025
  %v3027 = vrot.slane %v2916, 7
  %v3028 = vsel %vm817, %v3025, %v3027
  %v3029 = vrot.slane %v2917, 7
  %v3030 = vsel %vm817, %v3027, %v3029
  %v3031 = vrot.slane %v2918, 7
  %v3032 = vsel %vm817, %v3029, %v3031
  %v3049 = vmul.f32 %v2921, %v3002
  %v3050 = vmul.f32 %v2925, %v3004
  %v3051 = vmul.f32 %v2929, %v3006
  %v3052 = vmul.f32 %v2933, %v3008
  %v3053 = vmul.f32 %v2937, %v3010
  %v3054 = vmul.f32 %v2941, %v3012
  %v3055 = vmul.f32 %v2945, %v3014
  %v3056 = vmul.f32 %v2949, %v3016
  %v3057 = vmul.f32 %v2953, %v3018
  %v3058 = vmul.f32 %v2957, %v3020
  %v3059 = vmul.f32 %v2961, %v3022
  %v3060 = vmul.f32 %v2965, %v3024
  %v3061 = vmul.f32 %v2969, %v3026
  %v3062 = vmul.f32 %v2973, %v3028
  %v3063 = vmul.f32 %v2977, %v3030
  %v3064 = vmul.f32 %v2981, %v3032
  %v3065 = vadd.f32 %v2886, %v3049
  %v3066 = vadd.f32 %v2887, %v3050
  %v3067 = vadd.f32 %v2888, %v3051
  %v3068 = vadd.f32 %v2889, %v3052
  %v3069 = vadd.f32 %v2890, %v3053
  %v3070 = vadd.f32 %v2891, %v3054
  %v3071 = vadd.f32 %v2892, %v3055
  %v3072 = vadd.f32 %v2893, %v3056
  %v3073 = vadd.f32 %v2894, %v3057
  %v3074 = vadd.f32 %v2895, %v3058
  %v3075 = vadd.f32 %v2896, %v3059
  %v3076 = vadd.f32 %v2897, %v3060
  %v3077 = vadd.f32 %v2898, %v3061
  %v3078 = vadd.f32 %v2899, %v3062
  %v3079 = vadd.f32 %v2900, %v3063
  %v3080 = vadd.f32 %v2901, %v3064
  %v3081 = vld [vmem:[#allocation2 + $0x278] sm:$0xff]
  %3082 = vset.pattern.permute.xlu0 13
  %3083 = vperm.xlu0 %3082, %v704
  %v3084 = vpop.permute.xlu0 %3083
  %3086 = vset.pattern.permute.xlu0 13
  %3087 = vperm.xlu0 %3086, %v705
  %v3088 = vpop.permute.xlu0 %3087
  %3090 = vset.pattern.permute.xlu0 13
  %3091 = vperm.xlu0 %3090, %v706
  %v3092 = vpop.permute.xlu0 %3091
  %3094 = vset.pattern.permute.xlu0 13
  %3095 = vperm.xlu0 %3094, %v707
  %v3096 = vpop.permute.xlu0 %3095
  %3098 = vset.pattern.permute.xlu0 13
  %3099 = vperm.xlu0 %3098, %v708
  %v3100 = vpop.permute.xlu0 %3099
  %3102 = vset.pattern.permute.xlu0 13
  %3103 = vperm.xlu0 %3102, %v709
  %v3104 = vpop.permute.xlu0 %3103
  %3106 = vset.pattern.permute.xlu0 13
  %3107 = vperm.xlu0 %3106, %v710
  %v3108 = vpop.permute.xlu0 %3107
  %3110 = vset.pattern.permute.xlu0 13
  %3111 = vperm.xlu0 %3110, %v711
  %v3112 = vpop.permute.xlu0 %3111
  %3114 = vset.pattern.permute.xlu0 13
  %3115 = vperm.xlu0 %3114, %v712
  %v3116 = vpop.permute.xlu0 %3115
  %3118 = vset.pattern.permute.xlu0 13
  %3119 = vperm.xlu0 %3118, %v713
  %v3120 = vpop.permute.xlu0 %3119
  %3122 = vset.pattern.permute.xlu0 13
  %3123 = vperm.xlu0 %3122, %v714
  %v3124 = vpop.permute.xlu0 %3123
  %3126 = vset.pattern.permute.xlu0 13
  %3127 = vperm.xlu0 %3126, %v715
  %v3128 = vpop.permute.xlu0 %3127
  %3130 = vset.pattern.permute.xlu0 13
  %3131 = vperm.xlu0 %3130, %v716
  %v3132 = vpop.permute.xlu0 %3131
  %3134 = vset.pattern.permute.xlu0 13
  %3135 = vperm.xlu0 %3134, %v717
  %v3136 = vpop.permute.xlu0 %3135
  %3138 = vset.pattern.permute.xlu0 13
  %3139 = vperm.xlu0 %3138, %v718
  %v3140 = vpop.permute.xlu0 %3139
  %3142 = vset.pattern.permute.xlu0 13
  %3143 = vperm.xlu0 %3142, %v719
  %v3144 = vpop.permute.xlu0 %3143
  %v3146 = vmul.f32 %v3084, %v2903
  %v3147 = vmul.f32 %v3088, %v2904
  %v3148 = vmul.f32 %v3092, %v2905
  %v3149 = vmul.f32 %v3096, %v2906
  %v3150 = vmul.f32 %v3100, %v2907
  %v3151 = vmul.f32 %v3104, %v2908
  %v3152 = vmul.f32 %v3108, %v2909
  %v3153 = vmul.f32 %v3112, %v2910
  %v3154 = vmul.f32 %v3116, %v2911
  %v3155 = vmul.f32 %v3120, %v2912
  %v3156 = vmul.f32 %v3124, %v2913
  %v3157 = vmul.f32 %v3128, %v2914
  %v3158 = vmul.f32 %v3132, %v2915
  %v3159 = vmul.f32 %v3136, %v2916
  %v3160 = vmul.f32 %v3140, %v2917
  %v3161 = vmul.f32 %v3144, %v3081
  %3178 = vrot.lane.b32.xlu0 %v3146, 96
  %v3179 = vpop.permute.xlu0 %3178
  %3180 = vrot.lane.b32.xlu0 %v3147, 96
  %v3181 = vpop.permute.xlu0 %3180
  %3182 = vrot.lane.b32.xlu0 %v3148, 96
  %v3183 = vpop.permute.xlu0 %3182
  %3184 = vrot.lane.b32.xlu0 %v3149, 96
  %v3185 = vpop.permute.xlu0 %3184
  %3186 = vrot.lane.b32.xlu0 %v3150, 96
  %v3187 = vpop.permute.xlu0 %3186
  %3188 = vrot.lane.b32.xlu0 %v3151, 96
  %v3189 = vpop.permute.xlu0 %3188
  %3190 = vrot.lane.b32.xlu0 %v3152, 96
  %v3191 = vpop.permute.xlu0 %3190
  %3192 = vrot.lane.b32.xlu0 %v3153, 96
  %v3193 = vpop.permute.xlu0 %3192
  %3194 = vrot.lane.b32.xlu0 %v3154, 96
  %v3195 = vpop.permute.xlu0 %3194
  %3196 = vrot.lane.b32.xlu0 %v3155, 96
  %v3197 = vpop.permute.xlu0 %3196
  %3198 = vrot.lane.b32.xlu0 %v3156, 96
  %v3199 = vpop.permute.xlu0 %3198
  %3200 = vrot.lane.b32.xlu0 %v3157, 96
  %v3201 = vpop.permute.xlu0 %3200
  %3202 = vrot.lane.b32.xlu0 %v3158, 96
  %v3203 = vpop.permute.xlu0 %3202
  %3204 = vrot.lane.b32.xlu0 %v3159, 96
  %v3205 = vpop.permute.xlu0 %3204
  %3206 = vrot.lane.b32.xlu0 %v3160, 96
  %v3207 = vpop.permute.xlu0 %3206
  %3208 = vrot.lane.b32.xlu0 %v3161, 96
  %v3209 = vpop.permute.xlu0 %3208
  %v3226 = vadd.f32 %v3065, %v3179
  %v3227 = vadd.f32 %v3066, %v3181
  %v3228 = vadd.f32 %v3067, %v3183
  %v3229 = vadd.f32 %v3068, %v3185
  %v3230 = vadd.f32 %v3069, %v3187
  %v3231 = vadd.f32 %v3070, %v3189
  %v3232 = vadd.f32 %v3071, %v3191
  %v3233 = vadd.f32 %v3072, %v3193
  %v3234 = vadd.f32 %v3073, %v3195
  %v3235 = vadd.f32 %v3074, %v3197
  %v3236 = vadd.f32 %v3075, %v3199
  %v3237 = vadd.f32 %v3076, %v3201
  %v3238 = vadd.f32 %v3077, %v3203
  %v3239 = vadd.f32 %v3078, %v3205
  %v3240 = vadd.f32 %v3079, %v3207
  %v3241 = vadd.f32 %v3080, %v3209
  %v3242 = vld [vmem:[#allocation2 + $0x98] sm:$0xfe]
  %v3243 = vld [vmem:[#allocation2 + $0xb8] sm:$0xff]
  %v3244 = vld [vmem:[#allocation2 + $0xd8] sm:$0xff]
  %v3245 = vld [vmem:[#allocation2 + $0xf8] sm:$0xff]
  %v3246 = vld [vmem:[#allocation2 + $0x118] sm:$0xff]
  %v3247 = vld [vmem:[#allocation2 + $0x138] sm:$0xff]
  %v3248 = vld [vmem:[#allocation2 + $0x158] sm:$0xff]
  %v3249 = vld [vmem:[#allocation2 + $0x178] sm:$0xff]
  %v3250 = vld [vmem:[#allocation2 + $0x198] sm:$0xff]
  %v3251 = vld [vmem:[#allocation2 + $0x1b8] sm:$0xff]
  %v3252 = vld [vmem:[#allocation2 + $0x1d8] sm:$0xff]
  %v3253 = vld [vmem:[#allocation2 + $0x1f8] sm:$0xff]
  %v3254 = vld [vmem:[#allocation2 + $0x218] sm:$0xff]
  %v3255 = vld [vmem:[#allocation2 + $0x238] sm:$0xff]
  %v3256 = vld [vmem:[#allocation2 + $0x258] sm:$0xff]
  %v3257 = vld [vmem:[#allocation2 + $0x278] sm:$0xff]
  %v3258 = vld [vmem:[#allocation2 + $0x298] sm:$0x1]
  %3259 = vset.pattern.permute.xlu0 14
  %3260 = vperm.xlu0 %3259, %v704
  %v3261 = vpop.permute.xlu0 %3260
  %3263 = vset.pattern.permute.xlu0 14
  %3264 = vperm.xlu0 %3263, %v705
  %v3265 = vpop.permute.xlu0 %3264
  %3267 = vset.pattern.permute.xlu0 14
  %3268 = vperm.xlu0 %3267, %v706
  %v3269 = vpop.permute.xlu0 %3268
  %3271 = vset.pattern.permute.xlu0 14
  %3272 = vperm.xlu0 %3271, %v707
  %v3273 = vpop.permute.xlu0 %3272
  %3275 = vset.pattern.permute.xlu0 14
  %3276 = vperm.xlu0 %3275, %v708
  %v3277 = vpop.permute.xlu0 %3276
  %3279 = vset.pattern.permute.xlu0 14
  %3280 = vperm.xlu0 %3279, %v709
  %v3281 = vpop.permute.xlu0 %3280
  %3283 = vset.pattern.permute.xlu0 14
  %3284 = vperm.xlu0 %3283, %v710
  %v3285 = vpop.permute.xlu0 %3284
  %3287 = vset.pattern.permute.xlu0 14
  %3288 = vperm.xlu0 %3287, %v711
  %v3289 = vpop.permute.xlu0 %3288
  %3291 = vset.pattern.permute.xlu0 14
  %3292 = vperm.xlu0 %3291, %v712
  %v3293 = vpop.permute.xlu0 %3292
  %3295 = vset.pattern.permute.xlu0 14
  %3296 = vperm.xlu0 %3295, %v713
  %v3297 = vpop.permute.xlu0 %3296
  %3299 = vset.pattern.permute.xlu0 14
  %3300 = vperm.xlu0 %3299, %v714
  %v3301 = vpop.permute.xlu0 %3300
  %3303 = vset.pattern.permute.xlu0 14
  %3304 = vperm.xlu0 %3303, %v715
  %v3305 = vpop.permute.xlu0 %3304
  %3307 = vset.pattern.permute.xlu0 14
  %3308 = vperm.xlu0 %3307, %v716
  %v3309 = vpop.permute.xlu0 %3308
  %3311 = vset.pattern.permute.xlu0 14
  %3312 = vperm.xlu0 %3311, %v717
  %v3313 = vpop.permute.xlu0 %3312
  %3315 = vset.pattern.permute.xlu0 14
  %3316 = vperm.xlu0 %3315, %v718
  %v3317 = vpop.permute.xlu0 %3316
  %3319 = vset.pattern.permute.xlu0 14
  %3320 = vperm.xlu0 %3319, %v719
  %v3321 = vpop.permute.xlu0 %3320
  %v3340 = vrot.slane %v3242, 1
  %v3341 = vrot.slane %v3243, 1
  %v3342 = vsel %vm1142, %v3340, %v3341
  %v3343 = vrot.slane %v3244, 1
  %v3344 = vsel %vm1142, %v3341, %v3343
  %v3345 = vrot.slane %v3245, 1
  %v3346 = vsel %vm1142, %v3343, %v3345
  %v3347 = vrot.slane %v3246, 1
  %v3348 = vsel %vm1142, %v3345, %v3347
  %v3349 = vrot.slane %v3247, 1
  %v3350 = vsel %vm1142, %v3347, %v3349
  %v3351 = vrot.slane %v3248, 1
  %v3352 = vsel %vm1142, %v3349, %v3351
  %v3353 = vrot.slane %v3249, 1
  %v3354 = vsel %vm1142, %v3351, %v3353
  %v3355 = vrot.slane %v3250, 1
  %v3356 = vsel %vm1142, %v3353, %v3355
  %v3357 = vrot.slane %v3251, 1
  %v3358 = vsel %vm1142, %v3355, %v3357
  %v3359 = vrot.slane %v3252, 1
  %v3360 = vsel %vm1142, %v3357, %v3359
  %v3361 = vrot.slane %v3253, 1
  %v3362 = vsel %vm1142, %v3359, %v3361
  %v3363 = vrot.slane %v3254, 1
  %v3364 = vsel %vm1142, %v3361, %v3363
  %v3365 = vrot.slane %v3255, 1
  %v3366 = vsel %vm1142, %v3363, %v3365
  %v3367 = vrot.slane %v3256, 1
  %v3368 = vsel %vm1142, %v3365, %v3367
  %v3369 = vrot.slane %v3257, 1
  %v3370 = vsel %vm1142, %v3367, %v3369
  %v3371 = vrot.slane %v3258, 1
  %v3372 = vsel %vm1142, %v3369, %v3371
  %3373 = vrot.lane.b32.xlu0 %v3342, 64
  %v3374 = vpop.permute.xlu0 %3373
  %3375 = vrot.lane.b32.xlu0 %v3344, 64
  %v3376 = vpop.permute.xlu0 %3375
  %3377 = vrot.lane.b32.xlu0 %v3346, 64
  %v3378 = vpop.permute.xlu0 %3377
  %3379 = vrot.lane.b32.xlu0 %v3348, 64
  %v3380 = vpop.permute.xlu0 %3379
  %3381 = vrot.lane.b32.xlu0 %v3350, 64
  %v3382 = vpop.permute.xlu0 %3381
  %3383 = vrot.lane.b32.xlu0 %v3352, 64
  %v3384 = vpop.permute.xlu0 %3383
  %3385 = vrot.lane.b32.xlu0 %v3354, 64
  %v3386 = vpop.permute.xlu0 %3385
  %3387 = vrot.lane.b32.xlu0 %v3356, 64
  %v3388 = vpop.permute.xlu0 %3387
  %3389 = vrot.lane.b32.xlu0 %v3358, 64
  %v3390 = vpop.permute.xlu0 %3389
  %3391 = vrot.lane.b32.xlu0 %v3360, 64
  %v3392 = vpop.permute.xlu0 %3391
  %3393 = vrot.lane.b32.xlu0 %v3362, 64
  %v3394 = vpop.permute.xlu0 %3393
  %3395 = vrot.lane.b32.xlu0 %v3364, 64
  %v3396 = vpop.permute.xlu0 %3395
  %3397 = vrot.lane.b32.xlu0 %v3366, 64
  %v3398 = vpop.permute.xlu0 %3397
  %3399 = vrot.lane.b32.xlu0 %v3368, 64
  %v3400 = vpop.permute.xlu0 %3399
  %3401 = vrot.lane.b32.xlu0 %v3370, 64
  %v3402 = vpop.permute.xlu0 %3401
  %3403 = vrot.lane.b32.xlu0 %v3372, 64
  %v3404 = vpop.permute.xlu0 %3403
  %v3421 = vmul.f32 %v3261, %v3374
  %v3422 = vmul.f32 %v3265, %v3376
  %v3423 = vmul.f32 %v3269, %v3378
  %v3424 = vmul.f32 %v3273, %v3380
  %v3425 = vmul.f32 %v3277, %v3382
  %v3426 = vmul.f32 %v3281, %v3384
  %v3427 = vmul.f32 %v3285, %v3386
  %v3428 = vmul.f32 %v3289, %v3388
  %v3429 = vmul.f32 %v3293, %v3390
  %v3430 = vmul.f32 %v3297, %v3392
  %v3431 = vmul.f32 %v3301, %v3394
  %v3432 = vmul.f32 %v3305, %v3396
  %v3433 = vmul.f32 %v3309, %v3398
  %v3434 = vmul.f32 %v3313, %v3400
  %v3435 = vmul.f32 %v3317, %v3402
  %v3436 = vmul.f32 %v3321, %v3404
  %v3437 = vadd.f32 %v3226, %v3421
  %v3438 = vadd.f32 %v3227, %v3422
  %v3439 = vadd.f32 %v3228, %v3423
  %v3440 = vadd.f32 %v3229, %v3424
  %v3441 = vadd.f32 %v3230, %v3425
  %v3442 = vadd.f32 %v3231, %v3426
  %v3443 = vadd.f32 %v3232, %v3427
  %v3444 = vadd.f32 %v3233, %v3428
  %v3445 = vadd.f32 %v3234, %v3429
  %v3446 = vadd.f32 %v3235, %v3430
  %v3447 = vadd.f32 %v3236, %v3431
  %v3448 = vadd.f32 %v3237, %v3432
  %v3449 = vadd.f32 %v3238, %v3433
  %v3450 = vadd.f32 %v3239, %v3434
  %v3451 = vadd.f32 %v3240, %v3435
  %v3452 = vadd.f32 %v3241, %v3436
  %v3453 = vld [vmem:[#allocation2 + $0x98] sm:$0xfc]
  %v3454 = vld [vmem:[#allocation2 + $0x298] sm:$0x3]
  %3455 = vset.pattern.permute.xlu0 15
  %3456 = vperm.xlu0 %3455, %v704
  %v3457 = vpop.permute.xlu0 %3456
  %3459 = vset.pattern.permute.xlu0 15
  %3460 = vperm.xlu0 %3459, %v705
  %v3461 = vpop.permute.xlu0 %3460
  %3463 = vset.pattern.permute.xlu0 15
  %3464 = vperm.xlu0 %3463, %v706
  %v3465 = vpop.permute.xlu0 %3464
  %3467 = vset.pattern.permute.xlu0 15
  %3468 = vperm.xlu0 %3467, %v707
  %v3469 = vpop.permute.xlu0 %3468
  %3471 = vset.pattern.permute.xlu0 15
  %3472 = vperm.xlu0 %3471, %v708
  %v3473 = vpop.permute.xlu0 %3472
  %3475 = vset.pattern.permute.xlu0 15
  %3476 = vperm.xlu0 %3475, %v709
  %v3477 = vpop.permute.xlu0 %3476
  %3479 = vset.pattern.permute.xlu0 15
  %3480 = vperm.xlu0 %3479, %v710
  %v3481 = vpop.permute.xlu0 %3480
  %3483 = vset.pattern.permute.xlu0 15
  %3484 = vperm.xlu0 %3483, %v711
  %v3485 = vpop.permute.xlu0 %3484
  %3487 = vset.pattern.permute.xlu0 15
  %3488 = vperm.xlu0 %3487, %v712
  %v3489 = vpop.permute.xlu0 %3488
  %3491 = vset.pattern.permute.xlu0 15
  %3492 = vperm.xlu0 %3491, %v713
  %v3493 = vpop.permute.xlu0 %3492
  %3495 = vset.pattern.permute.xlu0 15
  %3496 = vperm.xlu0 %3495, %v714
  %v3497 = vpop.permute.xlu0 %3496
  %3499 = vset.pattern.permute.xlu0 15
  %3500 = vperm.xlu0 %3499, %v715
  %v3501 = vpop.permute.xlu0 %3500
  %3503 = vset.pattern.permute.xlu0 15
  %3504 = vperm.xlu0 %3503, %v716
  %v3505 = vpop.permute.xlu0 %3504
  %3507 = vset.pattern.permute.xlu0 15
  %3508 = vperm.xlu0 %3507, %v717
  %v3509 = vpop.permute.xlu0 %3508
  %3511 = vset.pattern.permute.xlu0 15
  %3512 = vperm.xlu0 %3511, %v718
  %v3513 = vpop.permute.xlu0 %3512
  %3515 = vset.pattern.permute.xlu0 15
  %3516 = vperm.xlu0 %3515, %v719
  %v3517 = vpop.permute.xlu0 %3516
  %v3521 = vrot.slane %v3453, 2
  %v3522 = vrot.slane %v3243, 2
  %v3523 = vsel %vm1324, %v3521, %v3522
  %v3524 = vrot.slane %v3244, 2
  %v3525 = vsel %vm1324, %v3522, %v3524
  %v3526 = vrot.slane %v3245, 2
  %v3527 = vsel %vm1324, %v3524, %v3526
  %v3528 = vrot.slane %v3246, 2
  %v3529 = vsel %vm1324, %v3526, %v3528
  %v3530 = vrot.slane %v3247, 2
  %v3531 = vsel %vm1324, %v3528, %v3530
  %v3532 = vrot.slane %v3248, 2
  %v3533 = vsel %vm1324, %v3530, %v3532
  %v3534 = vrot.slane %v3249, 2
  %v3535 = vsel %vm1324, %v3532, %v3534
  %v3536 = vrot.slane %v3250, 2
  %v3537 = vsel %vm1324, %v3534, %v3536
  %v3538 = vrot.slane %v3251, 2
  %v3539 = vsel %vm1324, %v3536, %v3538
  %v3540 = vrot.slane %v3252, 2
  %v3541 = vsel %vm1324, %v3538, %v3540
  %v3542 = vrot.slane %v3253, 2
  %v3543 = vsel %vm1324, %v3540, %v3542
  %v3544 = vrot.slane %v3254, 2
  %v3545 = vsel %vm1324, %v3542, %v3544
  %v3546 = vrot.slane %v3255, 2
  %v3547 = vsel %vm1324, %v3544, %v3546
  %v3548 = vrot.slane %v3256, 2
  %v3549 = vsel %vm1324, %v3546, %v3548
  %v3550 = vrot.slane %v3257, 2
  %v3551 = vsel %vm1324, %v3548, %v3550
  %v3552 = vrot.slane %v3454, 2
  %v3553 = vsel %vm1324, %v3550, %v3552
  %3554 = vrot.lane.b32.xlu0 %v3523, 32
  %v3555 = vpop.permute.xlu0 %3554
  %3556 = vrot.lane.b32.xlu0 %v3525, 32
  %v3557 = vpop.permute.xlu0 %3556
  %3558 = vrot.lane.b32.xlu0 %v3527, 32
  %v3559 = vpop.permute.xlu0 %3558
  %3560 = vrot.lane.b32.xlu0 %v3529, 32
  %v3561 = vpop.permute.xlu0 %3560
  %3562 = vrot.lane.b32.xlu0 %v3531, 32
  %v3563 = vpop.permute.xlu0 %3562
  %3564 = vrot.lane.b32.xlu0 %v3533, 32
  %v3565 = vpop.permute.xlu0 %3564
  %3566 = vrot.lane.b32.xlu0 %v3535, 32
  %v3567 = vpop.permute.xlu0 %3566
  %3568 = vrot.lane.b32.xlu0 %v3537, 32
  %v3569 = vpop.permute.xlu0 %3568
  %3570 = vrot.lane.b32.xlu0 %v3539, 32
  %v3571 = vpop.permute.xlu0 %3570
  %3572 = vrot.lane.b32.xlu0 %v3541, 32
  %v3573 = vpop.permute.xlu0 %3572
  %3574 = vrot.lane.b32.xlu0 %v3543, 32
  %v3575 = vpop.permute.xlu0 %3574
  %3576 = vrot.lane.b32.xlu0 %v3545, 32
  %v3577 = vpop.permute.xlu0 %3576
  %3578 = vrot.lane.b32.xlu0 %v3547, 32
  %v3579 = vpop.permute.xlu0 %3578
  %3580 = vrot.lane.b32.xlu0 %v3549, 32
  %v3581 = vpop.permute.xlu0 %3580
  %3582 = vrot.lane.b32.xlu0 %v3551, 32
  %v3583 = vpop.permute.xlu0 %3582
  %3584 = vrot.lane.b32.xlu0 %v3553, 32
  %v3585 = vpop.permute.xlu0 %3584
  %v3602 = vmul.f32 %v3457, %v3555
  %v3603 = vmul.f32 %v3461, %v3557
  %v3604 = vmul.f32 %v3465, %v3559
  %v3605 = vmul.f32 %v3469, %v3561
  %v3606 = vmul.f32 %v3473, %v3563
  %v3607 = vmul.f32 %v3477, %v3565
  %v3608 = vmul.f32 %v3481, %v3567
  %v3609 = vmul.f32 %v3485, %v3569
  %v3610 = vmul.f32 %v3489, %v3571
  %v3611 = vmul.f32 %v3493, %v3573
  %v3612 = vmul.f32 %v3497, %v3575
  %v3613 = vmul.f32 %v3501, %v3577
  %v3614 = vmul.f32 %v3505, %v3579
  %v3615 = vmul.f32 %v3509, %v3581
  %v3616 = vmul.f32 %v3513, %v3583
  %v3617 = vmul.f32 %v3517, %v3585
  %v3618 = vadd.f32 %v3437, %v3602
  %v3619 = vadd.f32 %v3438, %v3603
  %v3620 = vadd.f32 %v3439, %v3604
  %v3621 = vadd.f32 %v3440, %v3605
  %v3622 = vadd.f32 %v3441, %v3606
  %v3623 = vadd.f32 %v3442, %v3607
  %v3624 = vadd.f32 %v3443, %v3608
  %v3625 = vadd.f32 %v3444, %v3609
  %v3626 = vadd.f32 %v3445, %v3610
  %v3627 = vadd.f32 %v3446, %v3611
  %v3628 = vadd.f32 %v3447, %v3612
  %v3629 = vadd.f32 %v3448, %v3613
  %v3630 = vadd.f32 %v3449, %v3614
  %v3631 = vadd.f32 %v3450, %v3615
  %v3632 = vadd.f32 %v3451, %v3616
  %v3633 = vadd.f32 %v3452, %v3617
  %v3634 = vld [vmem:[%s5] sm:$0xff]
  %v3635 = vld [vmem:[%s5 + $0x8] sm:$0xff]
  %v3636 = vld [vmem:[%s5 + $0x10] sm:$0xff]
  %v3637 = vld [vmem:[%s5 + $0x18] sm:$0xff]
  %v3638 = vld [vmem:[%s6] sm:$0x1]
  %v3640 = vlaneseq
  %v3641 = vshrl.u32 %v3640, 7
  %v3642 = vsub.s32 0, %v3641
  %v3643 = vrot.slane %v3638, %v3642
  %3645 = vmatprep.subr.mxu0 0.0
  %3646 = vmatpush1.msra.mxu0 %v3618
  %3647 = vmatprep.subr.mxu0 0.0
  %3648 = vmatpush1.msra.mxu0 %v3619
  %3649 = vmatprep.subr.mxu0 0.0
  %3650 = vmatpush1.msra.mxu0 %v3620
  %3651 = vmatprep.subr.mxu0 0.0
  %3652 = vmatpush1.msra.mxu0 %v3621
  %3653 = vmatprep.subr.mxu0 0.0
  %3654 = vmatpush1.msra.mxu0 %v3622
  %3655 = vmatprep.subr.mxu0 0.0
  %3656 = vmatpush1.msra.mxu0 %v3623
  %3657 = vmatprep.subr.mxu0 0.0
  %3658 = vmatpush1.msra.mxu0 %v3624
  %3659 = vmatprep.subr.mxu0 0.0
  %3660 = vmatpush1.msra.mxu0 %v3625
  %3661 = vmatprep.subr.mxu0 0.0
  %3662 = vmatpush1.msra.mxu0 %v3626
  %3663 = vmatprep.subr.mxu0 0.0
  %3664 = vmatpush1.msra.mxu0 %v3627
  %3665 = vmatprep.subr.mxu0 0.0
  %3666 = vmatpush1.msra.mxu0 %v3628
  %3667 = vmatprep.subr.mxu0 0.0
  %3668 = vmatpush1.msra.mxu0 %v3629
  %3669 = vmatprep.subr.mxu0 0.0
  %3670 = vmatpush1.msra.mxu0 %v3630
  %3671 = vmatprep.subr.mxu0 0.0
  %3672 = vmatpush1.msra.mxu0 %v3631
  %3673 = vmatprep.subr.mxu0 0.0
  %3674 = vmatpush1.msra.mxu0 %v3632
  %3675 = vmatprep.subr.mxu0 0.0
  %3676 = vmatpush1.msra.mxu0 %v3633
  %3677 = vmatprep.subr.mxu0 0.0
  %3678 = vmatpush1.msra.mxu0 0.0
  %3679 = vmatprep.subr.mxu0 0.0
  %3680 = vmatpush1.msra.mxu0 0.0
  %3681 = vmatprep.subr.mxu0 0.0
  %3682 = vmatpush1.msra.mxu0 0.0
  %3683 = vmatprep.subr.mxu0 0.0
  %3684 = vmatpush1.msra.mxu0 0.0
  %3685 = vmatprep.subr.mxu0 0.0
  %3686 = vmatpush1.msra.mxu0 0.0
  %3687 = vmatprep.subr.mxu0 0.0
  %3688 = vmatpush1.msra.mxu0 0.0
  %3689 = vmatprep.subr.mxu0 0.0
  %3690 = vmatpush1.msra.mxu0 0.0
  %3691 = vmatprep.subr.mxu0 0.0
  %3692 = vmatpush1.msra.mxu0 0.0
  %3693 = vmatprep.subr.mxu0 0.0
  %3694 = vmatpush1.msra.mxu0 0.0
  %3695 = vmatprep.subr.mxu0 0.0
  %3696 = vmatpush1.msra.mxu0 0.0
  %3697 = vmatprep.subr.mxu0 0.0
  %3698 = vmatpush1.msra.mxu0 0.0
  %3699 = vmatprep.subr.mxu0 0.0
  %3700 = vmatpush1.msra.mxu0 0.0
  %3701 = vmatprep.subr.mxu0 0.0
  %3702 = vmatpush1.msra.mxu0 0.0
  %3703 = vmatprep.subr.mxu0 0.0
  %3704 = vmatpush1.msra.mxu0 0.0
  %3705 = vmatprep.subr.mxu0 0.0
  %3706 = vmatpush1.msra.mxu0 0.0
  %3707 = vmatprep.subr.mxu0 0.0
  %3708 = vmatpush1.msra.mxu0 0.0
  %3709 = vmatprep.mubr.f32.mxu0 0.0
  %3710 = vmatmul.mubr.f32.gmra.mrb[0].mxu0 %v3634
  %v3711 = vpop.f32.mrb[0].mxu0
  %v3712 = vadd.f32 %v3643, %v3711
  %v3713 = vpop.f32.mrb[0].mxu0
  %3714 = vmatprep.mubr.f32.mxu0 0.0
  %3715 = vmatmul.mubr.f32.gmra.mrb[0].mxu0 %v3635
  %v3716 = vpop.f32.mrb[0].mxu0
  %v3717 = vadd.f32 %v3643, %v3716
  %v3718 = vpop.f32.mrb[0].mxu0
  %3719 = vmatprep.mubr.f32.mxu0 0.0
  %3720 = vmatmul.mubr.f32.gmra.mrb[0].mxu0 %v3636
  %v3721 = vpop.f32.mrb[0].mxu0
  %v3722 = vadd.f32 %v3643, %v3721
  %v3723 = vpop.f32.mrb[0].mxu0
  %3724 = vmatprep.mubr.f32.mxu0 0.0
  %3725 = vmatmul.mubr.f32.gmra.mrb[0].mxu0 %v3637
  %v3726 = vpop.f32.mrb[0].mxu0
  %v3727 = vadd.f32 %v3643, %v3726
  %v3728 = vpop.f32.mrb[0].mxu0
  %3729 = vdwg.mxu0
  %v3730 = vmax.f32 %v3712, 0.0
  %v3731 = vmax.f32 %v3717, 0.0
  %v3732 = vmax.f32 %v3722, 0.0
  %v3733 = vmax.f32 %v3727, 0.0
  %v3734 = vld [vmem:[%s7] sm:$0xff]
  %v3735 = vld [vmem:[%s7 + $0x8] sm:$0xf]
  %v3736 = vld [vmem:[%s7 + $0xc] sm:$0xff]
  %v3737 = vld [vmem:[%s7 + $0x14] sm:$0xf]
  %v3738 = vld [vmem:[%s7 + $0x18] sm:$0xff]
  %v3739 = vld [vmem:[%s7 + $0x20] sm:$0xf]
  %v3740 = vld [vmem:[%s7 + $0x24] sm:$0xff]
  %v3741 = vld [vmem:[%s7 + $0x2c] sm:$0xf]
  %v3742 = vpack.c.bf16 %v3731, %v3730
  %v3743 = vpack.c.bf16 %v3733, %v3732
  %v3752 = vunpack.c.l.b16 %v3734
  %v3753 = vunpack.c.h.b16 %v3734
  %v3754 = vunpack.c.l.b16 %v3735
  %v3755 = vunpack.c.l.b16 %v3736
  %v3756 = vunpack.c.h.b16 %v3736
  %v3757 = vunpack.c.l.b16 %v3737
  %v3758 = vunpack.c.l.b16 %v3738
  %v3759 = vunpack.c.h.b16 %v3738
  %v3760 = vunpack.c.l.b16 %v3739
  %v3761 = vunpack.c.l.b16 %v3740
  %v3762 = vunpack.c.h.b16 %v3740
  %v3763 = vunpack.c.l.b16 %v3741
  %v3764 = vpack.c.b16 %v3755, %v3752
  %v3765 = vpack.c.b16 %v3756, %v3753
  %v3766 = vpack.c.b16 %v3757, %v3754
  %v3767 = vpack.c.b16 %v3761, %v3758
  %v3768 = vpack.c.b16 %v3762, %v3759
  %v3769 = vpack.c.b16 %v3763, %v3760
  %vm3776 = vcmask 261120
  %v3778 = vsel %vm3776, %v3742, 0
  %v3781 = vsel %vm3776, %v3743, 0
  %3783 = vmatprep.subr.bf16.mxu0 %v3765
  %3784 = vmatpush1.bf16.msra.mxu0 %v3764
  %3785 = vmatprep.subr.bf16.mxu0 %v3768
  %3786 = vmatpush1.bf16.msra.mxu0 %v3767
  %3787 = vmatprep.subr.bf16.mxu0 0
  %3788 = vmatpush1.bf16.msra.mxu0 0
  %3789 = vmatprep.subr.bf16.mxu0 0
  %3790 = vmatpush1.bf16.msra.mxu0 0
  %3791 = vmatprep.subr.bf16.mxu0 0
  %3792 = vmatpush1.bf16.msra.mxu0 0
  %3793 = vmatprep.subr.bf16.mxu0 0
  %3794 = vmatpush1.bf16.msra.mxu0 0
  %3795 = vmatprep.subr.bf16.mxu0 0
  %3796 = vmatpush1.bf16.msra.mxu0 0
  %3797 = vmatprep.subr.bf16.mxu0 0
  %3798 = vmatpush1.bf16.msra.mxu0 0
  %3799 = vmatprep.subr.bf16.mxu0 0
  %3800 = vmatpush1.bf16.msra.mxu0 0
  %3801 = vmatprep.subr.bf16.mxu0 0
  %3802 = vmatpush1.bf16.msra.mxu0 0
  %3803 = vmatprep.subr.bf16.mxu0 0
  %3804 = vmatpush1.bf16.msra.mxu0 0
  %3805 = vmatprep.subr.bf16.mxu0 0
  %3806 = vmatpush1.bf16.msra.mxu0 0
  %3807 = vmatprep.subr.bf16.mxu0 0
  %3808 = vmatpush1.bf16.msra.mxu0 0
  %3809 = vmatprep.subr.bf16.mxu0 0
  %3810 = vmatpush1.bf16.msra.mxu0 0
  %3811 = vmatprep.subr.bf16.mxu0 0
  %3812 = vmatpush1.bf16.msra.mxu0 0
  %3813 = vmatprep.subr.bf16.mxu0 0
  %3814 = vmatpush1.bf16.msra.mxu0 0
  %3815 = vmatprep.mubr.bf16.mxu0 0
  %3816 = vmatmul.mubr.bf16.gmra.mrb[0].mxu0 %v3778
  %v3817 = vpop.f32.mrb[0].mxu0
  %v3818 = vadd.f32 0.0, %v3817
  %v3819 = vpop.f32.mrb[0].mxu0
  %v3820 = vadd.f32 0.0, %v3819
  %v3821 = vpop.f32.mrb[0].mxu0
  %v3822 = vadd.f32 0.0, %v3821
  %v3823 = vpop.f32.mrb[0].mxu0
  %v3824 = vadd.f32 0.0, %v3823
  %3825 = vmatprep.mubr.bf16.mxu0 0
  %3826 = vmatmul.mubr.bf16.gmra.mrb[0].mxu0 %v3781
  %v3827 = vpop.f32.mrb[0].mxu0
  %v3828 = vadd.f32 0.0, %v3827
  %v3829 = vpop.f32.mrb[0].mxu0
  %v3830 = vadd.f32 0.0, %v3829
  %v3831 = vpop.f32.mrb[0].mxu0
  %v3832 = vadd.f32 0.0, %v3831
  %v3833 = vpop.f32.mrb[0].mxu0
  %v3834 = vadd.f32 0.0, %v3833
  %3835 = vdwg.mxu0
  %3836 = vmatprep.subr.bf16.mxu0 0
  %3837 = vmatpush1.bf16.msra.mxu0 %v3766
  %3838 = vmatprep.subr.bf16.mxu0 0
  %3839 = vmatpush1.bf16.msra.mxu0 %v3769
  %3840 = vmatprep.subr.bf16.mxu0 0
  %3841 = vmatpush1.bf16.msra.mxu0 0
  %3842 = vmatprep.subr.bf16.mxu0 0
  %3843 = vmatpush1.bf16.msra.mxu0 0
  %3844 = vmatprep.subr.bf16.mxu0 0
  %3845 = vmatpush1.bf16.msra.mxu0 0
  %3846 = vmatprep.subr.bf16.mxu0 0
  %3847 = vmatpush1.bf16.msra.mxu0 0
  %3848 = vmatprep.subr.bf16.mxu0 0
  %3849 = vmatpush1.bf16.msra.mxu0 0
  %3850 = vmatprep.subr.bf16.mxu0 0
  %3851 = vmatpush1.bf16.msra.mxu0 0
  %3852 = vmatprep.subr.bf16.mxu0 0
  %3853 = vmatpush1.bf16.msra.mxu0 0
  %3854 = vmatprep.subr.bf16.mxu0 0
  %3855 = vmatpush1.bf16.msra.mxu0 0
  %3856 = vmatprep.subr.bf16.mxu0 0
  %3857 = vmatpush1.bf16.msra.mxu0 0
  %3858 = vmatprep.subr.bf16.mxu0 0
  %3859 = vmatpush1.bf16.msra.mxu0 0
  %3860 = vmatprep.subr.bf16.mxu0 0
  %3861 = vmatpush1.bf16.msra.mxu0 0
  %3862 = vmatprep.subr.bf16.mxu0 0
  %3863 = vmatpush1.bf16.msra.mxu0 0
  %3864 = vmatprep.subr.bf16.mxu0 0
  %3865 = vmatpush1.bf16.msra.mxu0 0
  %3866 = vmatprep.subr.bf16.mxu0 0
  %3867 = vmatpush1.bf16.msra.mxu0 0
  %3868 = vmatprep.mubr.bf16.mxu0 0
  %3869 = vmatmul.mubr.bf16.gmra.mrb[0].mxu0 %v3778
  %v3870 = vpop.f32.mrb[0].mxu0
  %v3871 = vadd.f32 0.0, %v3870
  %v3872 = vpop.f32.mrb[0].mxu0
  %v3873 = vpop.f32.mrb[0].mxu0
  %v3874 = vadd.f32 0.0, %v3873
  %v3875 = vpop.f32.mrb[0].mxu0
  %3876 = vmatprep.mubr.bf16.mxu0 0
  %3877 = vmatmul.mubr.bf16.gmra.mrb[0].mxu0 %v3781
  %v3878 = vpop.f32.mrb[0].mxu0
  %v3879 = vadd.f32 0.0, %v3878
  %v3880 = vpop.f32.mrb[0].mxu0
  %v3881 = vpop.f32.mrb[0].mxu0
  %v3882 = vadd.f32 0.0, %v3881
  %v3883 = vpop.f32.mrb[0].mxu0
  %3884 = vdwg.mxu0
  %3885 = vst [vmem:[#allocation2 + $0x40] sm:$0xff] %v3818
  %3886 = vst [vmem:[#allocation2 + $0x48] sm:$0xff] %v3820
  %3887 = vst.msk [vmem:[#allocation2 + $0x50] sm:$0xff] %vm3776, %v3871
  %3888 = vst [vmem:[#allocation2 + $0x60] sm:$0xff] %v3822
  %3889 = vst [vmem:[#allocation2 + $0x68] sm:$0xff] %v3824
  %3890 = vst.msk [vmem:[#allocation2 + $0x70] sm:$0xff] %vm3776, %v3874
  %3891 = vst [vmem:[#allocation2 + $0x80] sm:$0xff] %v3828
  %3892 = vst [vmem:[#allocation2 + $0x88] sm:$0xff] %v3830
  %3893 = vst.msk [vmem:[#allocation2 + $0x90] sm:$0xff] %vm3776, %v3879
  %3894 = vst [vmem:[#allocation2 + $0xa0] sm:$0xff] %v3832
  %3895 = vst [vmem:[#allocation2 + $0xa8] sm:$0xff] %v3834
  %3896 = vst.msk [vmem:[#allocation2 + $0xb0] sm:$0xff] %vm3776, %v3882
  %v3897 = vld [vmem:[#allocation2] sm:$0x80]
  %v3898 = vld [vmem:[#allocation2 + $0x20] sm:$0xff]
  %v3899 = vld [vmem:[#allocation2 + $0x40] sm:$0xff]
  %v3900 = vld [vmem:[#allocation2 + $0x60] sm:$0xff]
  %v3901 = vld [vmem:[#allocation2 + $0x80] sm:$0x7f]
  %v3902 = vld [vmem:[%s8] sm:$0xff]
  %v3903 = vld [vmem:[%s8 + $0x8] sm:$0xff]
  %v3904 = vld [vmem:[%s8 + $0x10] sm:$0xff]
  %v3905 = vld [vmem:[%s8 + $0x18] sm:$0xff]
  %3907 = vset.pattern.permute.xlu0 0
  %3908 = vperm.xlu0 %3907, %v3902
  %v3909 = vpop.permute.xlu0 %3908
  %3912 = vset.pattern.permute.xlu0 0
  %3913 = vperm.xlu0 %3912, %v3903
  %v3914 = vpop.permute.xlu0 %3913
  %3917 = vset.pattern.permute.xlu0 0
  %3918 = vperm.xlu0 %3917, %v3904
  %v3919 = vpop.permute.xlu0 %3918
  %3922 = vset.pattern.permute.xlu0 0
  %3923 = vperm.xlu0 %3922, %v3905
  %v3924 = vpop.permute.xlu0 %3923
  %v3931 = vrot.slane %v3897, 7
  %v3932 = vrot.slane %v3898, 7
  %v3933 = vsel %vm817, %v3931, %v3932
  %v3934 = vrot.slane %v3899, 7
  %v3935 = vsel %vm817, %v3932, %v3934
  %v3936 = vrot.slane %v3900, 7
  %v3937 = vsel %vm817, %v3934, %v3936
  %v3938 = vrot.slane %v3901, 7
  %v3939 = vsel %vm817, %v3936, %v3938
  %v3944 = vmul.f32 %v3909, %v3933
  %v3945 = vmul.f32 %v3914, %v3935
  %v3946 = vmul.f32 %v3919, %v3937
  %v3947 = vmul.f32 %v3924, %v3939
  %v3948 = vld [vmem:[#allocation2 + $0x20] sm:$0x80]
  %v3949 = vld [vmem:[#allocation2 + $0x40] sm:$0xff]
  %v3950 = vld [vmem:[#allocation2 + $0x60] sm:$0xff]
  %v3951 = vld [vmem:[#allocation2 + $0x80] sm:$0xff]
  %v3952 = vld [vmem:[#allocation2 + $0xa0] sm:$0x7f]
  %3953 = vset.pattern.permute.xlu0 1
  %3954 = vperm.xlu0 %3953, %v3902
  %v3955 = vpop.permute.xlu0 %3954
  %3957 = vset.pattern.permute.xlu0 1
  %3958 = vperm.xlu0 %3957, %v3903
  %v3959 = vpop.permute.xlu0 %3958
  %3961 = vset.pattern.permute.xlu0 1
  %3962 = vperm.xlu0 %3961, %v3904
  %v3963 = vpop.permute.xlu0 %3962
  %3965 = vset.pattern.permute.xlu0 1
  %3966 = vperm.xlu0 %3965, %v3905
  %v3967 = vpop.permute.xlu0 %3966
  %v3974 = vrot.slane %v3948, 7
  %v3975 = vrot.slane %v3949, 7
  %v3976 = vsel %vm817, %v3974, %v3975
  %v3977 = vrot.slane %v3950, 7
  %v3978 = vsel %vm817, %v3975, %v3977
  %v3979 = vrot.slane %v3951, 7
  %v3980 = vsel %vm817, %v3977, %v3979
  %v3981 = vrot.slane %v3952, 7
  %v3982 = vsel %vm817, %v3979, %v3981
  %3983 = vrot.lane.b32.xlu0 %v3976, 96
  %v3984 = vpop.permute.xlu0 %3983
  %3985 = vrot.lane.b32.xlu0 %v3978, 96
  %v3986 = vpop.permute.xlu0 %3985
  %3987 = vrot.lane.b32.xlu0 %v3980, 96
  %v3988 = vpop.permute.xlu0 %3987
  %3989 = vrot.lane.b32.xlu0 %v3982, 96
  %v3990 = vpop.permute.xlu0 %3989
  %v3995 = vmul.f32 %v3955, %v3984
  %v3996 = vmul.f32 %v3959, %v3986
  %v3997 = vmul.f32 %v3963, %v3988
  %v3998 = vmul.f32 %v3967, %v3990
  %v3999 = vadd.f32 %v3944, %v3995
  %v4000 = vadd.f32 %v3945, %v3996
  %v4001 = vadd.f32 %v3946, %v3997
  %v4002 = vadd.f32 %v3947, %v3998
  %v4003 = vld [vmem:[#allocation2 + $0x40] sm:$0x80]
  %v4004 = vld [vmem:[#allocation2 + $0x60] sm:$0xff]
  %v4005 = vld [vmem:[#allocation2 + $0x80] sm:$0xff]
  %v4006 = vld [vmem:[#allocation2 + $0xa0] sm:$0xff]
  %v4007 = vld [vmem:[#allocation2 + $0xc0] sm:$0x7f]
  %4008 = vset.pattern.permute.xlu0 2
  %4009 = vperm.xlu0 %4008, %v3902
  %v4010 = vpop.permute.xlu0 %4009
  %4012 = vset.pattern.permute.xlu0 2
  %4013 = vperm.xlu0 %4012, %v3903
  %v4014 = vpop.permute.xlu0 %4013
  %4016 = vset.pattern.permute.xlu0 2
  %4017 = vperm.xlu0 %4016, %v3904
  %v4018 = vpop.permute.xlu0 %4017
  %4020 = vset.pattern.permute.xlu0 2
  %4021 = vperm.xlu0 %4020, %v3905
  %v4022 = vpop.permute.xlu0 %4021
  %v4029 = vrot.slane %v4003, 7
  %v4030 = vrot.slane %v4004, 7
  %v4031 = vsel %vm817, %v4029, %v4030
  %v4032 = vrot.slane %v4005, 7
  %v4033 = vsel %vm817, %v4030, %v4032
  %v4034 = vrot.slane %v4006, 7
  %v4035 = vsel %vm817, %v4032, %v4034
  %v4036 = vrot.slane %v4007, 7
  %v4037 = vsel %vm817, %v4034, %v4036
  %4038 = vrot.lane.b32.xlu0 %v4031, 64
  %v4039 = vpop.permute.xlu0 %4038
  %4040 = vrot.lane.b32.xlu0 %v4033, 64
  %v4041 = vpop.permute.xlu0 %4040
  %4042 = vrot.lane.b32.xlu0 %v4035, 64
  %v4043 = vpop.permute.xlu0 %4042
  %4044 = vrot.lane.b32.xlu0 %v4037, 64
  %v4045 = vpop.permute.xlu0 %4044
  %v4050 = vmul.f32 %v4010, %v4039
  %v4051 = vmul.f32 %v4014, %v4041
  %v4052 = vmul.f32 %v4018, %v4043
  %v4053 = vmul.f32 %v4022, %v4045
  %v4054 = vadd.f32 %v3999, %v4050
  %v4055 = vadd.f32 %v4000, %v4051
  %v4056 = vadd.f32 %v4001, %v4052
  %v4057 = vadd.f32 %v4002, %v4053
  %v4058 = vld [vmem:[#allocation2 + $0x80] sm:$0xff]
  %4059 = vset.pattern.permute.xlu0 3
  %4060 = vperm.xlu0 %4059, %v3902
  %v4061 = vpop.permute.xlu0 %4060
  %4063 = vset.pattern.permute.xlu0 3
  %4064 = vperm.xlu0 %4063, %v3903
  %v4065 = vpop.permute.xlu0 %4064
  %4067 = vset.pattern.permute.xlu0 3
  %4068 = vperm.xlu0 %4067, %v3904
  %v4069 = vpop.permute.xlu0 %4068
  %4071 = vset.pattern.permute.xlu0 3
  %4072 = vperm.xlu0 %4071, %v3905
  %v4073 = vpop.permute.xlu0 %4072
  %v4075 = vmul.f32 %v4061, %v3898
  %v4076 = vmul.f32 %v4065, %v3899
  %v4077 = vmul.f32 %v4069, %v3900
  %v4078 = vmul.f32 %v4073, %v4058
  %4083 = vrot.lane.b32.xlu0 %v4075, 32
  %v4084 = vpop.permute.xlu0 %4083
  %4085 = vrot.lane.b32.xlu0 %v4076, 32
  %v4086 = vpop.permute.xlu0 %4085
  %4087 = vrot.lane.b32.xlu0 %v4077, 32
  %v4088 = vpop.permute.xlu0 %4087
  %4089 = vrot.lane.b32.xlu0 %v4078, 32
  %v4090 = vpop.permute.xlu0 %4089
  %v4095 = vadd.f32 %v4054, %v4084
  %v4096 = vadd.f32 %v4055, %v4086
  %v4097 = vadd.f32 %v4056, %v4088
  %v4098 = vadd.f32 %v4057, %v4090
  %v4099 = vld [vmem:[#allocation2 + $0x48] sm:$0xff]
  %v4100 = vld [vmem:[#allocation2 + $0x68] sm:$0xff]
  %v4101 = vld [vmem:[#allocation2 + $0x88] sm:$0xff]
  %v4102 = vld [vmem:[#allocation2 + $0xa8] sm:$0xff]
  %4103 = vset.pattern.permute.xlu0 4
  %4104 = vperm.xlu0 %4103, %v3902
  %v4105 = vpop.permute.xlu0 %4104
  %4107 = vset.pattern.permute.xlu0 4
  %4108 = vperm.xlu0 %4107, %v3903
  %v4109 = vpop.permute.xlu0 %4108
  %4111 = vset.pattern.permute.xlu0 4
  %4112 = vperm.xlu0 %4111, %v3904
  %v4113 = vpop.permute.xlu0 %4112
  %4115 = vset.pattern.permute.xlu0 4
  %4116 = vperm.xlu0 %4115, %v3905
  %v4117 = vpop.permute.xlu0 %4116
  %v4119 = vmul.f32 %v4105, %v4099
  %v4120 = vmul.f32 %v4109, %v4100
  %v4121 = vmul.f32 %v4113, %v4101
  %v4122 = vmul.f32 %v4117, %v4102
  %v4123 = vadd.f32 %v4095, %v4119
  %v4124 = vadd.f32 %v4096, %v4120
  %v4125 = vadd.f32 %v4097, %v4121
  %v4126 = vadd.f32 %v4098, %v4122
  %v4127 = vld [vmem:[#allocation2 + $0x68] sm:$0xff]
  %v4128 = vld [vmem:[#allocation2 + $0x88] sm:$0xff]
  %v4129 = vld [vmem:[#allocation2 + $0xa8] sm:$0xff]
  %v4130 = vld [vmem:[#allocation2 + $0xc8] sm:$0xff]
  %4131 = vset.pattern.permute.xlu0 5
  %4132 = vperm.xlu0 %4131, %v3902
  %v4133 = vpop.permute.xlu0 %4132
  %4135 = vset.pattern.permute.xlu0 5
  %4136 = vperm.xlu0 %4135, %v3903
  %v4137 = vpop.permute.xlu0 %4136
  %4139 = vset.pattern.permute.xlu0 5
  %4140 = vperm.xlu0 %4139, %v3904
  %v4141 = vpop.permute.xlu0 %4140
  %4143 = vset.pattern.permute.xlu0 5
  %4144 = vperm.xlu0 %4143, %v3905
  %v4145 = vpop.permute.xlu0 %4144
  %v4147 = vmul.f32 %v4133, %v4127
  %v4148 = vmul.f32 %v4137, %v4128
  %v4149 = vmul.f32 %v4141, %v4129
  %v4150 = vmul.f32 %v4145, %v4130
  %4155 = vrot.lane.b32.xlu0 %v4147, 96
  %v4156 = vpop.permute.xlu0 %4155
  %4157 = vrot.lane.b32.xlu0 %v4148, 96
  %v4158 = vpop.permute.xlu0 %4157
  %4159 = vrot.lane.b32.xlu0 %v4149, 96
  %v4160 = vpop.permute.xlu0 %4159
  %4161 = vrot.lane.b32.xlu0 %v4150, 96
  %v4162 = vpop.permute.xlu0 %4161
  %v4167 = vadd.f32 %v4123, %v4156
  %v4168 = vadd.f32 %v4124, %v4158
  %v4169 = vadd.f32 %v4125, %v4160
  %v4170 = vadd.f32 %v4126, %v4162
  %v4171 = vld [vmem:[#allocation2 + $0x28] sm:$0xfe]
  %v4172 = vld [vmem:[#allocation2 + $0xa8] sm:$0x1]
  %4173 = vset.pattern.permute.xlu0 6
  %4174 = vperm.xlu0 %4173, %v3902
  %v4175 = vpop.permute.xlu0 %4174
  %4177 = vset.pattern.permute.xlu0 6
  %4178 = vperm.xlu0 %4177, %v3903
  %v4179 = vpop.permute.xlu0 %4178
  %4181 = vset.pattern.permute.xlu0 6
  %4182 = vperm.xlu0 %4181, %v3904
  %v4183 = vpop.permute.xlu0 %4182
  %4185 = vset.pattern.permute.xlu0 6
  %4186 = vperm.xlu0 %4185, %v3905
  %v4187 = vpop.permute.xlu0 %4186
  %v4194 = vrot.slane %v4171, 1
  %v4195 = vrot.slane %v4099, 1
  %v4196 = vsel %vm1142, %v4194, %v4195
  %v4197 = vrot.slane %v4100, 1
  %v4198 = vsel %vm1142, %v4195, %v4197
  %v4199 = vrot.slane %v4101, 1
  %v4200 = vsel %vm1142, %v4197, %v4199
  %v4201 = vrot.slane %v4172, 1
  %v4202 = vsel %vm1142, %v4199, %v4201
  %4203 = vrot.lane.b32.xlu0 %v4196, 64
  %v4204 = vpop.permute.xlu0 %4203
  %4205 = vrot.lane.b32.xlu0 %v4198, 64
  %v4206 = vpop.permute.xlu0 %4205
  %4207 = vrot.lane.b32.xlu0 %v4200, 64
  %v4208 = vpop.permute.xlu0 %4207
  %4209 = vrot.lane.b32.xlu0 %v4202, 64
  %v4210 = vpop.permute.xlu0 %4209
  %v4215 = vmul.f32 %v4175, %v4204
  %v4216 = vmul.f32 %v4179, %v4206
  %v4217 = vmul.f32 %v4183, %v4208
  %v4218 = vmul.f32 %v4187, %v4210
  %v4219 = vadd.f32 %v4167, %v4215
  %v4220 = vadd.f32 %v4168, %v4216
  %v4221 = vadd.f32 %v4169, %v4217
  %v4222 = vadd.f32 %v4170, %v4218
  %v4223 = vld [vmem:[#allocation2 + $0x48] sm:$0xfe]
  %v4224 = vld [vmem:[#allocation2 + $0xc8] sm:$0x1]
  %4225 = vset.pattern.permute.xlu0 7
  %4226 = vperm.xlu0 %4225, %v3902
  %v4227 = vpop.permute.xlu0 %4226
  %4229 = vset.pattern.permute.xlu0 7
  %4230 = vperm.xlu0 %4229, %v3903
  %v4231 = vpop.permute.xlu0 %4230
  %4233 = vset.pattern.permute.xlu0 7
  %4234 = vperm.xlu0 %4233, %v3904
  %v4235 = vpop.permute.xlu0 %4234
  %4237 = vset.pattern.permute.xlu0 7
  %4238 = vperm.xlu0 %4237, %v3905
  %v4239 = vpop.permute.xlu0 %4238
  %v4246 = vrot.slane %v4223, 1
  %v4247 = vrot.slane %v4127, 1
  %v4248 = vsel %vm1142, %v4246, %v4247
  %v4249 = vrot.slane %v4128, 1
  %v4250 = vsel %vm1142, %v4247, %v4249
  %v4251 = vrot.slane %v4129, 1
  %v4252 = vsel %vm1142, %v4249, %v4251
  %v4253 = vrot.slane %v4224, 1
  %v4254 = vsel %vm1142, %v4251, %v4253
  %4255 = vrot.lane.b32.xlu0 %v4248, 32
  %v4256 = vpop.permute.xlu0 %4255
  %4257 = vrot.lane.b32.xlu0 %v4250, 32
  %v4258 = vpop.permute.xlu0 %4257
  %4259 = vrot.lane.b32.xlu0 %v4252, 32
  %v4260 = vpop.permute.xlu0 %4259
  %4261 = vrot.lane.b32.xlu0 %v4254, 32
  %v4262 = vpop.permute.xlu0 %4261
  %v4267 = vmul.f32 %v4227, %v4256
  %v4268 = vmul.f32 %v4231, %v4258
  %v4269 = vmul.f32 %v4235, %v4260
  %v4270 = vmul.f32 %v4239, %v4262
  %v4271 = vadd.f32 %v4219, %v4267
  %v4272 = vadd.f32 %v4220, %v4268
  %v4273 = vadd.f32 %v4221, %v4269
  %v4274 = vadd.f32 %v4222, %v4270
  %v4275 = vld [vmem:[#allocation2 + $0x70] sm:$0xfe]
  %v4276 = vld [vmem:[#allocation2 + $0x90] sm:$0xff]
  %v4277 = vld [vmem:[#allocation2 + $0xb0] sm:$0xff]
  %v4278 = vld [vmem:[#allocation2 + $0xd0] sm:$0xff]
  %v4279 = vld [vmem:[#allocation2 + $0xf0] sm:$0x1]
  %4280 = vset.pattern.permute.xlu0 8
  %4281 = vperm.xlu0 %4280, %v3902
  %v4282 = vpop.permute.xlu0 %4281
  %4284 = vset.pattern.permute.xlu0 8
  %4285 = vperm.xlu0 %4284, %v3903
  %v4286 = vpop.permute.xlu0 %4285
  %4288 = vset.pattern.permute.xlu0 8
  %4289 = vperm.xlu0 %4288, %v3904
  %v4290 = vpop.permute.xlu0 %4289
  %4292 = vset.pattern.permute.xlu0 8
  %4293 = vperm.xlu0 %4292, %v3905
  %v4294 = vpop.permute.xlu0 %4293
  %v4301 = vrot.slane %v4275, 1
  %v4302 = vrot.slane %v4276, 1
  %v4303 = vsel %vm1142, %v4301, %v4302
  %v4304 = vrot.slane %v4277, 1
  %v4305 = vsel %vm1142, %v4302, %v4304
  %v4306 = vrot.slane %v4278, 1
  %v4307 = vsel %vm1142, %v4304, %v4306
  %v4308 = vrot.slane %v4279, 1
  %v4309 = vsel %vm1142, %v4306, %v4308
  %v4314 = vmul.f32 %v4282, %v4303
  %v4315 = vmul.f32 %v4286, %v4305
  %v4316 = vmul.f32 %v4290, %v4307
  %v4317 = vmul.f32 %v4294, %v4309
  %v4318 = vadd.f32 %v4271, %v4314
  %v4319 = vadd.f32 %v4272, %v4315
  %v4320 = vadd.f32 %v4273, %v4316
  %v4321 = vadd.f32 %v4274, %v4317
  %v4322 = vld [vmem:[%s9] sm:$0x1]
  %v4324 = vlaneseq
  %v4325 = vshrl.u32 %v4324, 7
  %v4326 = vsub.s32 0, %v4325
  %v4327 = vrot.slane %v4322, %v4326
  %v4329 = vadd.f32 %v4318, %v4327
  %v4330 = vadd.f32 %v4319, %v4327
  %v4331 = vadd.f32 %v4320, %v4327
  %v4332 = vadd.f32 %v4321, %v4327
  %v4333 = vmax.f32 %v4329, 0.0
  %v4334 = vmax.f32 %v4330, 0.0
  %v4335 = vmax.f32 %v4331, 0.0
  %v4336 = vmax.f32 %v4332, 0.0
  %v4337 = vld [vmem:[%s10] sm:$0xff]
  %v4338 = vld [vmem:[%s10 + $0x8] sm:$0xff]
  %v4339 = vld [vmem:[%s10 + $0x10] sm:$0xff]
  %v4340 = vld [vmem:[%s10 + $0x18] sm:$0xff]
  %v4341 = vpack.c.bf16 %v4334, %v4333
  %v4342 = vpack.c.bf16 %v4336, %v4335
  %v4347 = vunpack.c.l.b16 %v4337
  %v4348 = vunpack.c.h.b16 %v4337
  %v4349 = vunpack.c.l.b16 %v4338
  %v4350 = vunpack.c.h.b16 %v4338
  %v4351 = vunpack.c.l.b16 %v4339
  %v4352 = vunpack.c.h.b16 %v4339
  %v4353 = vunpack.c.l.b16 %v4340
  %v4354 = vunpack.c.h.b16 %v4340
  %v4355 = vpack.c.b16 %v4349, %v4347
  %v4356 = vpack.c.b16 %v4350, %v4348
  %v4357 = vpack.c.b16 %v4353, %v4351
  %v4358 = vpack.c.b16 %v4354, %v4352
  %v4364 = vsel %vm3776, %v4341, 0
  %v4367 = vsel %vm3776, %v4342, 0
  %4369 = vmatprep.subr.bf16.mxu0 %v4356
  %4370 = vmatpush1.bf16.msra.mxu0 %v4355
  %4371 = vmatprep.subr.bf16.mxu0 %v4358
  %4372 = vmatpush1.bf16.msra.mxu0 %v4357
  %4373 = vmatprep.subr.bf16.mxu0 0
  %4374 = vmatpush1.bf16.msra.mxu0 0
  %4375 = vmatprep.subr.bf16.mxu0 0
  %4376 = vmatpush1.bf16.msra.mxu0 0
  %4377 = vmatprep.subr.bf16.mxu0 0
  %4378 = vmatpush1.bf16.msra.mxu0 0
  %4379 = vmatprep.subr.bf16.mxu0 0
  %4380 = vmatpush1.bf16.msra.mxu0 0
  %4381 = vmatprep.subr.bf16.mxu0 0
  %4382 = vmatpush1.bf16.msra.mxu0 0
  %4383 = vmatprep.subr.bf16.mxu0 0
  %4384 = vmatpush1.bf16.msra.mxu0 0
  %4385 = vmatprep.subr.bf16.mxu0 0
  %4386 = vmatpush1.bf16.msra.mxu0 0
  %4387 = vmatprep.subr.bf16.mxu0 0
  %4388 = vmatpush1.bf16.msra.mxu0 0
  %4389 = vmatprep.subr.bf16.mxu0 0
  %4390 = vmatpush1.bf16.msra.mxu0 0
  %4391 = vmatprep.subr.bf16.mxu0 0
  %4392 = vmatpush1.bf16.msra.mxu0 0
  %4393 = vmatprep.subr.bf16.mxu0 0
  %4394 = vmatpush1.bf16.msra.mxu0 0
  %4395 = vmatprep.subr.bf16.mxu0 0
  %4396 = vmatpush1.bf16.msra.mxu0 0
  %4397 = vmatprep.subr.bf16.mxu0 0
  %4398 = vmatpush1.bf16.msra.mxu0 0
  %4399 = vmatprep.subr.bf16.mxu0 0
  %4400 = vmatpush1.bf16.msra.mxu0 0
  %4401 = vmatprep.mubr.bf16.mxu0 0
  %4402 = vmatmul.mubr.bf16.gmra.mrb[0].mxu0 %v4364
  %v4403 = vpop.f32.mrb[0].mxu0
  %v4404 = vadd.f32 0.0, %v4403
  %v4405 = vpop.f32.mrb[0].mxu0
  %v4406 = vadd.f32 0.0, %v4405
  %v4407 = vpop.f32.mrb[0].mxu0
  %v4408 = vadd.f32 0.0, %v4407
  %v4409 = vpop.f32.mrb[0].mxu0
  %v4410 = vadd.f32 0.0, %v4409
  %4411 = vmatprep.mubr.bf16.mxu0 0
  %4412 = vmatmul.mubr.bf16.gmra.mrb[0].mxu0 %v4367
  %v4413 = vpop.f32.mrb[0].mxu0
  %v4414 = vadd.f32 0.0, %v4413
  %v4415 = vpop.f32.mrb[0].mxu0
  %v4416 = vadd.f32 0.0, %v4415
  %v4417 = vpop.f32.mrb[0].mxu0
  %v4418 = vadd.f32 0.0, %v4417
  %v4419 = vpop.f32.mrb[0].mxu0
  %v4420 = vadd.f32 0.0, %v4419
  %4421 = vdwg.mxu0
  %4422 = vst [vmem:[#allocation2 + $0x40] sm:$0xff] %v4404
  %4423 = vst.msk [vmem:[#allocation2 + $0x48] sm:$0xff] %vm203, %v4406
  %4424 = vst [vmem:[#allocation2 + $0x60] sm:$0xff] %v4408
  %4425 = vst.msk [vmem:[#allocation2 + $0x68] sm:$0xff] %vm203, %v4410
  %4426 = vst [vmem:[#allocation2 + $0x80] sm:$0xff] %v4414
  %4427 = vst.msk [vmem:[#allocation2 + $0x88] sm:$0xff] %vm203, %v4416
  %4428 = vst [vmem:[#allocation2 + $0xa0] sm:$0xff] %v4418
  %4429 = vst.msk [vmem:[#allocation2 + $0xa8] sm:$0xff] %vm203, %v4420
  %v4430 = vld [vmem:[#allocation2] sm:$0x80]
  %v4431 = vld [vmem:[#allocation2 + $0x20] sm:$0xff]
  %v4432 = vld [vmem:[#allocation2 + $0x40] sm:$0xff]
  %v4433 = vld [vmem:[#allocation2 + $0x60] sm:$0xff]
  %v4434 = vld [vmem:[#allocation2 + $0x80] sm:$0x7f]
  %v4435 = vld [vmem:[%s8] sm:$0xff]
  %v4436 = vld [vmem:[%s8 + $0x8] sm:$0xff]
  %v4437 = vld [vmem:[%s8 + $0x10] sm:$0xff]
  %v4438 = vld [vmem:[%s8 + $0x18] sm:$0xff]
  %4440 = vset.pattern.permute.xlu0 0
  %4441 = vperm.xlu0 %4440, %v4435
  %v4442 = vpop.permute.xlu0 %4441
  %4445 = vset.pattern.permute.xlu0 0
  %4446 = vperm.xlu0 %4445, %v4436
  %v4447 = vpop.permute.xlu0 %4446
  %4450 = vset.pattern.permute.xlu0 0
  %4451 = vperm.xlu0 %4450, %v4437
  %v4452 = vpop.permute.xlu0 %4451
  %4455 = vset.pattern.permute.xlu0 0
  %4456 = vperm.xlu0 %4455, %v4438
  %v4457 = vpop.permute.xlu0 %4456
  %v4464 = vrot.slane %v4430, 7
  %v4465 = vrot.slane %v4431, 7
  %v4466 = vsel %vm817, %v4464, %v4465
  %v4467 = vrot.slane %v4432, 7
  %v4468 = vsel %vm817, %v4465, %v4467
  %v4469 = vrot.slane %v4433, 7
  %v4470 = vsel %vm817, %v4467, %v4469
  %v4471 = vrot.slane %v4434, 7
  %v4472 = vsel %vm817, %v4469, %v4471
  %v4477 = vmul.f32 %v4442, %v4466
  %v4478 = vmul.f32 %v4447, %v4468
  %v4479 = vmul.f32 %v4452, %v4470
  %v4480 = vmul.f32 %v4457, %v4472
  %v4481 = vld [vmem:[#allocation2 + $0x20] sm:$0x80]
  %v4482 = vld [vmem:[#allocation2 + $0x40] sm:$0xff]
  %v4483 = vld [vmem:[#allocation2 + $0x60] sm:$0xff]
  %v4484 = vld [vmem:[#allocation2 + $0x80] sm:$0xff]
  %v4485 = vld [vmem:[#allocation2 + $0xa0] sm:$0x7f]
  %4486 = vset.pattern.permute.xlu0 1
  %4487 = vperm.xlu0 %4486, %v4435
  %v4488 = vpop.permute.xlu0 %4487
  %4490 = vset.pattern.permute.xlu0 1
  %4491 = vperm.xlu0 %4490, %v4436
  %v4492 = vpop.permute.xlu0 %4491
  %4494 = vset.pattern.permute.xlu0 1
  %4495 = vperm.xlu0 %4494, %v4437
  %v4496 = vpop.permute.xlu0 %4495
  %4498 = vset.pattern.permute.xlu0 1
  %4499 = vperm.xlu0 %4498, %v4438
  %v4500 = vpop.permute.xlu0 %4499
  %v4507 = vrot.slane %v4481, 7
  %v4508 = vrot.slane %v4482, 7
  %v4509 = vsel %vm817, %v4507, %v4508
  %v4510 = vrot.slane %v4483, 7
  %v4511 = vsel %vm817, %v4508, %v4510
  %v4512 = vrot.slane %v4484, 7
  %v4513 = vsel %vm817, %v4510, %v4512
  %v4514 = vrot.slane %v4485, 7
  %v4515 = vsel %vm817, %v4512, %v4514
  %4516 = vrot.lane.b32.xlu0 %v4509, 112
  %v4517 = vpop.permute.xlu0 %4516
  %4518 = vrot.lane.b32.xlu0 %v4511, 112
  %v4519 = vpop.permute.xlu0 %4518
  %4520 = vrot.lane.b32.xlu0 %v4513, 112
  %v4521 = vpop.permute.xlu0 %4520
  %4522 = vrot.lane.b32.xlu0 %v4515, 112
  %v4523 = vpop.permute.xlu0 %4522
  %v4528 = vmul.f32 %v4488, %v4517
  %v4529 = vmul.f32 %v4492, %v4519
  %v4530 = vmul.f32 %v4496, %v4521
  %v4531 = vmul.f32 %v4500, %v4523
  %v4532 = vadd.f32 %v4477, %v4528
  %v4533 = vadd.f32 %v4478, %v4529
  %v4534 = vadd.f32 %v4479, %v4530
  %v4535 = vadd.f32 %v4480, %v4531
  %v4536 = vld [vmem:[#allocation2 + $0x40] sm:$0x80]
  %v4537 = vld [vmem:[#allocation2 + $0x60] sm:$0xff]
  %v4538 = vld [vmem:[#allocation2 + $0x80] sm:$0xff]
  %v4539 = vld [vmem:[#allocation2 + $0xa0] sm:$0xff]
  %v4540 = vld [vmem:[#allocation2 + $0xc0] sm:$0x7f]
  %4541 = vset.pattern.permute.xlu0 2
  %4542 = vperm.xlu0 %4541, %v4435
  %v4543 = vpop.permute.xlu0 %4542
  %4545 = vset.pattern.permute.xlu0 2
  %4546 = vperm.xlu0 %4545, %v4436
  %v4547 = vpop.permute.xlu0 %4546
  %4549 = vset.pattern.permute.xlu0 2
  %4550 = vperm.xlu0 %4549, %v4437
  %v4551 = vpop.permute.xlu0 %4550
  %4553 = vset.pattern.permute.xlu0 2
  %4554 = vperm.xlu0 %4553, %v4438
  %v4555 = vpop.permute.xlu0 %4554
  %v4562 = vrot.slane %v4536, 7
  %v4563 = vrot.slane %v4537, 7
  %v4564 = vsel %vm817, %v4562, %v4563
  %v4565 = vrot.slane %v4538, 7
  %v4566 = vsel %vm817, %v4563, %v4565
  %v4567 = vrot.slane %v4539, 7
  %v4568 = vsel %vm817, %v4565, %v4567
  %v4569 = vrot.slane %v4540, 7
  %v4570 = vsel %vm817, %v4567, %v4569
  %4571 = vrot.lane.b32.xlu0 %v4564, 96
  %v4572 = vpop.permute.xlu0 %4571
  %4573 = vrot.lane.b32.xlu0 %v4566, 96
  %v4574 = vpop.permute.xlu0 %4573
  %4575 = vrot.lane.b32.xlu0 %v4568, 96
  %v4576 = vpop.permute.xlu0 %4575
  %4577 = vrot.lane.b32.xlu0 %v4570, 96
  %v4578 = vpop.permute.xlu0 %4577
  %v4583 = vmul.f32 %v4543, %v4572
  %v4584 = vmul.f32 %v4547, %v4574
  %v4585 = vmul.f32 %v4551, %v4576
  %v4586 = vmul.f32 %v4555, %v4578
  %v4587 = vadd.f32 %v4532, %v4583
  %v4588 = vadd.f32 %v4533, %v4584
  %v4589 = vadd.f32 %v4534, %v4585
  %v4590 = vadd.f32 %v4535, %v4586
  %v4591 = vld [vmem:[#allocation2 + $0x80] sm:$0xff]
  %4592 = vset.pattern.permute.xlu0 3
  %4593 = vperm.xlu0 %4592, %v4435
  %v4594 = vpop.permute.xlu0 %4593
  %4596 = vset.pattern.permute.xlu0 3
  %4597 = vperm.xlu0 %4596, %v4436
  %v4598 = vpop.permute.xlu0 %4597
  %4600 = vset.pattern.permute.xlu0 3
  %4601 = vperm.xlu0 %4600, %v4437
  %v4602 = vpop.permute.xlu0 %4601
  %4604 = vset.pattern.permute.xlu0 3
  %4605 = vperm.xlu0 %4604, %v4438
  %v4606 = vpop.permute.xlu0 %4605
  %v4608 = vmul.f32 %v4594, %v4431
  %v4609 = vmul.f32 %v4598, %v4432
  %v4610 = vmul.f32 %v4602, %v4433
  %v4611 = vmul.f32 %v4606, %v4591
  %4616 = vrot.lane.b32.xlu0 %v4608, 80
  %v4617 = vpop.permute.xlu0 %4616
  %4618 = vrot.lane.b32.xlu0 %v4609, 80
  %v4619 = vpop.permute.xlu0 %4618
  %4620 = vrot.lane.b32.xlu0 %v4610, 80
  %v4621 = vpop.permute.xlu0 %4620
  %4622 = vrot.lane.b32.xlu0 %v4611, 80
  %v4623 = vpop.permute.xlu0 %4622
  %v4628 = vadd.f32 %v4587, %v4617
  %v4629 = vadd.f32 %v4588, %v4619
  %v4630 = vadd.f32 %v4589, %v4621
  %v4631 = vadd.f32 %v4590, %v4623
  %v4632 = vld [vmem:[#allocation2 + $0xa0] sm:$0xff]
  %4633 = vset.pattern.permute.xlu0 4
  %4634 = vperm.xlu0 %4633, %v4435
  %v4635 = vpop.permute.xlu0 %4634
  %4637 = vset.pattern.permute.xlu0 4
  %4638 = vperm.xlu0 %4637, %v4436
  %v4639 = vpop.permute.xlu0 %4638
  %4641 = vset.pattern.permute.xlu0 4
  %4642 = vperm.xlu0 %4641, %v4437
  %v4643 = vpop.permute.xlu0 %4642
  %4645 = vset.pattern.permute.xlu0 4
  %4646 = vperm.xlu0 %4645, %v4438
  %v4647 = vpop.permute.xlu0 %4646
  %v4649 = vmul.f32 %v4635, %v4482
  %v4650 = vmul.f32 %v4639, %v4483
  %v4651 = vmul.f32 %v4643, %v4484
  %v4652 = vmul.f32 %v4647, %v4632
  %4657 = vrot.lane.b32.xlu0 %v4649, 64
  %v4658 = vpop.permute.xlu0 %4657
  %4659 = vrot.lane.b32.xlu0 %v4650, 64
  %v4660 = vpop.permute.xlu0 %4659
  %4661 = vrot.lane.b32.xlu0 %v4651, 64
  %v4662 = vpop.permute.xlu0 %4661
  %4663 = vrot.lane.b32.xlu0 %v4652, 64
  %v4664 = vpop.permute.xlu0 %4663
  %v4669 = vadd.f32 %v4628, %v4658
  %v4670 = vadd.f32 %v4629, %v4660
  %v4671 = vadd.f32 %v4630, %v4662
  %v4672 = vadd.f32 %v4631, %v4664
  %v4673 = vld [vmem:[#allocation2 + $0xc0] sm:$0xff]
  %4674 = vset.pattern.permute.xlu0 5
  %4675 = vperm.xlu0 %4674, %v4435
  %v4676 = vpop.permute.xlu0 %4675
  %4678 = vset.pattern.permute.xlu0 5
  %4679 = vperm.xlu0 %4678, %v4436
  %v4680 = vpop.permute.xlu0 %4679
  %4682 = vset.pattern.permute.xlu0 5
  %4683 = vperm.xlu0 %4682, %v4437
  %v4684 = vpop.permute.xlu0 %4683
  %4686 = vset.pattern.permute.xlu0 5
  %4687 = vperm.xlu0 %4686, %v4438
  %v4688 = vpop.permute.xlu0 %4687
  %v4690 = vmul.f32 %v4676, %v4537
  %v4691 = vmul.f32 %v4680, %v4538
  %v4692 = vmul.f32 %v4684, %v4539
  %v4693 = vmul.f32 %v4688, %v4673
  %4698 = vrot.lane.b32.xlu0 %v4690, 48
  %v4699 = vpop.permute.xlu0 %4698
  %4700 = vrot.lane.b32.xlu0 %v4691, 48
  %v4701 = vpop.permute.xlu0 %4700
  %4702 = vrot.lane.b32.xlu0 %v4692, 48
  %v4703 = vpop.permute.xlu0 %4702
  %4704 = vrot.lane.b32.xlu0 %v4693, 48
  %v4705 = vpop.permute.xlu0 %4704
  %v4710 = vadd.f32 %v4669, %v4699
  %v4711 = vadd.f32 %v4670, %v4701
  %v4712 = vadd.f32 %v4671, %v4703
  %v4713 = vadd.f32 %v4672, %v4705
  %v4714 = vld [vmem:[#allocation2 + $0x20] sm:$0xfe]
  %v4715 = vld [vmem:[#allocation2 + $0xa0] sm:$0x1]
  %4716 = vset.pattern.permute.xlu0 6
  %4717 = vperm.xlu0 %4716, %v4435
  %v4718 = vpop.permute.xlu0 %4717
  %4720 = vset.pattern.permute.xlu0 6
  %4721 = vperm.xlu0 %4720, %v4436
  %v4722 = vpop.permute.xlu0 %4721
  %4724 = vset.pattern.permute.xlu0 6
  %4725 = vperm.xlu0 %4724, %v4437
  %v4726 = vpop.permute.xlu0 %4725
  %4728 = vset.pattern.permute.xlu0 6
  %4729 = vperm.xlu0 %4728, %v4438
  %v4730 = vpop.permute.xlu0 %4729
  %v4734 = vrot.slane %v4714, 1
  %v4735 = vrot.slane %v4482, 1
  %v4736 = vsel %vm1142, %v4734, %v4735
  %v4737 = vrot.slane %v4483, 1
  %v4738 = vsel %vm1142, %v4735, %v4737
  %v4739 = vrot.slane %v4484, 1
  %v4740 = vsel %vm1142, %v4737, %v4739
  %v4741 = vrot.slane %v4715, 1
  %v4742 = vsel %vm1142, %v4739, %v4741
  %4743 = vrot.lane.b32.xlu0 %v4736, 32
  %v4744 = vpop.permute.xlu0 %4743
  %4745 = vrot.lane.b32.xlu0 %v4738, 32
  %v4746 = vpop.permute.xlu0 %4745
  %4747 = vrot.lane.b32.xlu0 %v4740, 32
  %v4748 = vpop.permute.xlu0 %4747
  %4749 = vrot.lane.b32.xlu0 %v4742, 32
  %v4750 = vpop.permute.xlu0 %4749
  %v4755 = vmul.f32 %v4718, %v4744
  %v4756 = vmul.f32 %v4722, %v4746
  %v4757 = vmul.f32 %v4726, %v4748
  %v4758 = vmul.f32 %v4730, %v4750
  %v4759 = vadd.f32 %v4710, %v4755
  %v4760 = vadd.f32 %v4711, %v4756
  %v4761 = vadd.f32 %v4712, %v4757
  %v4762 = vadd.f32 %v4713, %v4758
  %v4763 = vld [vmem:[#allocation2 + $0x40] sm:$0xfe]
  %v4764 = vld [vmem:[#allocation2 + $0xc0] sm:$0x1]
  %4765 = vset.pattern.permute.xlu0 7
  %4766 = vperm.xlu0 %4765, %v4435
  %v4767 = vpop.permute.xlu0 %4766
  %4769 = vset.pattern.permute.xlu0 7
  %4770 = vperm.xlu0 %4769, %v4436
  %v4771 = vpop.permute.xlu0 %4770
  %4773 = vset.pattern.permute.xlu0 7
  %4774 = vperm.xlu0 %4773, %v4437
  %v4775 = vpop.permute.xlu0 %4774
  %4777 = vset.pattern.permute.xlu0 7
  %4778 = vperm.xlu0 %4777, %v4438
  %v4779 = vpop.permute.xlu0 %4778
  %v4783 = vrot.slane %v4763, 1
  %v4784 = vrot.slane %v4537, 1
  %v4785 = vsel %vm1142, %v4783, %v4784
  %v4786 = vrot.slane %v4538, 1
  %v4787 = vsel %vm1142, %v4784, %v4786
  %v4788 = vrot.slane %v4539, 1
  %v4789 = vsel %vm1142, %v4786, %v4788
  %v4790 = vrot.slane %v4764, 1
  %v4791 = vsel %vm1142, %v4788, %v4790
  %4792 = vrot.lane.b32.xlu0 %v4785, 16
  %v4793 = vpop.permute.xlu0 %4792
  %4794 = vrot.lane.b32.xlu0 %v4787, 16
  %v4795 = vpop.permute.xlu0 %4794
  %4796 = vrot.lane.b32.xlu0 %v4789, 16
  %v4797 = vpop.permute.xlu0 %4796
  %4798 = vrot.lane.b32.xlu0 %v4791, 16
  %v4799 = vpop.permute.xlu0 %4798
  %v4804 = vmul.f32 %v4767, %v4793
  %v4805 = vmul.f32 %v4771, %v4795
  %v4806 = vmul.f32 %v4775, %v4797
  %v4807 = vmul.f32 %v4779, %v4799
  %v4808 = vadd.f32 %v4759, %v4804
  %v4809 = vadd.f32 %v4760, %v4805
  %v4810 = vadd.f32 %v4761, %v4806
  %v4811 = vadd.f32 %v4762, %v4807
  %v4812 = vld [vmem:[#allocation2 + $0x68] sm:$0xfe]
  %v4813 = vld [vmem:[#allocation2 + $0x88] sm:$0xff]
  %v4814 = vld [vmem:[#allocation2 + $0xa8] sm:$0xff]
  %v4815 = vld [vmem:[#allocation2 + $0xc8] sm:$0xff]
  %v4816 = vld [vmem:[#allocation2 + $0xe8] sm:$0x1]
  %4817 = vset.pattern.permute.xlu0 8
  %4818 = vperm.xlu0 %4817, %v4435
  %v4819 = vpop.permute.xlu0 %4818
  %4821 = vset.pattern.permute.xlu0 8
  %4822 = vperm.xlu0 %4821, %v4436
  %v4823 = vpop.permute.xlu0 %4822
  %4825 = vset.pattern.permute.xlu0 8
  %4826 = vperm.xlu0 %4825, %v4437
  %v4827 = vpop.permute.xlu0 %4826
  %4829 = vset.pattern.permute.xlu0 8
  %4830 = vperm.xlu0 %4829, %v4438
  %v4831 = vpop.permute.xlu0 %4830
  %v4838 = vrot.slane %v4812, 1
  %v4839 = vrot.slane %v4813, 1
  %v4840 = vsel %vm1142, %v4838, %v4839
  %v4841 = vrot.slane %v4814, 1
  %v4842 = vsel %vm1142, %v4839, %v4841
  %v4843 = vrot.slane %v4815, 1
  %v4844 = vsel %vm1142, %v4841, %v4843
  %v4845 = vrot.slane %v4816, 1
  %v4846 = vsel %vm1142, %v4843, %v4845
  %v4851 = vmul.f32 %v4819, %v4840
  %v4852 = vmul.f32 %v4823, %v4842
  %v4853 = vmul.f32 %v4827, %v4844
  %v4854 = vmul.f32 %v4831, %v4846
  %v4855 = vadd.f32 %v4808, %v4851
  %v4856 = vadd.f32 %v4809, %v4852
  %v4857 = vadd.f32 %v4810, %v4853
  %v4858 = vadd.f32 %v4811, %v4854
  %v4859 = vmax.f32 %v4855, 0.0
  %v4860 = vmax.f32 %v4856, 0.0
  %v4861 = vmax.f32 %v4857, 0.0
  %v4862 = vmax.f32 %v4858, 0.0
  %v4863 = vld [vmem:[%s11] sm:$0xf]
  %v4864 = vld [vmem:[%s11 + $0x4] sm:$0xf]
  %v4865 = vpack.c.bf16 %v4860, %v4859
  %v4866 = vpack.c.bf16 %v4862, %v4861
  %v4869 = vunpack.c.l.b16 %v4863
  %v4870 = vunpack.c.l.b16 %v4864
  %v4871 = vpack.c.b16 %v4870, %v4869
  %v4874 = vsel %vm203, %v4865, 0
  %v4877 = vsel %vm203, %v4866, 0
  %4879 = vmatprep.subr.bf16.mxu0 0
  %4880 = vmatpush1.bf16.msra.mxu0 %v4871
  %4881 = vmatprep.subr.bf16.mxu0 0
  %4882 = vmatpush1.bf16.msra.mxu0 0
  %4883 = vmatprep.subr.bf16.mxu0 0
  %4884 = vmatpush1.bf16.msra.mxu0 0
  %4885 = vmatprep.subr.bf16.mxu0 0
  %4886 = vmatpush1.bf16.msra.mxu0 0
  %4887 = vmatprep.subr.bf16.mxu0 0
  %4888 = vmatpush1.bf16.msra.mxu0 0
  %4889 = vmatprep.subr.bf16.mxu0 0
  %4890 = vmatpush1.bf16.msra.mxu0 0
  %4891 = vmatprep.subr.bf16.mxu0 0
  %4892 = vmatpush1.bf16.msra.mxu0 0
  %4893 = vmatprep.subr.bf16.mxu0 0
  %4894 = vmatpush1.bf16.msra.mxu0 0
  %4895 = vmatprep.subr.bf16.mxu0 0
  %4896 = vmatpush1.bf16.msra.mxu0 0
  %4897 = vmatprep.subr.bf16.mxu0 0
  %4898 = vmatpush1.bf16.msra.mxu0 0
  %4899 = vmatprep.subr.bf16.mxu0 0
  %4900 = vmatpush1.bf16.msra.mxu0 0
  %4901 = vmatprep.subr.bf16.mxu0 0
  %4902 = vmatpush1.bf16.msra.mxu0 0
  %4903 = vmatprep.subr.bf16.mxu0 0
  %4904 = vmatpush1.bf16.msra.mxu0 0
  %4905 = vmatprep.subr.bf16.mxu0 0
  %4906 = vmatpush1.bf16.msra.mxu0 0
  %4907 = vmatprep.subr.bf16.mxu0 0
  %4908 = vmatpush1.bf16.msra.mxu0 0
  %4909 = vmatprep.subr.bf16.mxu0 0
  %4910 = vmatpush1.bf16.msra.mxu0 0
  %4911 = vmatprep.mubr.bf16.mxu0 0
  %4912 = vmatmul.mubr.bf16.gmra.mrb[0].mxu0 %v4874
  %v4913 = vpop.f32.mrb[0].mxu0
  %v4914 = vadd.f32 0.0, %v4913
  %v4915 = vpop.f32.mrb[0].mxu0
  %v4916 = vpop.f32.mrb[0].mxu0
  %v4917 = vadd.f32 0.0, %v4916
  %v4918 = vpop.f32.mrb[0].mxu0
  %4919 = vmatprep.mubr.bf16.mxu0 0
  %4920 = vmatmul.mubr.bf16.gmra.mrb[0].mxu0 %v4877
  %v4921 = vpop.f32.mrb[0].mxu0
  %v4922 = vadd.f32 0.0, %v4921
  %v4923 = vpop.f32.mrb[0].mxu0
  %v4924 = vpop.f32.mrb[0].mxu0
  %v4925 = vadd.f32 0.0, %v4924
  %v4926 = vpop.f32.mrb[0].mxu0
  %4927 = vdwg.mxu0
  %v4928 = vadd.f32 %v4329, %v4914
  %v4929 = vadd.f32 %v4330, %v4917
  %v4930 = vadd.f32 %v4331, %v4922
  %v4931 = vadd.f32 %v4332, %v4925
  %v4932 = vmax.f32 %v4928, 0.0
  %v4933 = vmax.f32 %v4929, 0.0
  %v4934 = vmax.f32 %v4930, 0.0
  %v4935 = vmax.f32 %v4931, 0.0
  %v4936 = vld [vmem:[%s12] sm:$0xff]
  %v4937 = vld [vmem:[%s12 + $0x8] sm:$0xff]
  %v4938 = vld [vmem:[%s12 + $0x10] sm:$0xff]
  %v4939 = vld [vmem:[%s12 + $0x18] sm:$0xff]
  %v4940 = vpack.c.bf16 %v4933, %v4932
  %v4941 = vpack.c.bf16 %v4935, %v4934
  %v4946 = vunpack.c.l.b16 %v4936
  %v4947 = vunpack.c.h.b16 %v4936
  %v4948 = vunpack.c.l.b16 %v4937
  %v4949 = vunpack.c.h.b16 %v4937
  %v4950 = vunpack.c.l.b16 %v4938
  %v4951 = vunpack.c.h.b16 %v4938
  %v4952 = vunpack.c.l.b16 %v4939
  %v4953 = vunpack.c.h.b16 %v4939
  %v4954 = vpack.c.b16 %v4948, %v4946
  %v4955 = vpack.c.b16 %v4949, %v4947
  %v4956 = vpack.c.b16 %v4952, %v4950
  %v4957 = vpack.c.b16 %v4953, %v4951
  %v4963 = vsel %vm3776, %v4940, 0
  %v4966 = vsel %vm3776, %v4941, 0
  %4968 = vmatprep.subr.bf16.mxu0 %v4955
  %4969 = vmatpush1.bf16.msra.mxu0 %v4954
  %4970 = vmatprep.subr.bf16.mxu0 %v4957
  %4971 = vmatpush1.bf16.msra.mxu0 %v4956
  %4972 = vmatprep.subr.bf16.mxu0 0
  %4973 = vmatpush1.bf16.msra.mxu0 0
  %4974 = vmatprep.subr.bf16.mxu0 0
  %4975 = vmatpush1.bf16.msra.mxu0 0
  %4976 = vmatprep.subr.bf16.mxu0 0
  %4977 = vmatpush1.bf16.msra.mxu0 0
  %4978 = vmatprep.subr.bf16.mxu0 0
  %4979 = vmatpush1.bf16.msra.mxu0 0
  %4980 = vmatprep.subr.bf16.mxu0 0
  %4981 = vmatpush1.bf16.msra.mxu0 0
  %4982 = vmatprep.subr.bf16.mxu0 0
  %4983 = vmatpush1.bf16.msra.mxu0 0
  %4984 = vmatprep.subr.bf16.mxu0 0
  %4985 = vmatpush1.bf16.msra.mxu0 0
  %4986 = vmatprep.subr.bf16.mxu0 0
  %4987 = vmatpush1.bf16.msra.mxu0 0
  %4988 = vmatprep.subr.bf16.mxu0 0
  %4989 = vmatpush1.bf16.msra.mxu0 0
  %4990 = vmatprep.subr.bf16.mxu0 0
  %4991 = vmatpush1.bf16.msra.mxu0 0
  %4992 = vmatprep.subr.bf16.mxu0 0
  %4993 = vmatpush1.bf16.msra.mxu0 0
  %4994 = vmatprep.subr.bf16.mxu0 0
  %4995 = vmatpush1.bf16.msra.mxu0 0
  %4996 = vmatprep.subr.bf16.mxu0 0
  %4997 = vmatpush1.bf16.msra.mxu0 0
  %4998 = vmatprep.subr.bf16.mxu0 0
  %4999 = vmatpush1.bf16.msra.mxu0 0
  %5000 = vmatprep.mubr.bf16.mxu0 0
  %5001 = vmatmul.mubr.bf16.gmra.mrb[0].mxu0 %v4963
  %v5002 = vpop.f32.mrb[0].mxu0
  %v5003 = vadd.f32 0.0, %v5002
  %v5004 = vpop.f32.mrb[0].mxu0
  %v5005 = vadd.f32 0.0, %v5004
  %v5006 = vpop.f32.mrb[0].mxu0
  %v5007 = vadd.f32 0.0, %v5006
  %v5008 = vpop.f32.mrb[0].mxu0
  %v5009 = vadd.f32 0.0, %v5008
  %5010 = vmatprep.mubr.bf16.mxu0 0
  %5011 = vmatmul.mubr.bf16.gmra.mrb[0].mxu0 %v4966
  %v5012 = vpop.f32.mrb[0].mxu0
  %v5013 = vadd.f32 0.0, %v5012
  %v5014 = vpop.f32.mrb[0].mxu0
  %v5015 = vadd.f32 0.0, %v5014
  %v5016 = vpop.f32.mrb[0].mxu0
  %v5017 = vadd.f32 0.0, %v5016
  %v5018 = vpop.f32.mrb[0].mxu0
  %v5019 = vadd.f32 0.0, %v5018
  %5020 = vdwg.mxu0
  %5021 = vst [vmem:[#allocation2 + $0x40] sm:$0xff] %v5003
  %5022 = vst.msk [vmem:[#allocation2 + $0x48] sm:$0xff] %vm203, %v5005
  %5023 = vst [vmem:[#allocation2 + $0x60] sm:$0xff] %v5007
  %5024 = vst.msk [vmem:[#allocation2 + $0x68] sm:$0xff] %vm203, %v5009
  %5025 = vst [vmem:[#allocation2 + $0x80] sm:$0xff] %v5013
  %5026 = vst.msk [vmem:[#allocation2 + $0x88] sm:$0xff] %vm203, %v5015
  %5027 = vst [vmem:[#allocation2 + $0xa0] sm:$0xff] %v5017
  %5028 = vst.msk [vmem:[#allocation2 + $0xa8] sm:$0xff] %vm203, %v5019
  %v5029 = vld [vmem:[#allocation2] sm:$0x80]
  %v5030 = vld [vmem:[#allocation2 + $0x20] sm:$0xff]
  %v5031 = vld [vmem:[#allocation2 + $0x40] sm:$0xff]
  %v5032 = vld [vmem:[#allocation2 + $0x60] sm:$0xff]
  %v5033 = vld [vmem:[#allocation2 + $0x80] sm:$0x7f]
  %v5034 = vld [vmem:[%s8] sm:$0xff]
  %v5035 = vld [vmem:[%s8 + $0x8] sm:$0xff]
  %v5036 = vld [vmem:[%s8 + $0x10] sm:$0xff]
  %v5037 = vld [vmem:[%s8 + $0x18] sm:$0xff]
  %5039 = vset.pattern.permute.xlu0 0
  %5040 = vperm.xlu0 %5039, %v5034
  %v5041 = vpop.permute.xlu0 %5040
  %5044 = vset.pattern.permute.xlu0 0
  %5045 = vperm.xlu0 %5044, %v5035
  %v5046 = vpop.permute.xlu0 %5045
  %5049 = vset.pattern.permute.xlu0 0
  %5050 = vperm.xlu0 %5049, %v5036
  %v5051 = vpop.permute.xlu0 %5050
  %5054 = vset.pattern.permute.xlu0 0
  %5055 = vperm.xlu0 %5054, %v5037
  %v5056 = vpop.permute.xlu0 %5055
  %v5063 = vrot.slane %v5029, 7
  %v5064 = vrot.slane %v5030, 7
  %v5065 = vsel %vm817, %v5063, %v5064
  %v5066 = vrot.slane %v5031, 7
  %v5067 = vsel %vm817, %v5064, %v5066
  %v5068 = vrot.slane %v5032, 7
  %v5069 = vsel %vm817, %v5066, %v5068
  %v5070 = vrot.slane %v5033, 7
  %v5071 = vsel %vm817, %v5068, %v5070
  %v5076 = vmul.f32 %v5041, %v5065
  %v5077 = vmul.f32 %v5046, %v5067
  %v5078 = vmul.f32 %v5051, %v5069
  %v5079 = vmul.f32 %v5056, %v5071
  %v5080 = vld [vmem:[#allocation2 + $0x20] sm:$0x80]
  %v5081 = vld [vmem:[#allocation2 + $0x40] sm:$0xff]
  %v5082 = vld [vmem:[#allocation2 + $0x60] sm:$0xff]
  %v5083 = vld [vmem:[#allocation2 + $0x80] sm:$0xff]
  %v5084 = vld [vmem:[#allocation2 + $0xa0] sm:$0x7f]
  %5085 = vset.pattern.permute.xlu0 1
  %5086 = vperm.xlu0 %5085, %v5034
  %v5087 = vpop.permute.xlu0 %5086
  %5089 = vset.pattern.permute.xlu0 1
  %5090 = vperm.xlu0 %5089, %v5035
  %v5091 = vpop.permute.xlu0 %5090
  %5093 = vset.pattern.permute.xlu0 1
  %5094 = vperm.xlu0 %5093, %v5036
  %v5095 = vpop.permute.xlu0 %5094
  %5097 = vset.pattern.permute.xlu0 1
  %5098 = vperm.xlu0 %5097, %v5037
  %v5099 = vpop.permute.xlu0 %5098
  %v5106 = vrot.slane %v5080, 7
  %v5107 = vrot.slane %v5081, 7
  %v5108 = vsel %vm817, %v5106, %v5107
  %v5109 = vrot.slane %v5082, 7
  %v5110 = vsel %vm817, %v5107, %v5109
  %v5111 = vrot.slane %v5083, 7
  %v5112 = vsel %vm817, %v5109, %v5111
  %v5113 = vrot.slane %v5084, 7
  %v5114 = vsel %vm817, %v5111, %v5113
  %5115 = vrot.lane.b32.xlu0 %v5108, 112
  %v5116 = vpop.permute.xlu0 %5115
  %5117 = vrot.lane.b32.xlu0 %v5110, 112
  %v5118 = vpop.permute.xlu0 %5117
  %5119 = vrot.lane.b32.xlu0 %v5112, 112
  %v5120 = vpop.permute.xlu0 %5119
  %5121 = vrot.lane.b32.xlu0 %v5114, 112
  %v5122 = vpop.permute.xlu0 %5121
  %v5127 = vmul.f32 %v5087, %v5116
  %v5128 = vmul.f32 %v5091, %v5118
  %v5129 = vmul.f32 %v5095, %v5120
  %v5130 = vmul.f32 %v5099, %v5122
  %v5131 = vadd.f32 %v5076, %v5127
  %v5132 = vadd.f32 %v5077, %v5128
  %v5133 = vadd.f32 %v5078, %v5129
  %v5134 = vadd.f32 %v5079, %v5130
  %v5135 = vld [vmem:[#allocation2 + $0x40] sm:$0x80]
  %v5136 = vld [vmem:[#allocation2 + $0x60] sm:$0xff]
  %v5137 = vld [vmem:[#allocation2 + $0x80] sm:$0xff]
  %v5138 = vld [vmem:[#allocation2 + $0xa0] sm:$0xff]
  %v5139 = vld [vmem:[#allocation2 + $0xc0] sm:$0x7f]
  %5140 = vset.pattern.permute.xlu0 2
  %5141 = vperm.xlu0 %5140, %v5034
  %v5142 = vpop.permute.xlu0 %5141
  %5144 = vset.pattern.permute.xlu0 2
  %5145 = vperm.xlu0 %5144, %v5035
  %v5146 = vpop.permute.xlu0 %5145
  %5148 = vset.pattern.permute.xlu0 2
  %5149 = vperm.xlu0 %5148, %v5036
  %v5150 = vpop.permute.xlu0 %5149
  %5152 = vset.pattern.permute.xlu0 2
  %5153 = vperm.xlu0 %5152, %v5037
  %v5154 = vpop.permute.xlu0 %5153
  %v5161 = vrot.slane %v5135, 7
  %v5162 = vrot.slane %v5136, 7
  %v5163 = vsel %vm817, %v5161, %v5162
  %v5164 = vrot.slane %v5137, 7
  %v5165 = vsel %vm817, %v5162, %v5164
  %v5166 = vrot.slane %v5138, 7
  %v5167 = vsel %vm817, %v5164, %v5166
  %v5168 = vrot.slane %v5139, 7
  %v5169 = vsel %vm817, %v5166, %v5168
  %5170 = vrot.lane.b32.xlu0 %v5163, 96
  %v5171 = vpop.permute.xlu0 %5170
  %5172 = vrot.lane.b32.xlu0 %v5165, 96
  %v5173 = vpop.permute.xlu0 %5172
  %5174 = vrot.lane.b32.xlu0 %v5167, 96
  %v5175 = vpop.permute.xlu0 %5174
  %5176 = vrot.lane.b32.xlu0 %v5169, 96
  %v5177 = vpop.permute.xlu0 %5176
  %v5182 = vmul.f32 %v5142, %v5171
  %v5183 = vmul.f32 %v5146, %v5173
  %v5184 = vmul.f32 %v5150, %v5175
  %v5185 = vmul.f32 %v5154, %v5177
  %v5186 = vadd.f32 %v5131, %v5182
  %v5187 = vadd.f32 %v5132, %v5183
  %v5188 = vadd.f32 %v5133, %v5184
  %v5189 = vadd.f32 %v5134, %v5185
  %v5190 = vld [vmem:[#allocation2 + $0x80] sm:$0xff]
  %5191 = vset.pattern.permute.xlu0 3
  %5192 = vperm.xlu0 %5191, %v5034
  %v5193 = vpop.permute.xlu0 %5192
  %5195 = vset.pattern.permute.xlu0 3
  %5196 = vperm.xlu0 %5195, %v5035
  %v5197 = vpop.permute.xlu0 %5196
  %5199 = vset.pattern.permute.xlu0 3
  %5200 = vperm.xlu0 %5199, %v5036
  %v5201 = vpop.permute.xlu0 %5200
  %5203 = vset.pattern.permute.xlu0 3
  %5204 = vperm.xlu0 %5203, %v5037
  %v5205 = vpop.permute.xlu0 %5204
  %v5207 = vmul.f32 %v5193, %v5030
  %v5208 = vmul.f32 %v5197, %v5031
  %v5209 = vmul.f32 %v5201, %v5032
  %v5210 = vmul.f32 %v5205, %v5190
  %5215 = vrot.lane.b32.xlu0 %v5207, 80
  %v5216 = vpop.permute.xlu0 %5215
  %5217 = vrot.lane.b32.xlu0 %v5208, 80
  %v5218 = vpop.permute.xlu0 %5217
  %5219 = vrot.lane.b32.xlu0 %v5209, 80
  %v5220 = vpop.permute.xlu0 %5219
  %5221 = vrot.lane.b32.xlu0 %v5210, 80
  %v5222 = vpop.permute.xlu0 %5221
  %v5227 = vadd.f32 %v5186, %v5216
  %v5228 = vadd.f32 %v5187, %v5218
  %v5229 = vadd.f32 %v5188, %v5220
  %v5230 = vadd.f32 %v5189, %v5222
  %v5231 = vld [vmem:[#allocation2 + $0xa0] sm:$0xff]
  %5232 = vset.pattern.permute.xlu0 4
  %5233 = vperm.xlu0 %5232, %v5034
  %v5234 = vpop.permute.xlu0 %5233
  %5236 = vset.pattern.permute.xlu0 4
  %5237 = vperm.xlu0 %5236, %v5035
  %v5238 = vpop.permute.xlu0 %5237
  %5240 = vset.pattern.permute.xlu0 4
  %5241 = vperm.xlu0 %5240, %v5036
  %v5242 = vpop.permute.xlu0 %5241
  %5244 = vset.pattern.permute.xlu0 4
  %5245 = vperm.xlu0 %5244, %v5037
  %v5246 = vpop.permute.xlu0 %5245
  %v5248 = vmul.f32 %v5234, %v5081
  %v5249 = vmul.f32 %v5238, %v5082
  %v5250 = vmul.f32 %v5242, %v5083
  %v5251 = vmul.f32 %v5246, %v5231
  %5256 = vrot.lane.b32.xlu0 %v5248, 64
  %v5257 = vpop.permute.xlu0 %5256
  %5258 = vrot.lane.b32.xlu0 %v5249, 64
  %v5259 = vpop.permute.xlu0 %5258
  %5260 = vrot.lane.b32.xlu0 %v5250, 64
  %v5261 = vpop.permute.xlu0 %5260
  %5262 = vrot.lane.b32.xlu0 %v5251, 64
  %v5263 = vpop.permute.xlu0 %5262
  %v5268 = vadd.f32 %v5227, %v5257
  %v5269 = vadd.f32 %v5228, %v5259
  %v5270 = vadd.f32 %v5229, %v5261
  %v5271 = vadd.f32 %v5230, %v5263
  %v5272 = vld [vmem:[#allocation2 + $0xc0] sm:$0xff]
  %5273 = vset.pattern.permute.xlu0 5
  %5274 = vperm.xlu0 %5273, %v5034
  %v5275 = vpop.permute.xlu0 %5274
  %5277 = vset.pattern.permute.xlu0 5
  %5278 = vperm.xlu0 %5277, %v5035
  %v5279 = vpop.permute.xlu0 %5278
  %5281 = vset.pattern.permute.xlu0 5
  %5282 = vperm.xlu0 %5281, %v5036
  %v5283 = vpop.permute.xlu0 %5282
  %5285 = vset.pattern.permute.xlu0 5
  %5286 = vperm.xlu0 %5285, %v5037
  %v5287 = vpop.permute.xlu0 %5286
  %v5289 = vmul.f32 %v5275, %v5136
  %v5290 = vmul.f32 %v5279, %v5137
  %v5291 = vmul.f32 %v5283, %v5138
  %v5292 = vmul.f32 %v5287, %v5272
  %5297 = vrot.lane.b32.xlu0 %v5289, 48
  %v5298 = vpop.permute.xlu0 %5297
  %5299 = vrot.lane.b32.xlu0 %v5290, 48
  %v5300 = vpop.permute.xlu0 %5299
  %5301 = vrot.lane.b32.xlu0 %v5291, 48
  %v5302 = vpop.permute.xlu0 %5301
  %5303 = vrot.lane.b32.xlu0 %v5292, 48
  %v5304 = vpop.permute.xlu0 %5303
  %v5309 = vadd.f32 %v5268, %v5298
  %v5310 = vadd.f32 %v5269, %v5300
  %v5311 = vadd.f32 %v5270, %v5302
  %v5312 = vadd.f32 %v5271, %v5304
  %v5313 = vld [vmem:[#allocation2 + $0x20] sm:$0xfe]
  %v5314 = vld [vmem:[#allocation2 + $0xa0] sm:$0x1]
  %5315 = vset.pattern.permute.xlu0 6
  %5316 = vperm.xlu0 %5315, %v5034
  %v5317 = vpop.permute.xlu0 %5316
  %5319 = vset.pattern.permute.xlu0 6
  %5320 = vperm.xlu0 %5319, %v5035
  %v5321 = vpop.permute.xlu0 %5320
  %5323 = vset.pattern.permute.xlu0 6
  %5324 = vperm.xlu0 %5323, %v5036
  %v5325 = vpop.permute.xlu0 %5324
  %5327 = vset.pattern.permute.xlu0 6
  %5328 = vperm.xlu0 %5327, %v5037
  %v5329 = vpop.permute.xlu0 %5328
  %v5333 = vrot.slane %v5313, 1
  %v5334 = vrot.slane %v5081, 1
  %v5335 = vsel %vm1142, %v5333, %v5334
  %v5336 = vrot.slane %v5082, 1
  %v5337 = vsel %vm1142, %v5334, %v5336
  %v5338 = vrot.slane %v5083, 1
  %v5339 = vsel %vm1142, %v5336, %v5338
  %v5340 = vrot.slane %v5314, 1
  %v5341 = vsel %vm1142, %v5338, %v5340
  %5342 = vrot.lane.b32.xlu0 %v5335, 32
  %v5343 = vpop.permute.xlu0 %5342
  %5344 = vrot.lane.b32.xlu0 %v5337, 32
  %v5345 = vpop.permute.xlu0 %5344
  %5346 = vrot.lane.b32.xlu0 %v5339, 32
  %v5347 = vpop.permute.xlu0 %5346
  %5348 = vrot.lane.b32.xlu0 %v5341, 32
  %v5349 = vpop.permute.xlu0 %5348
  %v5354 = vmul.f32 %v5317, %v5343
  %v5355 = vmul.f32 %v5321, %v5345
  %v5356 = vmul.f32 %v5325, %v5347
  %v5357 = vmul.f32 %v5329, %v5349
  %v5358 = vadd.f32 %v5309, %v5354
  %v5359 = vadd.f32 %v5310, %v5355
  %v5360 = vadd.f32 %v5311, %v5356
  %v5361 = vadd.f32 %v5312, %v5357
  %v5362 = vld [vmem:[#allocation2 + $0x40] sm:$0xfe]
  %v5363 = vld [vmem:[#allocation2 + $0xc0] sm:$0x1]
  %5364 = vset.pattern.permute.xlu0 7
  %5365 = vperm.xlu0 %5364, %v5034
  %v5366 = vpop.permute.xlu0 %5365
  %5368 = vset.pattern.permute.xlu0 7
  %5369 = vperm.xlu0 %5368, %v5035
  %v5370 = vpop.permute.xlu0 %5369
  %5372 = vset.pattern.permute.xlu0 7
  %5373 = vperm.xlu0 %5372, %v5036
  %v5374 = vpop.permute.xlu0 %5373
  %5376 = vset.pattern.permute.xlu0 7
  %5377 = vperm.xlu0 %5376, %v5037
  %v5378 = vpop.permute.xlu0 %5377
  %v5382 = vrot.slane %v5362, 1
  %v5383 = vrot.slane %v5136, 1
  %v5384 = vsel %vm1142, %v5382, %v5383
  %v5385 = vrot.slane %v5137, 1
  %v5386 = vsel %vm1142, %v5383, %v5385
  %v5387 = vrot.slane %v5138, 1
  %v5388 = vsel %vm1142, %v5385, %v5387
  %v5389 = vrot.slane %v5363, 1
  %v5390 = vsel %vm1142, %v5387, %v5389
  %5391 = vrot.lane.b32.xlu0 %v5384, 16
  %v5392 = vpop.permute.xlu0 %5391
  %5393 = vrot.lane.b32.xlu0 %v5386, 16
  %v5394 = vpop.permute.xlu0 %5393
  %5395 = vrot.lane.b32.xlu0 %v5388, 16
  %v5396 = vpop.permute.xlu0 %5395
  %5397 = vrot.lane.b32.xlu0 %v5390, 16
  %v5398 = vpop.permute.xlu0 %5397
  %v5403 = vmul.f32 %v5366, %v5392
  %v5404 = vmul.f32 %v5370, %v5394
  %v5405 = vmul.f32 %v5374, %v5396
  %v5406 = vmul.f32 %v5378, %v5398
  %v5407 = vadd.f32 %v5358, %v5403
  %v5408 = vadd.f32 %v5359, %v5404
  %v5409 = vadd.f32 %v5360, %v5405
  %v5410 = vadd.f32 %v5361, %v5406
  %v5411 = vld [vmem:[#allocation2 + $0x68] sm:$0xfe]
  %v5412 = vld [vmem:[#allocation2 + $0x88] sm:$0xff]
  %v5413 = vld [vmem:[#allocation2 + $0xa8] sm:$0xff]
  %v5414 = vld [vmem:[#allocation2 + $0xc8] sm:$0xff]
  %v5415 = vld [vmem:[#allocation2 + $0xe8] sm:$0x1]
  %5416 = vset.pattern.permute.xlu0 8
  %5417 = vperm.xlu0 %5416, %v5034
  %v5418 = vpop.permute.xlu0 %5417
  %5420 = vset.pattern.permute.xlu0 8
  %5421 = vperm.xlu0 %5420, %v5035
  %v5422 = vpop.permute.xlu0 %5421
  %5424 = vset.pattern.permute.xlu0 8
  %5425 = vperm.xlu0 %5424, %v5036
  %v5426 = vpop.permute.xlu0 %5425
  %5428 = vset.pattern.permute.xlu0 8
  %5429 = vperm.xlu0 %5428, %v5037
  %v5430 = vpop.permute.xlu0 %5429
  %v5437 = vrot.slane %v5411, 1
  %v5438 = vrot.slane %v5412, 1
  %v5439 = vsel %vm1142, %v5437, %v5438
  %v5440 = vrot.slane %v5413, 1
  %v5441 = vsel %vm1142, %v5438, %v5440
  %v5442 = vrot.slane %v5414, 1
  %v5443 = vsel %vm1142, %v5440, %v5442
  %v5444 = vrot.slane %v5415, 1
  %v5445 = vsel %vm1142, %v5442, %v5444
  %v5450 = vmul.f32 %v5418, %v5439
  %v5451 = vmul.f32 %v5422, %v5441
  %v5452 = vmul.f32 %v5426, %v5443
  %v5453 = vmul.f32 %v5430, %v5445
  %v5454 = vadd.f32 %v5407, %v5450
  %v5455 = vadd.f32 %v5408, %v5451
  %v5456 = vadd.f32 %v5409, %v5452
  %v5457 = vadd.f32 %v5410, %v5453
  %v5458 = vmax.f32 %v5454, 0.0
  %v5459 = vmax.f32 %v5455, 0.0
  %v5460 = vmax.f32 %v5456, 0.0
  %v5461 = vmax.f32 %v5457, 0.0
  %v5462 = vld [vmem:[%s13] sm:$0xf]
  %v5463 = vld [vmem:[%s13 + $0x4] sm:$0xf]
  %v5464 = vpack.c.bf16 %v5459, %v5458
  %v5465 = vpack.c.bf16 %v5461, %v5460
  %v5468 = vunpack.c.l.b16 %v5462
  %v5469 = vunpack.c.l.b16 %v5463
  %v5470 = vpack.c.b16 %v5469, %v5468
  %v5473 = vsel %vm203, %v5464, 0
  %v5476 = vsel %vm203, %v5465, 0
  %5478 = vmatprep.subr.bf16.mxu0 0
  %5479 = vmatpush1.bf16.msra.mxu0 %v5470
  %5480 = vmatprep.subr.bf16.mxu0 0
  %5481 = vmatpush1.bf16.msra.mxu0 0
  %5482 = vmatprep.subr.bf16.mxu0 0
  %5483 = vmatpush1.bf16.msra.mxu0 0
  %5484 = vmatprep.subr.bf16.mxu0 0
  %5485 = vmatpush1.bf16.msra.mxu0 0
  %5486 = vmatprep.subr.bf16.mxu0 0
  %5487 = vmatpush1.bf16.msra.mxu0 0
  %5488 = vmatprep.subr.bf16.mxu0 0
  %5489 = vmatpush1.bf16.msra.mxu0 0
  %5490 = vmatprep.subr.bf16.mxu0 0
  %5491 = vmatpush1.bf16.msra.mxu0 0
  %5492 = vmatprep.subr.bf16.mxu0 0
  %5493 = vmatpush1.bf16.msra.mxu0 0
  %5494 = vmatprep.subr.bf16.mxu0 0
  %5495 = vmatpush1.bf16.msra.mxu0 0
  %5496 = vmatprep.subr.bf16.mxu0 0
  %5497 = vmatpush1.bf16.msra.mxu0 0
  %5498 = vmatprep.subr.bf16.mxu0 0
  %5499 = vmatpush1.bf16.msra.mxu0 0
  %5500 = vmatprep.subr.bf16.mxu0 0
  %5501 = vmatpush1.bf16.msra.mxu0 0
  %5502 = vmatprep.subr.bf16.mxu0 0
  %5503 = vmatpush1.bf16.msra.mxu0 0
  %5504 = vmatprep.subr.bf16.mxu0 0
  %5505 = vmatpush1.bf16.msra.mxu0 0
  %5506 = vmatprep.subr.bf16.mxu0 0
  %5507 = vmatpush1.bf16.msra.mxu0 0
  %5508 = vmatprep.subr.bf16.mxu0 0
  %5509 = vmatpush1.bf16.msra.mxu0 0
  %5510 = vmatprep.mubr.bf16.mxu0 0
  %5511 = vmatmul.mubr.bf16.gmra.mrb[0].mxu0 %v5473
  %v5512 = vpop.f32.mrb[0].mxu0
  %v5513 = vadd.f32 0.0, %v5512
  %v5514 = vpop.f32.mrb[0].mxu0
  %v5515 = vpop.f32.mrb[0].mxu0
  %v5516 = vadd.f32 0.0, %v5515
  %v5517 = vpop.f32.mrb[0].mxu0
  %5518 = vmatprep.mubr.bf16.mxu0 0
  %5519 = vmatmul.mubr.bf16.gmra.mrb[0].mxu0 %v5476
  %v5520 = vpop.f32.mrb[0].mxu0
  %v5521 = vadd.f32 0.0, %v5520
  %v5522 = vpop.f32.mrb[0].mxu0
  %v5523 = vpop.f32.mrb[0].mxu0
  %v5524 = vadd.f32 0.0, %v5523
  %v5525 = vpop.f32.mrb[0].mxu0
  %5526 = vdwg.mxu0
  %v5527 = vadd.f32 %v4928, %v5513
  %v5528 = vadd.f32 %v4929, %v5516
  %v5529 = vadd.f32 %v4930, %v5521
  %v5530 = vadd.f32 %v4931, %v5524
  %v5531 = vmax.f32 %v5527, 0.0
  %v5532 = vmax.f32 %v5528, 0.0
  %v5533 = vmax.f32 %v5529, 0.0
  %v5534 = vmax.f32 %v5530, 0.0
  %5535 = vst.msk [vmem:[%s14] sm:$0xff] %vm3776, %v5531
  %5537 = vrot.lane.b32.xlu0 %v5532, 32
  %v5538 = vpop.permute.xlu0 %5537
  %vm5540 = vcmask 523520
  %5541 = vst.msk [vmem:[%s14] sm:$0xff] %vm5540, %v5538
  %5543 = vrot.lane.b32.xlu0 %v5533, 64
  %v5544 = vpop.permute.xlu0 %5543
  %vm5546 = vcmask 785920
  %5547 = vst.msk [vmem:[%s14] sm:$0xff] %vm5546, %v5544
  %5549 = vrot.lane.b32.xlu0 %v5534, 96
  %v5550 = vpop.permute.xlu0 %5549
  %vm5552 = vcmask 1048320
  %5553 = vst.msk [vmem:[%s14] sm:$0xff] %vm5552, %v5550
  // Predicated region
  $region58: #{encoder_forward.1} parent=0 // pred_check
    _
  $region59: #{encoder_forward.1} parent=0 // pred_check_branch
    %5555 = sbr.rel (0) target = $region61
  $region60: #{encoder_forward.1} parent=0 // pred_region
    _
  $region61: #{encoder_forward.1} parent=0 // pred_fallthru
    _
  // Predicated region
  $region62: #{encoder_forward.1} parent=0 // pred_check
    _
  $region63: #{encoder_forward.1} parent=0 // pred_check_branch
    %5557 = sbr.rel (0) target = $region65
  $region64: #{encoder_forward.1} parent=0 // pred_region
    _
  $region65: #{encoder_forward.1} parent=0 // pred_fallthru
    _

</llo_original>
